<compile_context>
chip_gen: v7x
topology: tpu7x:2x2x1
jax: 0.10.0
libtpu: 0.0.40
codegen_flags: <defaults>
</compile_context>

<pallas_src>
import zlib
import numpy as np
import jax
import jax.numpy as jnp
from jax.experimental import pallas as pl
from jax.experimental.pallas import tpu as pltpu


def _vmem_limit_bytes():
    # Per-generation VMEM budget: ~3/4 of physical, capped at 96 MiB
    # (v5e/v6e 128 MiB -> 96 MiB, v7x 64 MiB -> 48 MiB).  Fallback: 48 MiB.
    try:
        cap = getattr(pltpu.get_tpu_info(), "vmem_capacity_bytes", None)
        if cap:
            return int(min(cap * 3 // 4, 96 * 1024 * 1024))
    except Exception:
        pass
    return 48 * 1024 * 1024


_VMEM_LIMIT = _vmem_limit_bytes()


# ---------------------------------------------------------------------------
# deterministic parameter init helpers
# ---------------------------------------------------------------------------
def _key(name):
    return jax.random.PRNGKey(zlib.crc32(name.encode("utf-8")) & 0x7FFFFFFF)


def _ru(v, m):
    return (v + m - 1) // m * m


def _pick_tile(n, cap=8):
    t = min(cap, n)
    while n % t:
        t -= 1
    return t


def conv_params(name, cin, cout, k, conv_bias=False, act=None):
    """Conv(+folded BatchNorm)(+per-channel PReLU alpha); weights pre-packed."""
    kw_, kb, kg, kbe, km, kv = jax.random.split(_key(name), 6)
    fan_in = cin * k * k
    w = jax.random.normal(kw_, (k, k, cin, cout), jnp.float32) * (0.5 / np.sqrt(fan_in))
    b = (jax.random.normal(kb, (cout,), jnp.float32) * 0.01
         if conv_bias else jnp.zeros((cout,), jnp.float32))
    gamma = 1.0 + 0.1 * jax.random.normal(kg, (cout,), jnp.float32)
    beta = 0.1 * jax.random.normal(kbe, (cout,), jnp.float32)
    mean = 0.1 * jax.random.normal(km, (cout,), jnp.float32)
    var = 1.0 + 0.1 * jnp.abs(jax.random.normal(kv, (cout,), jnp.float32))
    scale = gamma / jnp.sqrt(var + 1e-5)            # BN folded (eval, running stats)
    bias = beta + scale * (b - mean)
    wf = w * scale                                  # BN scale folded into weights
    # Two packings, built once: per-tap (KH*KW, Cin, Cout) for the direct conv
    # kernel, flat (K, Cout) for the im2col fallback (stride_w > 1 layers only).
    wtaps = wf.reshape(k * k, cin, cout).astype(jnp.bfloat16)
    wm = wf.reshape(k * k * cin, cout).astype(jnp.bfloat16)
    # nn.PReLU(num_parameters=C): per-channel alpha (default init 0.25).
    alpha = (jnp.full((1, cout), 0.25, jnp.float32) if act == "prelu" else None)
    return {"wtaps": wtaps, "wm": wm,
            "bias": bias.reshape(1, cout).astype(jnp.float32),
            "alpha": alpha, "kh": k, "kw": k, "cin": cin, "cout": cout}


# ---------------------------------------------------------------------------
# Direct Pallas conv kernel (stride_w == 1): in-kernel KHxKW tap accumulation,
# no HBM im2col.  Whole padded image + weights stay resident in VMEM; each
# grid step computes tile_oh full output rows with unrolled per-row MXU dots.
# ---------------------------------------------------------------------------
def _make_conv_kernel(KH, KW, sh, tile_oh, OW, act, has_res):
    has_alpha = act == "prelu"

    def kernel(*refs):
        refs = list(refs)
        x_ref = refs.pop(0)          # (1, Hp, Wp, Cin)  bf16, whole padded image
        w_ref = refs.pop(0)          # (KH*KW, Cin, Cout) bf16
        b_ref = refs.pop(0)          # (1, Cout) f32
        al_ref = refs.pop(0) if has_alpha else None
        r_ref = refs.pop(0) if has_res else None
        o_ref = refs.pop(0)          # (1, tile_oh, OW, Cout)

        cout = w_ref.shape[2]
        oh0 = pl.program_id(1) * tile_oh
        bias = b_ref[...]
        alpha = al_ref[...] if has_alpha else None

        for j in range(tile_oh):     # short fixed trip count -> unrolled
            acc = jnp.zeros((OW, cout), jnp.float32)
            for kh in range(KH):
                row = x_ref[0, (oh0 + j) * sh + kh]            # (Wp, Cin) bf16
                for kw in range(KW):
                    acc = acc + jnp.dot(row[kw:kw + OW, :], w_ref[kh * KW + kw],
                                        preferred_element_type=jnp.float32)
            y = acc + bias
            if has_res:
                y = y + r_ref[0, j].astype(jnp.float32)        # add before act (ResNet)
            if act == "relu":
                y = jnp.maximum(y, 0.0)
            elif act == "prelu":
                y = jnp.where(y >= 0.0, y, alpha * y)
            o_ref[0, j] = y.astype(o_ref.dtype)

    return kernel


def _direct_conv(x_p, prm, sh, OH, OW, act, residual, out_dtype):
    N, Hp, Wp, Cin = x_p.shape
    KH, KW, Cout = prm["kh"], prm["kw"], prm["cout"]
    tile_oh = _pick_tile(OH, 8)
    has_res = residual is not None
    kernel = _make_conv_kernel(KH, KW, sh, tile_oh, OW, act, has_res)

    inputs = [x_p, prm["wtaps"], prm["bias"]]
    in_specs = [
        pl.BlockSpec((1, Hp, Wp, Cin), lambda n, t: (n, 0, 0, 0)),   # stays resident over t
        pl.BlockSpec((KH * KW, Cin, Cout), lambda n, t: (0, 0, 0)),
        pl.BlockSpec((1, Cout), lambda n, t: (0, 0)),
    ]
    if act == "prelu":
        inputs.append(prm["alpha"])
        in_specs.append(pl.BlockSpec((1, Cout), lambda n, t: (0, 0)))
    if has_res:
        inputs.append(residual.astype(jnp.bfloat16))
        in_specs.append(pl.BlockSpec((1, tile_oh, OW, Cout), lambda n, t: (n, t, 0, 0)))

    return pl.pallas_call(
        kernel,
        out_shape=jax.ShapeDtypeStruct((N, OH, OW, Cout), out_dtype),
        grid=(N, OH // tile_oh),
        in_specs=in_specs,
        out_specs=pl.BlockSpec((1, tile_oh, OW, Cout), lambda n, t: (n, t, 0, 0)),
        compiler_params=pltpu.CompilerParams(
            dimension_semantics=("parallel", "parallel"),
            vmem_limit_bytes=_VMEM_LIMIT),
    )(*inputs)


# ---------------------------------------------------------------------------
# Fused matmul fallback: out = act(A @ W + bias).  bf16 MXU, f32 epilogue.
# Used only for stride_w > 1 convs (conv1 / strided block conv1 / 1x1 down-
# sample, where im2col has little or no overlap blowup) and the LSTM input
# projections.  No dummy alpha / residual operands (review item).
# ---------------------------------------------------------------------------
def _mm_kernel_none(a_ref, w_ref, b_ref, o_ref):
    y = jnp.dot(a_ref[...], w_ref[...], preferred_element_type=jnp.float32)
    o_ref[...] = (y + b_ref[...]).astype(o_ref.dtype)


def _mm_kernel_relu(a_ref, w_ref, b_ref, o_ref):
    y = jnp.dot(a_ref[...], w_ref[...], preferred_element_type=jnp.float32)
    o_ref[...] = jnp.maximum(y + b_ref[...], 0.0).astype(o_ref.dtype)


def fused_matmul(a, w, bias=None, act="none", out_dtype=jnp.bfloat16, tm_max=512):
    M, K = a.shape
    K2, N = w.shape
    assert K == K2 and act in ("none", "relu")
    a = a.astype(jnp.bfloat16)
    w = w.astype(jnp.bfloat16)

    tm = min(tm_max, _ru(M, 16))
    if _ru(M, tm) // tm < 2 and tm >= 32:       # keep >=2 grid steps (v7x: 2 TCs)
        tm = _ru(tm // 2, 16)
    Mp = _ru(M, tm)
    if Mp != M:
        a = jnp.pad(a, ((0, Mp - M), (0, 0)))
    b2 = (jnp.zeros((1, N), jnp.float32) if bias is None
          else bias.reshape(1, N).astype(jnp.float32))

    out = pl.pallas_call(
        _mm_kernel_relu if act == "relu" else _mm_kernel_none,
        out_shape=jax.ShapeDtypeStruct((Mp, N), out_dtype),
        grid=(Mp // tm,),
        in_specs=[pl.BlockSpec((tm, K), lambda i: (i, 0)),
                  pl.BlockSpec((K, N), lambda i: (0, 0)),
                  pl.BlockSpec((1, N), lambda i: (0, 0))],
        out_specs=pl.BlockSpec((tm, N), lambda i: (i, 0)),
        compiler_params=pltpu.CompilerParams(
            dimension_semantics=("parallel",),
            vmem_limit_bytes=_VMEM_LIMIT),
    )(a, w, b2)
    return out[:M] if Mp != M else out


# ---------------------------------------------------------------------------
# conv2d (+BN+act[+residual]) dispatcher
# ---------------------------------------------------------------------------
def conv2d_bn_act(x, prm, stride, pad_h, pad_w, lr_wrap, act, residual=None,
                  out_dtype=jnp.bfloat16):
    """x: NHWC (bf16).  lr_wrap: circular width padding, zero height padding."""
    KH, KW, Cin, Cout = prm["kh"], prm["kw"], prm["cin"], prm["cout"]
    sh, sw = stride
    x = x.astype(jnp.bfloat16)
    # TODO(synk): fold the circular width pad into the kernel index_map.
    if pad_w > 0:
        if lr_wrap:
            x = jnp.concatenate([x[:, :, -pad_w:, :], x, x[:, :, :pad_w, :]], axis=2)
        else:
            x = jnp.pad(x, ((0, 0), (0, 0), (pad_w, pad_w), (0, 0)))
    if pad_h > 0:
        x = jnp.pad(x, ((0, 0), (pad_h, pad_h), (0, 0), (0, 0)))
    N, Hp, Wp, _ = x.shape
    OH = (Hp - KH) // sh + 1
    OW = (Wp - KW) // sw + 1

    if sw == 1:
        # Direct Pallas conv: no im2col materialization in HBM.
        return _direct_conv(x, prm, sh, OH, OW, act, residual, out_dtype)

    # stride_w > 1 (conv1 / strided block conv1 / 1x1 downsample): im2col glue.
    assert residual is None and act != "prelu"
    patches = [x[:, kh:kh + sh * (OH - 1) + 1:sh, kw:kw + sw * (OW - 1) + 1:sw, :]
               for kh in range(KH) for kw in range(KW)]
    a = jnp.concatenate(patches, axis=-1).reshape(N * OH * OW, KH * KW * Cin)
    out = fused_matmul(a, prm["wm"], bias=prm["bias"], act=act, out_dtype=out_dtype)
    return out.reshape(N, OH, OW, Cout)


def maxpool_3x3_s2(x):
    # Small pooling reduction kept in plain JAX glue (hot path is conv/matmul).
    return jax.lax.reduce_window(
        x, jnp.array(-jnp.inf, x.dtype), jax.lax.max,
        window_dimensions=(1, 3, 3, 1), window_strides=(1, 2, 2, 1),
        padding=((0, 0), (1, 1), (1, 1), (0, 0)))


# ---------------------------------------------------------------------------
# ResNet-18 backbone (synthetic weights, lr_pad wrapping applied as in SliceNet)
# ---------------------------------------------------------------------------
def make_resnet18_params():
    p = {"conv1": conv_params("conv1", 3, 64, 7)}
    in_ch = 64
    for li, cout in enumerate((64, 128, 256, 512), start=1):
        for bi in range(2):
            cin = in_ch if bi == 0 else cout
            stride = 2 if (li > 1 and bi == 0) else 1
            base = f"layer{li}.{bi}"
            p[base + ".conv1"] = conv_params(base + ".conv1", cin, cout, 3)
            p[base + ".conv2"] = conv_params(base + ".conv2", cout, cout, 3)
            if stride != 1 or cin != cout:
                p[base + ".down"] = conv_params(base + ".down", cin, cout, 1)
        in_ch = cout
    return p


def resnet18_forward(x, p):
    x = conv2d_bn_act(x, p["conv1"], (2, 2), 3, 3, lr_wrap=True, act="relu")
    x = maxpool_3x3_s2(x)
    feats = []
    for li, n_blocks in enumerate((2, 2, 2, 2), start=1):
        for bi in range(n_blocks):
            base = f"layer{li}.{bi}"
            stride = 2 if (li > 1 and bi == 0) else 1
            identity = x
            out = conv2d_bn_act(x, p[base + ".conv1"], (stride, stride), 1, 1,
                                lr_wrap=True, act="relu")
            if base + ".down" in p:
                identity = conv2d_bn_act(x, p[base + ".down"], (stride, stride),
                                         0, 0, lr_wrap=False, act="none")
            x = conv2d_bn_act(out, p[base + ".conv2"], (1, 1), 1, 1,
                              lr_wrap=True, act="relu", residual=identity)
        feats.append(x)
    return feats


# ---------------------------------------------------------------------------
# Slicing module (AConv stack + wrap + bilinear width resize as VPU lerps)
# ---------------------------------------------------------------------------
def make_aconv_params(name, cin, cout):
    return conv_params(name, cin, cout, 3, conv_bias=True, act="prelu")


def aconv_forward(x, prm, stride, out_dtype=jnp.bfloat16):
    return conv2d_bn_act(x, prm, stride, 1, 1, lr_wrap=True, act="prelu",
                         out_dtype=out_dtype)


def make_slicing_params(name, in_c, out_c):
    chans = [(in_c, in_c // 2), (in_c // 2, in_c // 4), (in_c // 4, out_c)]
    return [make_aconv_params(f"{name}.{i}", ci, co) for i, (ci, co) in enumerate(chans)]


def _bilinear_width_gather(in_w, out_w):
    # F.interpolate(mode='bilinear', align_corners=False) along width,
    # expressed as 2 gathers + lerp.
    src = (np.arange(out_w, dtype=np.float64) + 0.5) * (in_w / out_w) - 0.5
    src = np.maximum(src, 0.0)
    x0 = np.minimum(np.floor(src).astype(np.int32), in_w - 1)
    x1 = np.minimum(x0 + 1, in_w - 1)
    lam = (src - x0).astype(np.float32)
    return x0, x1, lam


def slicing_forward(x, prms, out_w):
    for prm in prms:
        x = aconv_forward(x, prm, (2, 1))              # stride (2,1): halve height
    N, H, W, C = x.shape
    assert out_w % W == 0
    factor = out_w // W
    xw = jnp.concatenate([x[:, :, -1:, :], x, x[:, :, :1, :]], axis=2)  # wrap +2
    x0, x1, lam = _bilinear_width_gather(W + 2, out_w + 2 * factor)
    # TODO(synk): fold the bilinear width lerp into the consumer's A-load.
    lo = jnp.take(xw, x0, axis=2).astype(jnp.float32)
    hi = jnp.take(xw, x1, axis=2).astype(jnp.float32)
    lam_j = jnp.asarray(lam)[None, None, :, None]
    y = lo * (1.0 - lam_j) + hi * lam_j
    y = y[:, :, factor:-factor, :]
    return y.astype(jnp.bfloat16)                      # NHWC (N, H, out_w, C)


# ---------------------------------------------------------------------------
# bidirectional 2-layer LSTM: one direction per grid step ("parallel" so on
# v7x fwd/bwd run on separate TensorCores), unrolled time loop, h/c in VMEM.
# ---------------------------------------------------------------------------
def make_lstm_params(name, input_size, hidden, num_layers=2):
    params = []
    for layer in range(num_layers):
        layer_in = input_size if layer == 0 else hidden * 2
        dirs = []
        for d in range(2):
            k1, k2, k3, k4 = jax.random.split(_key(f"{name}.l{layer}.d{d}"), 4)
            s = 1.0 / np.sqrt(hidden)
            dirs.append({
                "w_ih": jax.random.uniform(k1, (layer_in, 4 * hidden), jnp.float32, -s, s),
                "w_hh": jax.random.uniform(k2, (hidden, 4 * hidden), jnp.float32,
                                           -s, s).astype(jnp.bfloat16),
                "b": (jax.random.uniform(k3, (4 * hidden,), jnp.float32, -s, s)
                      + jax.random.uniform(k4, (4 * hidden,), jnp.float32, -s, s)),
            })
        params.append(dirs)
    return params


def _lstm_dir_kernel(gx_ref, whh_ref, o_ref, h_sc, c_sc):
    # gx_ref: (1, T, Bp, 4H) f32 = x @ W_ih + b (precomputed on the MXU)
    # whh_ref: (1, H, 4H) bf16, o_ref: (1, T, Bp, H) f32
    T = gx_ref.shape[1]
    H = h_sc.shape[1]
    h_sc[...] = jnp.zeros_like(h_sc)
    c_sc[...] = jnp.zeros_like(c_sc)
    whh = whh_ref[0]

    def step(t, carry):
        g = gx_ref[0, t] + jnp.dot(h_sc[...].astype(jnp.bfloat16), whh,
                                   preferred_element_type=jnp.float32)
        i = jax.nn.sigmoid(g[:, 0:H])
        f = jax.nn.sigmoid(g[:, H:2 * H])
        gg = jnp.tanh(g[:, 2 * H:3 * H])
        o = jax.nn.sigmoid(g[:, 3 * H:4 * H])
        c = f * c_sc[...] + i * gg
        h = o * jnp.tanh(c)
        h_sc[...] = h
        c_sc[...] = c
        o_ref[0, t] = h
        return carry

    # Latency-bound recurrence: unroll so the scheduler overlaps the small
    # matmul, the EUP gates and the stores across timesteps.
    jax.lax.fori_loop(0, T, step, 0, unroll=True if T <= 64 else 8)


def bilstm_layer(x_seq, dirs):
    T, B, F = x_seq.shape
    H = dirs[0]["w_hh"].shape[0]
    Bp = _ru(B, 8)
    # Input-gate projections for both directions (backward uses reversed seq).
    gx_f = fused_matmul(x_seq.reshape(T * B, F), dirs[0]["w_ih"],
                        bias=dirs[0]["b"], out_dtype=jnp.float32)
    gx_b = fused_matmul(x_seq[::-1].reshape(T * B, F), dirs[1]["w_ih"],
                        bias=dirs[1]["b"], out_dtype=jnp.float32)
    gx = jnp.stack([gx_f.reshape(T, B, 4 * H), gx_b.reshape(T, B, 4 * H)], axis=0)
    if Bp != B:
        gx = jnp.pad(gx, ((0, 0), (0, 0), (0, Bp - B), (0, 0)))
    whh = jnp.stack([dirs[0]["w_hh"], dirs[1]["w_hh"]], axis=0)        # (2, H, 4H)

    out = pl.pallas_call(
        _lstm_dir_kernel,
        out_shape=jax.ShapeDtypeStruct((2, T, Bp, H), jnp.float32),
        grid=(2,),
        in_specs=[pl.BlockSpec((1, T, Bp, 4 * H), lambda d: (d, 0, 0, 0)),
                  pl.BlockSpec((1, H, 4 * H), lambda d: (d, 0, 0))],
        out_specs=pl.BlockSpec((1, T, Bp, H), lambda d: (d, 0, 0, 0)),
        scratch_shapes=[pltpu.VMEM((Bp, H), jnp.float32),
                        pltpu.VMEM((Bp, H), jnp.float32)],
        compiler_params=pltpu.CompilerParams(
            dimension_semantics=("parallel",),
            vmem_limit_bytes=_VMEM_LIMIT),
    )(gx, whh)

    fwd = out[0, :, :B, :]
    bwd = out[1, :, :B, :][::-1]
    return jnp.concatenate([fwd, bwd], axis=-1)


def bilstm_forward(x_seq, lstm_params):
    h = x_seq
    for layer_dirs in lstm_params:
        h = bilstm_layer(h, layer_dirs)
        # TODO(synk): inter-layer LSTM dropout (p=0.5) is training-only; eval identity.
    return h


# ---------------------------------------------------------------------------
# SliceNet
# ---------------------------------------------------------------------------
X_MEAN = jnp.asarray(np.array([0.485, 0.456, 0.406], np.float32))
X_STD = jnp.asarray(np.array([0.229, 0.224, 0.225], np.float32))


def make_slicenet_params():
    ch_scale, lfeats = 8, 256
    c1, c2, c3, c4 = 64, 128, 256, 512                    # resnet18 stage channels
    c_last = (c1 * 8 + c2 * 4 + c3 * 2 + c4) // ch_scale  # 256
    p = {
        "resnet": make_resnet18_params(),
        "slicing": [make_slicing_params(f"slc{i}", c, c // ch_scale)
                    for i, c in enumerate((c1, c2, c3, c4))],
        "lstm": make_lstm_params("bi_rnn", c_last, lfeats // 2),
    }
    dec_ch = [lfeats, 128, 64, 32, 16, 8, 4, 2, 1]         # full_size=False decoder
    p["decoder"] = [make_aconv_params(f"dec{i}", ci, co)
                    for i, (ci, co) in enumerate(zip(dec_ch[:-1], dec_ch[1:]))]
    return p


def slicenet_forward(x_nchw, params):
    # _prepare_x (f32 normalize, then bf16 activations)
    x = jnp.transpose(x_nchw[:, :3], (0, 2, 3, 1)).astype(jnp.float32)   # NHWC
    x = (x - X_MEAN) / X_STD
    x = x.astype(jnp.bfloat16)
    out_w = x.shape[2]

    # backbone features
    feats = resnet18_forward(x, params["resnet"])

    # multi-slicing -> (N, 256, out_w)
    slices = []
    for f, prm in zip(feats, params["slicing"]):
        y = slicing_forward(f, prm, out_w)               # (N, H, out_w, C)
        N, H, W, C = y.shape
        slices.append(jnp.transpose(y, (0, 3, 1, 2)).reshape(N, C * H, W))
    feature = jnp.concatenate(slices, axis=1)

    # LSTM over width
    seq = jnp.transpose(feature, (2, 0, 1))              # (T=out_w, N, 256)
    output = bilstm_forward(seq, params["lstm"])         # (T, N, 256) f32
    # nn.Dropout(0.5): eval-mode identity.

    # (T, N, C) -> NHWC (N, 1, T, C)  ==  PyTorch NCHW (N, C, 1, T)
    x_dec = jnp.transpose(output, (1, 0, 2))[:, None, :, :].astype(jnp.bfloat16)

    # decoder: nearest (2,1) upsample + AConv, 8 times
    # TODO(synk): W-on-lanes layout for the Cout<128 tail layers (lane-dense stores).
    n_dec = len(params["decoder"])
    for i, prm in enumerate(params["decoder"]):
        x_dec = jnp.repeat(x_dec, 2, axis=1)             # TODO(synk): fold into index_map
        out_dtype = jnp.float32 if i == n_dec - 1 else jnp.bfloat16
        x_dec = conv2d_bn_act(x_dec, prm, (1, 1), 1, 1, lr_wrap=True, act="prelu",
                              out_dtype=out_dtype)
    return jnp.transpose(x_dec, (0, 3, 1, 2))            # NCHW (N, 1, 256, out_w)


# ---------------------------------------------------------------------------
# small pure-JAX tolerance check of the direct conv kernel (review concern)
# ---------------------------------------------------------------------------
def _conv_reference(x, prm, stride, pad_h, pad_w, lr_wrap, act, residual=None):
    KH, KW, Cin, Cout = prm["kh"], prm["kw"], prm["cin"], prm["cout"]
    x = x.astype(jnp.bfloat16)
    if pad_w > 0:
        if lr_wrap:
            x = jnp.concatenate([x[:, :, -pad_w:, :], x, x[:, :, :pad_w, :]], axis=2)
        else:
            x = jnp.pad(x, ((0, 0), (0, 0), (pad_w, pad_w), (0, 0)))
    if pad_h > 0:
        x = jnp.pad(x, ((0, 0), (pad_h, pad_h), (0, 0), (0, 0)))
    w = prm["wtaps"].reshape(KH, KW, Cin, Cout).astype(jnp.float32)
    y = jax.lax.conv_general_dilated(
        x.astype(jnp.float32), w, window_strides=stride, padding="VALID",
        dimension_numbers=("NHWC", "HWIO", "NHWC"))
    y = y + prm["bias"].reshape(1, 1, 1, Cout)
    if residual is not None:
        y = y + residual.astype(jnp.float32)
    if act == "relu":
        y = jnp.maximum(y, 0.0)
    elif act == "prelu":
        y = jnp.where(y >= 0.0, y, prm["alpha"].reshape(1, 1, 1, Cout) * y)
    return y


def _self_check():
    k1, k2, k3 = jax.random.split(jax.random.PRNGKey(1), 3)
    # stride (2,1) + PReLU (slicing-style)
    prm_a = conv_params("check.a", 8, 16, 3, conv_bias=True, act="prelu")
    xa = jax.random.normal(k1, (1, 12, 8, 8), jnp.float32)
    got = conv2d_bn_act(xa, prm_a, (2, 1), 1, 1, True, "prelu", out_dtype=jnp.float32)
    ref = _conv_reference(xa, prm_a, (2, 1), 1, 1, True, "prelu")
    np.testing.assert_allclose(np.asarray(got), np.asarray(ref), atol=5e-2, rtol=5e-2)
    # stride (1,1) + residual + ReLU (ResNet-block-style)
    prm_b = conv_params("check.b", 16, 16, 3)
    xb = jax.random.normal(k2, (2, 8, 16, 16), jnp.float32)
    rb = jax.random.normal(k3, (2, 8, 16, 16), jnp.float32).astype(jnp.bfloat16)
    got = conv2d_bn_act(xb, prm_b, (1, 1), 1, 1, True, "relu", residual=rb,
                        out_dtype=jnp.float32)
    ref = _conv_reference(xb, prm_b, (1, 1), 1, 1, True, "relu", residual=rb)
    np.testing.assert_allclose(np.asarray(got), np.asarray(ref), atol=5e-2, rtol=5e-2)


if __name__ == "__main__":
    _self_check()
    # Architecture forces input height 256 (so the flattened slicing feature
    # matches the LSTM input size c_last=256); keep width small (32).
    x = jax.random.uniform(jax.random.PRNGKey(0), (1, 3, 256, 32), jnp.float32)
    params = make_slicenet_params()
    out = slicenet_forward(x, params)
    out = jax.block_until_ready(out)
    assert out.shape == (1, 1, 256, 32), out.shape
    print("KERNEL_OK")
</pallas_src>

<mosaic_0001>
module attributes {stable_mosaic.version = 11 : i64} {
  func.func @kernel(%arg0: i32, %arg1: i32, %arg2: memref<1x14x10x8xbf16, #tpu.memory_space<vmem>>, %arg3: memref<9x8x16xbf16, #tpu.memory_space<vmem>>, %arg4: memref<1x16xf32, #tpu.memory_space<vmem>>, %arg5: memref<1x16xf32, #tpu.memory_space<vmem>>, %arg6: memref<1x6x8x16xf32, #tpu.memory_space<vmem>>) attributes {dimension_semantics = [#tpu.dimension_semantics<parallel>, #tpu.dimension_semantics<parallel>], iteration_bounds = array<i64: 1, 1>, scalar_prefetch = 0 : i64, scratch_operands = 0 : i64, tpu.core_type = #tpu.core_type<tc>, window_params = [{transform_indices = @transform_0, window_bounds = array<i64: 1, 14, 10, 8>}, {pipeline_mode = #tpu.pipeline_mode<synchronous>, transform_indices = @transform_1, window_bounds = array<i64: 9, 8, 16>}, {pipeline_mode = #tpu.pipeline_mode<synchronous>, transform_indices = @transform_2, window_bounds = array<i64: 1, 16>}, {pipeline_mode = #tpu.pipeline_mode<synchronous>, transform_indices = @transform_3, window_bounds = array<i64: 1, 16>}, {transform_indices = @transform_4, window_bounds = array<i64: 1, 6, 8, 16>}]} {
    %c6_i32 = arith.constant 6 : i32
    %0 = arith.muli %arg1, %c6_i32 : i32
    %c0 = arith.constant 0 : index
    %c0_0 = arith.constant 0 : index
    %1 = vector.load %arg4[%c0, %c0_0] : memref<1x16xf32, #tpu.memory_space<vmem>>, vector<1x16xf32>
    %c0_1 = arith.constant 0 : index
    %c0_2 = arith.constant 0 : index
    %2 = vector.load %arg5[%c0_1, %c0_2] : memref<1x16xf32, #tpu.memory_space<vmem>>, vector<1x16xf32>
    %cst = arith.constant 0.000000e+00 : f32
    %3 = vector.broadcast %cst : f32 to vector<8x16xf32>
    %c0_i32 = arith.constant 0 : i32
    %4 = arith.addi %0, %c0_i32 : i32
    %c2_i32 = arith.constant 2 : i32
    %5 = arith.muli %4, %c2_i32 : i32
    %c0_i32_3 = arith.constant 0 : i32
    %6 = arith.addi %5, %c0_i32_3 : i32
    %c0_4 = arith.constant 0 : index
    %7 = arith.index_cast %6 : i32 to index
    %c0_5 = arith.constant 0 : index
    %c0_6 = arith.constant 0 : index
    %8 = vector.load %arg2[%c0_4, %7, %c0_5, %c0_6] : memref<1x14x10x8xbf16, #tpu.memory_space<vmem>>, vector<1x1x10x8xbf16>
    %9 = vector.shape_cast %8 : vector<1x1x10x8xbf16> to vector<10x8xbf16>
    %10 = vector.extract_strided_slice %9 {offsets = [0, 0], sizes = [8, 8], strides = [1, 1]} : vector<10x8xbf16> to vector<8x8xbf16>
    %c0_7 = arith.constant 0 : index
    %c0_8 = arith.constant 0 : index
    %c0_9 = arith.constant 0 : index
    %11 = vector.load %arg3[%c0_7, %c0_8, %c0_9] : memref<9x8x16xbf16, #tpu.memory_space<vmem>>, vector<1x8x16xbf16>
    %12 = vector.shape_cast %11 : vector<1x8x16xbf16> to vector<8x16xbf16>
    %cst_10 = arith.constant dense<0.000000e+00> : vector<8x16xf32>
    %13 = tpu.matmul %10, %12, %cst_10 {dimension_numbers = #tpu.dot_dimension_numbers<[1], [0], [0], [1], [0, 0, 1, 1], [], []>} : vector<8x8xbf16>, vector<8x16xbf16>, vector<8x16xf32> -> vector<8x16xf32>
    %14 = arith.addf %3, %13 : vector<8x16xf32>
    %15 = vector.extract_strided_slice %9 {offsets = [1, 0], sizes = [8, 8], strides = [1, 1]} : vector<10x8xbf16> to vector<8x8xbf16>
    %c1 = arith.constant 1 : index
    %c0_11 = arith.constant 0 : index
    %c0_12 = arith.constant 0 : index
    %16 = vector.load %arg3[%c1, %c0_11, %c0_12] : memref<9x8x16xbf16, #tpu.memory_space<vmem>>, vector<1x8x16xbf16>
    %17 = vector.shape_cast %16 : vector<1x8x16xbf16> to vector<8x16xbf16>
    %cst_13 = arith.constant dense<0.000000e+00> : vector<8x16xf32>
    %18 = tpu.matmul %15, %17, %cst_13 {dimension_numbers = #tpu.dot_dimension_numbers<[1], [0], [0], [1], [0, 0, 1, 1], [], []>} : vector<8x8xbf16>, vector<8x16xbf16>, vector<8x16xf32> -> vector<8x16xf32>
    %19 = arith.addf %14, %18 : vector<8x16xf32>
    %20 = vector.extract_strided_slice %9 {offsets = [2, 0], sizes = [8, 8], strides = [1, 1]} : vector<10x8xbf16> to vector<8x8xbf16>
    %c2 = arith.constant 2 : index
    %c0_14 = arith.constant 0 : index
    %c0_15 = arith.constant 0 : index
    %21 = vector.load %arg3[%c2, %c0_14, %c0_15] : memref<9x8x16xbf16, #tpu.memory_space<vmem>>, vector<1x8x16xbf16>
    %22 = vector.shape_cast %21 : vector<1x8x16xbf16> to vector<8x16xbf16>
    %cst_16 = arith.constant dense<0.000000e+00> : vector<8x16xf32>
    %23 = tpu.matmul %20, %22, %cst_16 {dimension_numbers = #tpu.dot_dimension_numbers<[1], [0], [0], [1], [0, 0, 1, 1], [], []>} : vector<8x8xbf16>, vector<8x16xbf16>, vector<8x16xf32> -> vector<8x16xf32>
    %24 = arith.addf %19, %23 : vector<8x16xf32>
    %c0_i32_17 = arith.constant 0 : i32
    %25 = arith.addi %0, %c0_i32_17 : i32
    %c2_i32_18 = arith.constant 2 : i32
    %26 = arith.muli %25, %c2_i32_18 : i32
    %c1_i32 = arith.constant 1 : i32
    %27 = arith.addi %26, %c1_i32 : i32
    %c0_19 = arith.constant 0 : index
    %28 = arith.index_cast %27 : i32 to index
    %c0_20 = arith.constant 0 : index
    %c0_21 = arith.constant 0 : index
    %29 = vector.load %arg2[%c0_19, %28, %c0_20, %c0_21] : memref<1x14x10x8xbf16, #tpu.memory_space<vmem>>, vector<1x1x10x8xbf16>
    %30 = vector.shape_cast %29 : vector<1x1x10x8xbf16> to vector<10x8xbf16>
    %31 = vector.extract_strided_slice %30 {offsets = [0, 0], sizes = [8, 8], strides = [1, 1]} : vector<10x8xbf16> to vector<8x8xbf16>
    %c3 = arith.constant 3 : index
    %c0_22 = arith.constant 0 : index
    %c0_23 = arith.constant 0 : index
    %32 = vector.load %arg3[%c3, %c0_22, %c0_23] : memref<9x8x16xbf16, #tpu.memory_space<vmem>>, vector<1x8x16xbf16>
    %33 = vector.shape_cast %32 : vector<1x8x16xbf16> to vector<8x16xbf16>
    %cst_24 = arith.constant dense<0.000000e+00> : vector<8x16xf32>
    %34 = tpu.matmul %31, %33, %cst_24 {dimension_numbers = #tpu.dot_dimension_numbers<[1], [0], [0], [1], [0, 0, 1, 1], [], []>} : vector<8x8xbf16>, vector<8x16xbf16>, vector<8x16xf32> -> vector<8x16xf32>
    %35 = arith.addf %24, %34 : vector<8x16xf32>
    %36 = vector.extract_strided_slice %30 {offsets = [1, 0], sizes = [8, 8], strides = [1, 1]} : vector<10x8xbf16> to vector<8x8xbf16>
    %c4 = arith.constant 4 : index
    %c0_25 = arith.constant 0 : index
    %c0_26 = arith.constant 0 : index
    %37 = vector.load %arg3[%c4, %c0_25, %c0_26] : memref<9x8x16xbf16, #tpu.memory_space<vmem>>, vector<1x8x16xbf16>
    %38 = vector.shape_cast %37 : vector<1x8x16xbf16> to vector<8x16xbf16>
    %cst_27 = arith.constant dense<0.000000e+00> : vector<8x16xf32>
    %39 = tpu.matmul %36, %38, %cst_27 {dimension_numbers = #tpu.dot_dimension_numbers<[1], [0], [0], [1], [0, 0, 1, 1], [], []>} : vector<8x8xbf16>, vector<8x16xbf16>, vector<8x16xf32> -> vector<8x16xf32>
    %40 = arith.addf %35, %39 : vector<8x16xf32>
    %41 = vector.extract_strided_slice %30 {offsets = [2, 0], sizes = [8, 8], strides = [1, 1]} : vector<10x8xbf16> to vector<8x8xbf16>
    %c5 = arith.constant 5 : index
    %c0_28 = arith.constant 0 : index
    %c0_29 = arith.constant 0 : index
    %42 = vector.load %arg3[%c5, %c0_28, %c0_29] : memref<9x8x16xbf16, #tpu.memory_space<vmem>>, vector<1x8x16xbf16>
    %43 = vector.shape_cast %42 : vector<1x8x16xbf16> to vector<8x16xbf16>
    %cst_30 = arith.constant dense<0.000000e+00> : vector<8x16xf32>
    %44 = tpu.matmul %41, %43, %cst_30 {dimension_numbers = #tpu.dot_dimension_numbers<[1], [0], [0], [1], [0, 0, 1, 1], [], []>} : vector<8x8xbf16>, vector<8x16xbf16>, vector<8x16xf32> -> vector<8x16xf32>
    %45 = arith.addf %40, %44 : vector<8x16xf32>
    %c0_i32_31 = arith.constant 0 : i32
    %46 = arith.addi %0, %c0_i32_31 : i32
    %c2_i32_32 = arith.constant 2 : i32
    %47 = arith.muli %46, %c2_i32_32 : i32
    %c2_i32_33 = arith.constant 2 : i32
    %48 = arith.addi %47, %c2_i32_33 : i32
    %c0_34 = arith.constant 0 : index
    %49 = arith.index_cast %48 : i32 to index
    %c0_35 = arith.constant 0 : index
    %c0_36 = arith.constant 0 : index
    %50 = vector.load %arg2[%c0_34, %49, %c0_35, %c0_36] : memref<1x14x10x8xbf16, #tpu.memory_space<vmem>>, vector<1x1x10x8xbf16>
    %51 = vector.shape_cast %50 : vector<1x1x10x8xbf16> to vector<10x8xbf16>
    %52 = vector.extract_strided_slice %51 {offsets = [0, 0], sizes = [8, 8], strides = [1, 1]} : vector<10x8xbf16> to vector<8x8xbf16>
    %c6 = arith.constant 6 : index
    %c0_37 = arith.constant 0 : index
    %c0_38 = arith.constant 0 : index
    %53 = vector.load %arg3[%c6, %c0_37, %c0_38] : memref<9x8x16xbf16, #tpu.memory_space<vmem>>, vector<1x8x16xbf16>
    %54 = vector.shape_cast %53 : vector<1x8x16xbf16> to vector<8x16xbf16>
    %cst_39 = arith.constant dense<0.000000e+00> : vector<8x16xf32>
    %55 = tpu.matmul %52, %54, %cst_39 {dimension_numbers = #tpu.dot_dimension_numbers<[1], [0], [0], [1], [0, 0, 1, 1], [], []>} : vector<8x8xbf16>, vector<8x16xbf16>, vector<8x16xf32> -> vector<8x16xf32>
    %56 = arith.addf %45, %55 : vector<8x16xf32>
    %57 = vector.extract_strided_slice %51 {offsets = [1, 0], sizes = [8, 8], strides = [1, 1]} : vector<10x8xbf16> to vector<8x8xbf16>
    %c7 = arith.constant 7 : index
    %c0_40 = arith.constant 0 : index
    %c0_41 = arith.constant 0 : index
    %58 = vector.load %arg3[%c7, %c0_40, %c0_41] : memref<9x8x16xbf16, #tpu.memory_space<vmem>>, vector<1x8x16xbf16>
    %59 = vector.shape_cast %58 : vector<1x8x16xbf16> to vector<8x16xbf16>
    %cst_42 = arith.constant dense<0.000000e+00> : vector<8x16xf32>
    %60 = tpu.matmul %57, %59, %cst_42 {dimension_numbers = #tpu.dot_dimension_numbers<[1], [0], [0], [1], [0, 0, 1, 1], [], []>} : vector<8x8xbf16>, vector<8x16xbf16>, vector<8x16xf32> -> vector<8x16xf32>
    %61 = arith.addf %56, %60 : vector<8x16xf32>
    %62 = vector.extract_strided_slice %51 {offsets = [2, 0], sizes = [8, 8], strides = [1, 1]} : vector<10x8xbf16> to vector<8x8xbf16>
    %c8 = arith.constant 8 : index
    %c0_43 = arith.constant 0 : index
    %c0_44 = arith.constant 0 : index
    %63 = vector.load %arg3[%c8, %c0_43, %c0_44] : memref<9x8x16xbf16, #tpu.memory_space<vmem>>, vector<1x8x16xbf16>
    %64 = vector.shape_cast %63 : vector<1x8x16xbf16> to vector<8x16xbf16>
    %cst_45 = arith.constant dense<0.000000e+00> : vector<8x16xf32>
    %65 = tpu.matmul %62, %64, %cst_45 {dimension_numbers = #tpu.dot_dimension_numbers<[1], [0], [0], [1], [0, 0, 1, 1], [], []>} : vector<8x8xbf16>, vector<8x16xbf16>, vector<8x16xf32> -> vector<8x16xf32>
    %66 = arith.addf %61, %65 : vector<8x16xf32>
    %67 = vector.broadcast %1 : vector<1x16xf32> to vector<8x16xf32>
    %68 = arith.addf %66, %67 : vector<8x16xf32>
    %cst_46 = arith.constant 0.000000e+00 : f32
    %69 = vector.broadcast %cst_46 : f32 to vector<8x16xf32>
    %70 = arith.cmpf oge, %68, %69 : vector<8x16xf32>
    %71 = vector.broadcast %2 : vector<1x16xf32> to vector<8x16xf32>
    %72 = arith.mulf %71, %68 : vector<8x16xf32>
    %73 = arith.select %70, %68, %72 : vector<8x16xi1>, vector<8x16xf32>
    %c0_47 = arith.constant 0 : index
    %c0_48 = arith.constant 0 : index
    %c0_49 = arith.constant 0 : index
    %c0_50 = arith.constant 0 : index
    %74 = vector.load %arg6[%c0_47, %c0_48, %c0_49, %c0_50] : memref<1x6x8x16xf32, #tpu.memory_space<vmem>>, vector<1x1x8x16xf32>
    %75 = vector.shape_cast %74 : vector<1x1x8x16xf32> to vector<8x16xf32>
    %76 = vector.shape_cast %73 : vector<8x16xf32> to vector<1x1x8x16xf32>
    tpu.vector_store %arg6[%c0_47, %c0_48, %c0_49, %c0_50], %76 {strides = array<i32>} : memref<1x6x8x16xf32, #tpu.memory_space<vmem>>, vector<1x1x8x16xf32>,
    %cst_51 = arith.constant 0.000000e+00 : f32
    %77 = vector.broadcast %cst_51 : f32 to vector<8x16xf32>
    %c1_i32_52 = arith.constant 1 : i32
    %78 = arith.addi %0, %c1_i32_52 : i32
    %c2_i32_53 = arith.constant 2 : i32
    %79 = arith.muli %78, %c2_i32_53 : i32
    %c0_i32_54 = arith.constant 0 : i32
    %80 = arith.addi %79, %c0_i32_54 : i32
    %c0_55 = arith.constant 0 : index
    %81 = arith.index_cast %80 : i32 to index
    %c0_56 = arith.constant 0 : index
    %c0_57 = arith.constant 0 : index
    %82 = vector.load %arg2[%c0_55, %81, %c0_56, %c0_57] : memref<1x14x10x8xbf16, #tpu.memory_space<vmem>>, vector<1x1x10x8xbf16>
    %83 = vector.shape_cast %82 : vector<1x1x10x8xbf16> to vector<10x8xbf16>
    %84 = vector.extract_strided_slice %83 {offsets = [0, 0], sizes = [8, 8], strides = [1, 1]} : vector<10x8xbf16> to vector<8x8xbf16>
    %c0_58 = arith.constant 0 : index
    %c0_59 = arith.constant 0 : index
    %c0_60 = arith.constant 0 : index
    %85 = vector.load %arg3[%c0_58, %c0_59, %c0_60] : memref<9x8x16xbf16, #tpu.memory_space<vmem>>, vector<1x8x16xbf16>
    %86 = vector.shape_cast %85 : vector<1x8x16xbf16> to vector<8x16xbf16>
    %cst_61 = arith.constant dense<0.000000e+00> : vector<8x16xf32>
    %87 = tpu.matmul %84, %86, %cst_61 {dimension_numbers = #tpu.dot_dimension_numbers<[1], [0], [0], [1], [0, 0, 1, 1], [], []>} : vector<8x8xbf16>, vector<8x16xbf16>, vector<8x16xf32> -> vector<8x16xf32>
    %88 = arith.addf %77, %87 : vector<8x16xf32>
    %89 = vector.extract_strided_slice %83 {offsets = [1, 0], sizes = [8, 8], strides = [1, 1]} : vector<10x8xbf16> to vector<8x8xbf16>
    %c1_62 = arith.constant 1 : index
    %c0_63 = arith.constant 0 : index
    %c0_64 = arith.constant 0 : index
    %90 = vector.load %arg3[%c1_62, %c0_63, %c0_64] : memref<9x8x16xbf16, #tpu.memory_space<vmem>>, vector<1x8x16xbf16>
    %91 = vector.shape_cast %90 : vector<1x8x16xbf16> to vector<8x16xbf16>
    %cst_65 = arith.constant dense<0.000000e+00> : vector<8x16xf32>
    %92 = tpu.matmul %89, %91, %cst_65 {dimension_numbers = #tpu.dot_dimension_numbers<[1], [0], [0], [1], [0, 0, 1, 1], [], []>} : vector<8x8xbf16>, vector<8x16xbf16>, vector<8x16xf32> -> vector<8x16xf32>
    %93 = arith.addf %88, %92 : vector<8x16xf32>
    %94 = vector.extract_strided_slice %83 {offsets = [2, 0], sizes = [8, 8], strides = [1, 1]} : vector<10x8xbf16> to vector<8x8xbf16>
    %c2_66 = arith.constant 2 : index
    %c0_67 = arith.constant 0 : index
    %c0_68 = arith.constant 0 : index
    %95 = vector.load %arg3[%c2_66, %c0_67, %c0_68] : memref<9x8x16xbf16, #tpu.memory_space<vmem>>, vector<1x8x16xbf16>
    %96 = vector.shape_cast %95 : vector<1x8x16xbf16> to vector<8x16xbf16>
    %cst_69 = arith.constant dense<0.000000e+00> : vector<8x16xf32>
    %97 = tpu.matmul %94, %96, %cst_69 {dimension_numbers = #tpu.dot_dimension_numbers<[1], [0], [0], [1], [0, 0, 1, 1], [], []>} : vector<8x8xbf16>, vector<8x16xbf16>, vector<8x16xf32> -> vector<8x16xf32>
    %98 = arith.addf %93, %97 : vector<8x16xf32>
    %c1_i32_70 = arith.constant 1 : i32
    %99 = arith.addi %0, %c1_i32_70 : i32
    %c2_i32_71 = arith.constant 2 : i32
    %100 = arith.muli %99, %c2_i32_71 : i32
    %c1_i32_72 = arith.constant 1 : i32
    %101 = arith.addi %100, %c1_i32_72 : i32
    %c0_73 = arith.constant 0 : index
    %102 = arith.index_cast %101 : i32 to index
    %c0_74 = arith.constant 0 : index
    %c0_75 = arith.constant 0 : index
    %103 = vector.load %arg2[%c0_73, %102, %c0_74, %c0_75] : memref<1x14x10x8xbf16, #tpu.memory_space<vmem>>, vector<1x1x10x8xbf16>
    %104 = vector.shape_cast %103 : vector<1x1x10x8xbf16> to vector<10x8xbf16>
    %105 = vector.extract_strided_slice %104 {offsets = [0, 0], sizes = [8, 8], strides = [1, 1]} : vector<10x8xbf16> to vector<8x8xbf16>
    %c3_76 = arith.constant 3 : index
    %c0_77 = arith.constant 0 : index
    %c0_78 = arith.constant 0 : index
    %106 = vector.load %arg3[%c3_76, %c0_77, %c0_78] : memref<9x8x16xbf16, #tpu.memory_space<vmem>>, vector<1x8x16xbf16>
    %107 = vector.shape_cast %106 : vector<1x8x16xbf16> to vector<8x16xbf16>
    %cst_79 = arith.constant dense<0.000000e+00> : vector<8x16xf32>
    %108 = tpu.matmul %105, %107, %cst_79 {dimension_numbers = #tpu.dot_dimension_numbers<[1], [0], [0], [1], [0, 0, 1, 1], [], []>} : vector<8x8xbf16>, vector<8x16xbf16>, vector<8x16xf32> -> vector<8x16xf32>
    %109 = arith.addf %98, %108 : vector<8x16xf32>
    %110 = vector.extract_strided_slice %104 {offsets = [1, 0], sizes = [8, 8], strides = [1, 1]} : vector<10x8xbf16> to vector<8x8xbf16>
    %c4_80 = arith.constant 4 : index
    %c0_81 = arith.constant 0 : index
    %c0_82 = arith.constant 0 : index
    %111 = vector.load %arg3[%c4_80, %c0_81, %c0_82] : memref<9x8x16xbf16, #tpu.memory_space<vmem>>, vector<1x8x16xbf16>
    %112 = vector.shape_cast %111 : vector<1x8x16xbf16> to vector<8x16xbf16>
    %cst_83 = arith.constant dense<0.000000e+00> : vector<8x16xf32>
    %113 = tpu.matmul %110, %112, %cst_83 {dimension_numbers = #tpu.dot_dimension_numbers<[1], [0], [0], [1], [0, 0, 1, 1], [], []>} : vector<8x8xbf16>, vector<8x16xbf16>, vector<8x16xf32> -> vector<8x16xf32>
    %114 = arith.addf %109, %113 : vector<8x16xf32>
    %115 = vector.extract_strided_slice %104 {offsets = [2, 0], sizes = [8, 8], strides = [1, 1]} : vector<10x8xbf16> to vector<8x8xbf16>
    %c5_84 = arith.constant 5 : index
    %c0_85 = arith.constant 0 : index
    %c0_86 = arith.constant 0 : index
    %116 = vector.load %arg3[%c5_84, %c0_85, %c0_86] : memref<9x8x16xbf16, #tpu.memory_space<vmem>>, vector<1x8x16xbf16>
    %117 = vector.shape_cast %116 : vector<1x8x16xbf16> to vector<8x16xbf16>
    %cst_87 = arith.constant dense<0.000000e+00> : vector<8x16xf32>
    %118 = tpu.matmul %115, %117, %cst_87 {dimension_numbers = #tpu.dot_dimension_numbers<[1], [0], [0], [1], [0, 0, 1, 1], [], []>} : vector<8x8xbf16>, vector<8x16xbf16>, vector<8x16xf32> -> vector<8x16xf32>
    %119 = arith.addf %114, %118 : vector<8x16xf32>
    %c1_i32_88 = arith.constant 1 : i32
    %120 = arith.addi %0, %c1_i32_88 : i32
    %c2_i32_89 = arith.constant 2 : i32
    %121 = arith.muli %120, %c2_i32_89 : i32
    %c2_i32_90 = arith.constant 2 : i32
    %122 = arith.addi %121, %c2_i32_90 : i32
    %c0_91 = arith.constant 0 : index
    %123 = arith.index_cast %122 : i32 to index
    %c0_92 = arith.constant 0 : index
    %c0_93 = arith.constant 0 : index
    %124 = vector.load %arg2[%c0_91, %123, %c0_92, %c0_93] : memref<1x14x10x8xbf16, #tpu.memory_space<vmem>>, vector<1x1x10x8xbf16>
    %125 = vector.shape_cast %124 : vector<1x1x10x8xbf16> to vector<10x8xbf16>
    %126 = vector.extract_strided_slice %125 {offsets = [0, 0], sizes = [8, 8], strides = [1, 1]} : vector<10x8xbf16> to vector<8x8xbf16>
    %c6_94 = arith.constant 6 : index
    %c0_95 = arith.constant 0 : index
    %c0_96 = arith.constant 0 : index
    %127 = vector.load %arg3[%c6_94, %c0_95, %c0_96] : memref<9x8x16xbf16, #tpu.memory_space<vmem>>, vector<1x8x16xbf16>
    %128 = vector.shape_cast %127 : vector<1x8x16xbf16> to vector<8x16xbf16>
    %cst_97 = arith.constant dense<0.000000e+00> : vector<8x16xf32>
    %129 = tpu.matmul %126, %128, %cst_97 {dimension_numbers = #tpu.dot_dimension_numbers<[1], [0], [0], [1], [0, 0, 1, 1], [], []>} : vector<8x8xbf16>, vector<8x16xbf16>, vector<8x16xf32> -> vector<8x16xf32>
    %130 = arith.addf %119, %129 : vector<8x16xf32>
    %131 = vector.extract_strided_slice %125 {offsets = [1, 0], sizes = [8, 8], strides = [1, 1]} : vector<10x8xbf16> to vector<8x8xbf16>
    %c7_98 = arith.constant 7 : index
    %c0_99 = arith.constant 0 : index
    %c0_100 = arith.constant 0 : index
    %132 = vector.load %arg3[%c7_98, %c0_99, %c0_100] : memref<9x8x16xbf16, #tpu.memory_space<vmem>>, vector<1x8x16xbf16>
    %133 = vector.shape_cast %132 : vector<1x8x16xbf16> to vector<8x16xbf16>
    %cst_101 = arith.constant dense<0.000000e+00> : vector<8x16xf32>
    %134 = tpu.matmul %131, %133, %cst_101 {dimension_numbers = #tpu.dot_dimension_numbers<[1], [0], [0], [1], [0, 0, 1, 1], [], []>} : vector<8x8xbf16>, vector<8x16xbf16>, vector<8x16xf32> -> vector<8x16xf32>
    %135 = arith.addf %130, %134 : vector<8x16xf32>
    %136 = vector.extract_strided_slice %125 {offsets = [2, 0], sizes = [8, 8], strides = [1, 1]} : vector<10x8xbf16> to vector<8x8xbf16>
    %c8_102 = arith.constant 8 : index
    %c0_103 = arith.constant 0 : index
    %c0_104 = arith.constant 0 : index
    %137 = vector.load %arg3[%c8_102, %c0_103, %c0_104] : memref<9x8x16xbf16, #tpu.memory_space<vmem>>, vector<1x8x16xbf16>
    %138 = vector.shape_cast %137 : vector<1x8x16xbf16> to vector<8x16xbf16>
    %cst_105 = arith.constant dense<0.000000e+00> : vector<8x16xf32>
    %139 = tpu.matmul %136, %138, %cst_105 {dimension_numbers = #tpu.dot_dimension_numbers<[1], [0], [0], [1], [0, 0, 1, 1], [], []>} : vector<8x8xbf16>, vector<8x16xbf16>, vector<8x16xf32> -> vector<8x16xf32>
    %140 = arith.addf %135, %139 : vector<8x16xf32>
    %141 = vector.broadcast %1 : vector<1x16xf32> to vector<8x16xf32>
    %142 = arith.addf %140, %141 : vector<8x16xf32>
    %cst_106 = arith.constant 0.000000e+00 : f32
    %143 = vector.broadcast %cst_106 : f32 to vector<8x16xf32>
    %144 = arith.cmpf oge, %142, %143 : vector<8x16xf32>
    %145 = vector.broadcast %2 : vector<1x16xf32> to vector<8x16xf32>
    %146 = arith.mulf %145, %142 : vector<8x16xf32>
    %147 = arith.select %144, %142, %146 : vector<8x16xi1>, vector<8x16xf32>
    %c0_107 = arith.constant 0 : index
    %c1_108 = arith.constant 1 : index
    %c0_109 = arith.constant 0 : index
    %c0_110 = arith.constant 0 : index
    %148 = vector.load %arg6[%c0_107, %c1_108, %c0_109, %c0_110] : memref<1x6x8x16xf32, #tpu.memory_space<vmem>>, vector<1x1x8x16xf32>
    %149 = vector.shape_cast %148 : vector<1x1x8x16xf32> to vector<8x16xf32>
    %150 = vector.shape_cast %147 : vector<8x16xf32> to vector<1x1x8x16xf32>
    tpu.vector_store %arg6[%c0_107, %c1_108, %c0_109, %c0_110], %150 {strides = array<i32>} : memref<1x6x8x16xf32, #tpu.memory_space<vmem>>, vector<1x1x8x16xf32>,
    %cst_111 = arith.constant 0.000000e+00 : f32
    %151 = vector.broadcast %cst_111 : f32 to vector<8x16xf32>
    %c2_i32_112 = arith.constant 2 : i32
    %152 = arith.addi %0, %c2_i32_112 : i32
    %c2_i32_113 = arith.constant 2 : i32
    %153 = arith.muli %152, %c2_i32_113 : i32
    %c0_i32_114 = arith.constant 0 : i32
    %154 = arith.addi %153, %c0_i32_114 : i32
    %c0_115 = arith.constant 0 : index
    %155 = arith.index_cast %154 : i32 to index
    %c0_116 = arith.constant 0 : index
    %c0_117 = arith.constant 0 : index
    %156 = vector.load %arg2[%c0_115, %155, %c0_116, %c0_117] : memref<1x14x10x8xbf16, #tpu.memory_space<vmem>>, vector<1x1x10x8xbf16>
    %157 = vector.shape_cast %156 : vector<1x1x10x8xbf16> to vector<10x8xbf16>
    %158 = vector.extract_strided_slice %157 {offsets = [0, 0], sizes = [8, 8], strides = [1, 1]} : vector<10x8xbf16> to vector<8x8xbf16>
    %c0_118 = arith.constant 0 : index
    %c0_119 = arith.constant 0 : index
    %c0_120 = arith.constant 0 : index
    %159 = vector.load %arg3[%c0_118, %c0_119, %c0_120] : memref<9x8x16xbf16, #tpu.memory_space<vmem>>, vector<1x8x16xbf16>
    %160 = vector.shape_cast %159 : vector<1x8x16xbf16> to vector<8x16xbf16>
    %cst_121 = arith.constant dense<0.000000e+00> : vector<8x16xf32>
    %161 = tpu.matmul %158, %160, %cst_121 {dimension_numbers = #tpu.dot_dimension_numbers<[1], [0], [0], [1], [0, 0, 1, 1], [], []>} : vector<8x8xbf16>, vector<8x16xbf16>, vector<8x16xf32> -> vector<8x16xf32>
    %162 = arith.addf %151, %161 : vector<8x16xf32>
    %163 = vector.extract_strided_slice %157 {offsets = [1, 0], sizes = [8, 8], strides = [1, 1]} : vector<10x8xbf16> to vector<8x8xbf16>
    %c1_122 = arith.constant 1 : index
    %c0_123 = arith.constant 0 : index
    %c0_124 = arith.constant 0 : index
    %164 = vector.load %arg3[%c1_122, %c0_123, %c0_124] : memref<9x8x16xbf16, #tpu.memory_space<vmem>>, vector<1x8x16xbf16>
    %165 = vector.shape_cast %164 : vector<1x8x16xbf16> to vector<8x16xbf16>
    %cst_125 = arith.constant dense<0.000000e+00> : vector<8x16xf32>
    %166 = tpu.matmul %163, %165, %cst_125 {dimension_numbers = #tpu.dot_dimension_numbers<[1], [0], [0], [1], [0, 0, 1, 1], [], []>} : vector<8x8xbf16>, vector<8x16xbf16>, vector<8x16xf32> -> vector<8x16xf32>
    %167 = arith.addf %162, %166 : vector<8x16xf32>
    %168 = vector.extract_strided_slice %157 {offsets = [2, 0], sizes = [8, 8], strides = [1, 1]} : vector<10x8xbf16> to vector<8x8xbf16>
    %c2_126 = arith.constant 2 : index
    %c0_127 = arith.constant 0 : index
    %c0_128 = arith.constant 0 : index
    %169 = vector.load %arg3[%c2_126, %c0_127, %c0_128] : memref<9x8x16xbf16, #tpu.memory_space<vmem>>, vector<1x8x16xbf16>
    %170 = vector.shape_cast %169 : vector<1x8x16xbf16> to vector<8x16xbf16>
    %cst_129 = arith.constant dense<0.000000e+00> : vector<8x16xf32>
    %171 = tpu.matmul %168, %170, %cst_129 {dimension_numbers = #tpu.dot_dimension_numbers<[1], [0], [0], [1], [0, 0, 1, 1], [], []>} : vector<8x8xbf16>, vector<8x16xbf16>, vector<8x16xf32> -> vector<8x16xf32>
    %172 = arith.addf %167, %171 : vector<8x16xf32>
    %c2_i32_130 = arith.constant 2 : i32
    %173 = arith.addi %0, %c2_i32_130 : i32
    %c2_i32_131 = arith.constant 2 : i32
    %174 = arith.muli %173, %c2_i32_131 : i32
    %c1_i32_132 = arith.constant 1 : i32
    %175 = arith.addi %174, %c1_i32_132 : i32
    %c0_133 = arith.constant 0 : index
    %176 = arith.index_cast %175 : i32 to index
    %c0_134 = arith.constant 0 : index
    %c0_135 = arith.constant 0 : index
    %177 = vector.load %arg2[%c0_133, %176, %c0_134, %c0_135] : memref<1x14x10x8xbf16, #tpu.memory_space<vmem>>, vector<1x1x10x8xbf16>
    %178 = vector.shape_cast %177 : vector<1x1x10x8xbf16> to vector<10x8xbf16>
    %179 = vector.extract_strided_slice %178 {offsets = [0, 0], sizes = [8, 8], strides = [1, 1]} : vector<10x8xbf16> to vector<8x8xbf16>
    %c3_136 = arith.constant 3 : index
    %c0_137 = arith.constant 0 : index
    %c0_138 = arith.constant 0 : index
    %180 = vector.load %arg3[%c3_136, %c0_137, %c0_138] : memref<9x8x16xbf16, #tpu.memory_space<vmem>>, vector<1x8x16xbf16>
    %181 = vector.shape_cast %180 : vector<1x8x16xbf16> to vector<8x16xbf16>
    %cst_139 = arith.constant dense<0.000000e+00> : vector<8x16xf32>
    %182 = tpu.matmul %179, %181, %cst_139 {dimension_numbers = #tpu.dot_dimension_numbers<[1], [0], [0], [1], [0, 0, 1, 1], [], []>} : vector<8x8xbf16>, vector<8x16xbf16>, vector<8x16xf32> -> vector<8x16xf32>
    %183 = arith.addf %172, %182 : vector<8x16xf32>
    %184 = vector.extract_strided_slice %178 {offsets = [1, 0], sizes = [8, 8], strides = [1, 1]} : vector<10x8xbf16> to vector<8x8xbf16>
    %c4_140 = arith.constant 4 : index
    %c0_141 = arith.constant 0 : index
    %c0_142 = arith.constant 0 : index
    %185 = vector.load %arg3[%c4_140, %c0_141, %c0_142] : memref<9x8x16xbf16, #tpu.memory_space<vmem>>, vector<1x8x16xbf16>
    %186 = vector.shape_cast %185 : vector<1x8x16xbf16> to vector<8x16xbf16>
    %cst_143 = arith.constant dense<0.000000e+00> : vector<8x16xf32>
    %187 = tpu.matmul %184, %186, %cst_143 {dimension_numbers = #tpu.dot_dimension_numbers<[1], [0], [0], [1], [0, 0, 1, 1], [], []>} : vector<8x8xbf16>, vector<8x16xbf16>, vector<8x16xf32> -> vector<8x16xf32>
    %188 = arith.addf %183, %187 : vector<8x16xf32>
    %189 = vector.extract_strided_slice %178 {offsets = [2, 0], sizes = [8, 8], strides = [1, 1]} : vector<10x8xbf16> to vector<8x8xbf16>
    %c5_144 = arith.constant 5 : index
    %c0_145 = arith.constant 0 : index
    %c0_146 = arith.constant 0 : index
    %190 = vector.load %arg3[%c5_144, %c0_145, %c0_146] : memref<9x8x16xbf16, #tpu.memory_space<vmem>>, vector<1x8x16xbf16>
    %191 = vector.shape_cast %190 : vector<1x8x16xbf16> to vector<8x16xbf16>
    %cst_147 = arith.constant dense<0.000000e+00> : vector<8x16xf32>
    %192 = tpu.matmul %189, %191, %cst_147 {dimension_numbers = #tpu.dot_dimension_numbers<[1], [0], [0], [1], [0, 0, 1, 1], [], []>} : vector<8x8xbf16>, vector<8x16xbf16>, vector<8x16xf32> -> vector<8x16xf32>
    %193 = arith.addf %188, %192 : vector<8x16xf32>
    %c2_i32_148 = arith.constant 2 : i32
    %194 = arith.addi %0, %c2_i32_148 : i32
    %c2_i32_149 = arith.constant 2 : i32
    %195 = arith.muli %194, %c2_i32_149 : i32
    %c2_i32_150 = arith.constant 2 : i32
    %196 = arith.addi %195, %c2_i32_150 : i32
    %c0_151 = arith.constant 0 : index
    %197 = arith.index_cast %196 : i32 to index
    %c0_152 = arith.constant 0 : index
    %c0_153 = arith.constant 0 : index
    %198 = vector.load %arg2[%c0_151, %197, %c0_152, %c0_153] : memref<1x14x10x8xbf16, #tpu.memory_space<vmem>>, vector<1x1x10x8xbf16>
    %199 = vector.shape_cast %198 : vector<1x1x10x8xbf16> to vector<10x8xbf16>
    %200 = vector.extract_strided_slice %199 {offsets = [0, 0], sizes = [8, 8], strides = [1, 1]} : vector<10x8xbf16> to vector<8x8xbf16>
    %c6_154 = arith.constant 6 : index
    %c0_155 = arith.constant 0 : index
    %c0_156 = arith.constant 0 : index
    %201 = vector.load %arg3[%c6_154, %c0_155, %c0_156] : memref<9x8x16xbf16, #tpu.memory_space<vmem>>, vector<1x8x16xbf16>
    %202 = vector.shape_cast %201 : vector<1x8x16xbf16> to vector<8x16xbf16>
    %cst_157 = arith.constant dense<0.000000e+00> : vector<8x16xf32>
    %203 = tpu.matmul %200, %202, %cst_157 {dimension_numbers = #tpu.dot_dimension_numbers<[1], [0], [0], [1], [0, 0, 1, 1], [], []>} : vector<8x8xbf16>, vector<8x16xbf16>, vector<8x16xf32> -> vector<8x16xf32>
    %204 = arith.addf %193, %203 : vector<8x16xf32>
    %205 = vector.extract_strided_slice %199 {offsets = [1, 0], sizes = [8, 8], strides = [1, 1]} : vector<10x8xbf16> to vector<8x8xbf16>
    %c7_158 = arith.constant 7 : index
    %c0_159 = arith.constant 0 : index
    %c0_160 = arith.constant 0 : index
    %206 = vector.load %arg3[%c7_158, %c0_159, %c0_160] : memref<9x8x16xbf16, #tpu.memory_space<vmem>>, vector<1x8x16xbf16>
    %207 = vector.shape_cast %206 : vector<1x8x16xbf16> to vector<8x16xbf16>
    %cst_161 = arith.constant dense<0.000000e+00> : vector<8x16xf32>
    %208 = tpu.matmul %205, %207, %cst_161 {dimension_numbers = #tpu.dot_dimension_numbers<[1], [0], [0], [1], [0, 0, 1, 1], [], []>} : vector<8x8xbf16>, vector<8x16xbf16>, vector<8x16xf32> -> vector<8x16xf32>
    %209 = arith.addf %204, %208 : vector<8x16xf32>
    %210 = vector.extract_strided_slice %199 {offsets = [2, 0], sizes = [8, 8], strides = [1, 1]} : vector<10x8xbf16> to vector<8x8xbf16>
    %c8_162 = arith.constant 8 : index
    %c0_163 = arith.constant 0 : index
    %c0_164 = arith.constant 0 : index
    %211 = vector.load %arg3[%c8_162, %c0_163, %c0_164] : memref<9x8x16xbf16, #tpu.memory_space<vmem>>, vector<1x8x16xbf16>
    %212 = vector.shape_cast %211 : vector<1x8x16xbf16> to vector<8x16xbf16>
    %cst_165 = arith.constant dense<0.000000e+00> : vector<8x16xf32>
    %213 = tpu.matmul %210, %212, %cst_165 {dimension_numbers = #tpu.dot_dimension_numbers<[1], [0], [0], [1], [0, 0, 1, 1], [], []>} : vector<8x8xbf16>, vector<8x16xbf16>, vector<8x16xf32> -> vector<8x16xf32>
    %214 = arith.addf %209, %213 : vector<8x16xf32>
    %215 = vector.broadcast %1 : vector<1x16xf32> to vector<8x16xf32>
    %216 = arith.addf %214, %215 : vector<8x16xf32>
    %cst_166 = arith.constant 0.000000e+00 : f32
    %217 = vector.broadcast %cst_166 : f32 to vector<8x16xf32>
    %218 = arith.cmpf oge, %216, %217 : vector<8x16xf32>
    %219 = vector.broadcast %2 : vector<1x16xf32> to vector<8x16xf32>
    %220 = arith.mulf %219, %216 : vector<8x16xf32>
    %221 = arith.select %218, %216, %220 : vector<8x16xi1>, vector<8x16xf32>
    %c0_167 = arith.constant 0 : index
    %c2_168 = arith.constant 2 : index
    %c0_169 = arith.constant 0 : index
    %c0_170 = arith.constant 0 : index
    %222 = vector.load %arg6[%c0_167, %c2_168, %c0_169, %c0_170] : memref<1x6x8x16xf32, #tpu.memory_space<vmem>>, vector<1x1x8x16xf32>
    %223 = vector.shape_cast %222 : vector<1x1x8x16xf32> to vector<8x16xf32>
    %224 = vector.shape_cast %221 : vector<8x16xf32> to vector<1x1x8x16xf32>
    tpu.vector_store %arg6[%c0_167, %c2_168, %c0_169, %c0_170], %224 {strides = array<i32>} : memref<1x6x8x16xf32, #tpu.memory_space<vmem>>, vector<1x1x8x16xf32>,
    %cst_171 = arith.constant 0.000000e+00 : f32
    %225 = vector.broadcast %cst_171 : f32 to vector<8x16xf32>
    %c3_i32 = arith.constant 3 : i32
    %226 = arith.addi %0, %c3_i32 : i32
    %c2_i32_172 = arith.constant 2 : i32
    %227 = arith.muli %226, %c2_i32_172 : i32
    %c0_i32_173 = arith.constant 0 : i32
    %228 = arith.addi %227, %c0_i32_173 : i32
    %c0_174 = arith.constant 0 : index
    %229 = arith.index_cast %228 : i32 to index
    %c0_175 = arith.constant 0 : index
    %c0_176 = arith.constant 0 : index
    %230 = vector.load %arg2[%c0_174, %229, %c0_175, %c0_176] : memref<1x14x10x8xbf16, #tpu.memory_space<vmem>>, vector<1x1x10x8xbf16>
    %231 = vector.shape_cast %230 : vector<1x1x10x8xbf16> to vector<10x8xbf16>
    %232 = vector.extract_strided_slice %231 {offsets = [0, 0], sizes = [8, 8], strides = [1, 1]} : vector<10x8xbf16> to vector<8x8xbf16>
    %c0_177 = arith.constant 0 : index
    %c0_178 = arith.constant 0 : index
    %c0_179 = arith.constant 0 : index
    %233 = vector.load %arg3[%c0_177, %c0_178, %c0_179] : memref<9x8x16xbf16, #tpu.memory_space<vmem>>, vector<1x8x16xbf16>
    %234 = vector.shape_cast %233 : vector<1x8x16xbf16> to vector<8x16xbf16>
    %cst_180 = arith.constant dense<0.000000e+00> : vector<8x16xf32>
    %235 = tpu.matmul %232, %234, %cst_180 {dimension_numbers = #tpu.dot_dimension_numbers<[1], [0], [0], [1], [0, 0, 1, 1], [], []>} : vector<8x8xbf16>, vector<8x16xbf16>, vector<8x16xf32> -> vector<8x16xf32>
    %236 = arith.addf %225, %235 : vector<8x16xf32>
    %237 = vector.extract_strided_slice %231 {offsets = [1, 0], sizes = [8, 8], strides = [1, 1]} : vector<10x8xbf16> to vector<8x8xbf16>
    %c1_181 = arith.constant 1 : index
    %c0_182 = arith.constant 0 : index
    %c0_183 = arith.constant 0 : index
    %238 = vector.load %arg3[%c1_181, %c0_182, %c0_183] : memref<9x8x16xbf16, #tpu.memory_space<vmem>>, vector<1x8x16xbf16>
    %239 = vector.shape_cast %238 : vector<1x8x16xbf16> to vector<8x16xbf16>
    %cst_184 = arith.constant dense<0.000000e+00> : vector<8x16xf32>
    %240 = tpu.matmul %237, %239, %cst_184 {dimension_numbers = #tpu.dot_dimension_numbers<[1], [0], [0], [1], [0, 0, 1, 1], [], []>} : vector<8x8xbf16>, vector<8x16xbf16>, vector<8x16xf32> -> vector<8x16xf32>
    %241 = arith.addf %236, %240 : vector<8x16xf32>
    %242 = vector.extract_strided_slice %231 {offsets = [2, 0], sizes = [8, 8], strides = [1, 1]} : vector<10x8xbf16> to vector<8x8xbf16>
    %c2_185 = arith.constant 2 : index
    %c0_186 = arith.constant 0 : index
    %c0_187 = arith.constant 0 : index
    %243 = vector.load %arg3[%c2_185, %c0_186, %c0_187] : memref<9x8x16xbf16, #tpu.memory_space<vmem>>, vector<1x8x16xbf16>
    %244 = vector.shape_cast %243 : vector<1x8x16xbf16> to vector<8x16xbf16>
    %cst_188 = arith.constant dense<0.000000e+00> : vector<8x16xf32>
    %245 = tpu.matmul %242, %244, %cst_188 {dimension_numbers = #tpu.dot_dimension_numbers<[1], [0], [0], [1], [0, 0, 1, 1], [], []>} : vector<8x8xbf16>, vector<8x16xbf16>, vector<8x16xf32> -> vector<8x16xf32>
    %246 = arith.addf %241, %245 : vector<8x16xf32>
    %c3_i32_189 = arith.constant 3 : i32
    %247 = arith.addi %0, %c3_i32_189 : i32
    %c2_i32_190 = arith.constant 2 : i32
    %248 = arith.muli %247, %c2_i32_190 : i32
    %c1_i32_191 = arith.constant 1 : i32
    %249 = arith.addi %248, %c1_i32_191 : i32
    %c0_192 = arith.constant 0 : index
    %250 = arith.index_cast %249 : i32 to index
    %c0_193 = arith.constant 0 : index
    %c0_194 = arith.constant 0 : index
    %251 = vector.load %arg2[%c0_192, %250, %c0_193, %c0_194] : memref<1x14x10x8xbf16, #tpu.memory_space<vmem>>, vector<1x1x10x8xbf16>
    %252 = vector.shape_cast %251 : vector<1x1x10x8xbf16> to vector<10x8xbf16>
    %253 = vector.extract_strided_slice %252 {offsets = [0, 0], sizes = [8, 8], strides = [1, 1]} : vector<10x8xbf16> to vector<8x8xbf16>
    %c3_195 = arith.constant 3 : index
    %c0_196 = arith.constant 0 : index
    %c0_197 = arith.constant 0 : index
    %254 = vector.load %arg3[%c3_195, %c0_196, %c0_197] : memref<9x8x16xbf16, #tpu.memory_space<vmem>>, vector<1x8x16xbf16>
    %255 = vector.shape_cast %254 : vector<1x8x16xbf16> to vector<8x16xbf16>
    %cst_198 = arith.constant dense<0.000000e+00> : vector<8x16xf32>
    %256 = tpu.matmul %253, %255, %cst_198 {dimension_numbers = #tpu.dot_dimension_numbers<[1], [0], [0], [1], [0, 0, 1, 1], [], []>} : vector<8x8xbf16>, vector<8x16xbf16>, vector<8x16xf32> -> vector<8x16xf32>
    %257 = arith.addf %246, %256 : vector<8x16xf32>
    %258 = vector.extract_strided_slice %252 {offsets = [1, 0], sizes = [8, 8], strides = [1, 1]} : vector<10x8xbf16> to vector<8x8xbf16>
    %c4_199 = arith.constant 4 : index
    %c0_200 = arith.constant 0 : index
    %c0_201 = arith.constant 0 : index
    %259 = vector.load %arg3[%c4_199, %c0_200, %c0_201] : memref<9x8x16xbf16, #tpu.memory_space<vmem>>, vector<1x8x16xbf16>
    %260 = vector.shape_cast %259 : vector<1x8x16xbf16> to vector<8x16xbf16>
    %cst_202 = arith.constant dense<0.000000e+00> : vector<8x16xf32>
    %261 = tpu.matmul %258, %260, %cst_202 {dimension_numbers = #tpu.dot_dimension_numbers<[1], [0], [0], [1], [0, 0, 1, 1], [], []>} : vector<8x8xbf16>, vector<8x16xbf16>, vector<8x16xf32> -> vector<8x16xf32>
    %262 = arith.addf %257, %261 : vector<8x16xf32>
    %263 = vector.extract_strided_slice %252 {offsets = [2, 0], sizes = [8, 8], strides = [1, 1]} : vector<10x8xbf16> to vector<8x8xbf16>
    %c5_203 = arith.constant 5 : index
    %c0_204 = arith.constant 0 : index
    %c0_205 = arith.constant 0 : index
    %264 = vector.load %arg3[%c5_203, %c0_204, %c0_205] : memref<9x8x16xbf16, #tpu.memory_space<vmem>>, vector<1x8x16xbf16>
    %265 = vector.shape_cast %264 : vector<1x8x16xbf16> to vector<8x16xbf16>
    %cst_206 = arith.constant dense<0.000000e+00> : vector<8x16xf32>
    %266 = tpu.matmul %263, %265, %cst_206 {dimension_numbers = #tpu.dot_dimension_numbers<[1], [0], [0], [1], [0, 0, 1, 1], [], []>} : vector<8x8xbf16>, vector<8x16xbf16>, vector<8x16xf32> -> vector<8x16xf32>
    %267 = arith.addf %262, %266 : vector<8x16xf32>
    %c3_i32_207 = arith.constant 3 : i32
    %268 = arith.addi %0, %c3_i32_207 : i32
    %c2_i32_208 = arith.constant 2 : i32
    %269 = arith.muli %268, %c2_i32_208 : i32
    %c2_i32_209 = arith.constant 2 : i32
    %270 = arith.addi %269, %c2_i32_209 : i32
    %c0_210 = arith.constant 0 : index
    %271 = arith.index_cast %270 : i32 to index
    %c0_211 = arith.constant 0 : index
    %c0_212 = arith.constant 0 : index
    %272 = vector.load %arg2[%c0_210, %271, %c0_211, %c0_212] : memref<1x14x10x8xbf16, #tpu.memory_space<vmem>>, vector<1x1x10x8xbf16>
    %273 = vector.shape_cast %272 : vector<1x1x10x8xbf16> to vector<10x8xbf16>
    %274 = vector.extract_strided_slice %273 {offsets = [0, 0], sizes = [8, 8], strides = [1, 1]} : vector<10x8xbf16> to vector<8x8xbf16>
    %c6_213 = arith.constant 6 : index
    %c0_214 = arith.constant 0 : index
    %c0_215 = arith.constant 0 : index
    %275 = vector.load %arg3[%c6_213, %c0_214, %c0_215] : memref<9x8x16xbf16, #tpu.memory_space<vmem>>, vector<1x8x16xbf16>
    %276 = vector.shape_cast %275 : vector<1x8x16xbf16> to vector<8x16xbf16>
    %cst_216 = arith.constant dense<0.000000e+00> : vector<8x16xf32>
    %277 = tpu.matmul %274, %276, %cst_216 {dimension_numbers = #tpu.dot_dimension_numbers<[1], [0], [0], [1], [0, 0, 1, 1], [], []>} : vector<8x8xbf16>, vector<8x16xbf16>, vector<8x16xf32> -> vector<8x16xf32>
    %278 = arith.addf %267, %277 : vector<8x16xf32>
    %279 = vector.extract_strided_slice %273 {offsets = [1, 0], sizes = [8, 8], strides = [1, 1]} : vector<10x8xbf16> to vector<8x8xbf16>
    %c7_217 = arith.constant 7 : index
    %c0_218 = arith.constant 0 : index
    %c0_219 = arith.constant 0 : index
    %280 = vector.load %arg3[%c7_217, %c0_218, %c0_219] : memref<9x8x16xbf16, #tpu.memory_space<vmem>>, vector<1x8x16xbf16>
    %281 = vector.shape_cast %280 : vector<1x8x16xbf16> to vector<8x16xbf16>
    %cst_220 = arith.constant dense<0.000000e+00> : vector<8x16xf32>
    %282 = tpu.matmul %279, %281, %cst_220 {dimension_numbers = #tpu.dot_dimension_numbers<[1], [0], [0], [1], [0, 0, 1, 1], [], []>} : vector<8x8xbf16>, vector<8x16xbf16>, vector<8x16xf32> -> vector<8x16xf32>
    %283 = arith.addf %278, %282 : vector<8x16xf32>
    %284 = vector.extract_strided_slice %273 {offsets = [2, 0], sizes = [8, 8], strides = [1, 1]} : vector<10x8xbf16> to vector<8x8xbf16>
    %c8_221 = arith.constant 8 : index
    %c0_222 = arith.constant 0 : index
    %c0_223 = arith.constant 0 : index
    %285 = vector.load %arg3[%c8_221, %c0_222, %c0_223] : memref<9x8x16xbf16, #tpu.memory_space<vmem>>, vector<1x8x16xbf16>
    %286 = vector.shape_cast %285 : vector<1x8x16xbf16> to vector<8x16xbf16>
    %cst_224 = arith.constant dense<0.000000e+00> : vector<8x16xf32>
    %287 = tpu.matmul %284, %286, %cst_224 {dimension_numbers = #tpu.dot_dimension_numbers<[1], [0], [0], [1], [0, 0, 1, 1], [], []>} : vector<8x8xbf16>, vector<8x16xbf16>, vector<8x16xf32> -> vector<8x16xf32>
    %288 = arith.addf %283, %287 : vector<8x16xf32>
    %289 = vector.broadcast %1 : vector<1x16xf32> to vector<8x16xf32>
    %290 = arith.addf %288, %289 : vector<8x16xf32>
    %cst_225 = arith.constant 0.000000e+00 : f32
    %291 = vector.broadcast %cst_225 : f32 to vector<8x16xf32>
    %292 = arith.cmpf oge, %290, %291 : vector<8x16xf32>
    %293 = vector.broadcast %2 : vector<1x16xf32> to vector<8x16xf32>
    %294 = arith.mulf %293, %290 : vector<8x16xf32>
    %295 = arith.select %292, %290, %294 : vector<8x16xi1>, vector<8x16xf32>
    %c0_226 = arith.constant 0 : index
    %c3_227 = arith.constant 3 : index
    %c0_228 = arith.constant 0 : index
    %c0_229 = arith.constant 0 : index
    %296 = vector.load %arg6[%c0_226, %c3_227, %c0_228, %c0_229] : memref<1x6x8x16xf32, #tpu.memory_space<vmem>>, vector<1x1x8x16xf32>
    %297 = vector.shape_cast %296 : vector<1x1x8x16xf32> to vector<8x16xf32>
    %298 = vector.shape_cast %295 : vector<8x16xf32> to vector<1x1x8x16xf32>
    tpu.vector_store %arg6[%c0_226, %c3_227, %c0_228, %c0_229], %298 {strides = array<i32>} : memref<1x6x8x16xf32, #tpu.memory_space<vmem>>, vector<1x1x8x16xf32>,
    %cst_230 = arith.constant 0.000000e+00 : f32
    %299 = vector.broadcast %cst_230 : f32 to vector<8x16xf32>
    %c4_i32 = arith.constant 4 : i32
    %300 = arith.addi %0, %c4_i32 : i32
    %c2_i32_231 = arith.constant 2 : i32
    %301 = arith.muli %300, %c2_i32_231 : i32
    %c0_i32_232 = arith.constant 0 : i32
    %302 = arith.addi %301, %c0_i32_232 : i32
    %c0_233 = arith.constant 0 : index
    %303 = arith.index_cast %302 : i32 to index
    %c0_234 = arith.constant 0 : index
    %c0_235 = arith.constant 0 : index
    %304 = vector.load %arg2[%c0_233, %303, %c0_234, %c0_235] : memref<1x14x10x8xbf16, #tpu.memory_space<vmem>>, vector<1x1x10x8xbf16>
    %305 = vector.shape_cast %304 : vector<1x1x10x8xbf16> to vector<10x8xbf16>
    %306 = vector.extract_strided_slice %305 {offsets = [0, 0], sizes = [8, 8], strides = [1, 1]} : vector<10x8xbf16> to vector<8x8xbf16>
    %c0_236 = arith.constant 0 : index
    %c0_237 = arith.constant 0 : index
    %c0_238 = arith.constant 0 : index
    %307 = vector.load %arg3[%c0_236, %c0_237, %c0_238] : memref<9x8x16xbf16, #tpu.memory_space<vmem>>, vector<1x8x16xbf16>
    %308 = vector.shape_cast %307 : vector<1x8x16xbf16> to vector<8x16xbf16>
    %cst_239 = arith.constant dense<0.000000e+00> : vector<8x16xf32>
    %309 = tpu.matmul %306, %308, %cst_239 {dimension_numbers = #tpu.dot_dimension_numbers<[1], [0], [0], [1], [0, 0, 1, 1], [], []>} : vector<8x8xbf16>, vector<8x16xbf16>, vector<8x16xf32> -> vector<8x16xf32>
    %310 = arith.addf %299, %309 : vector<8x16xf32>
    %311 = vector.extract_strided_slice %305 {offsets = [1, 0], sizes = [8, 8], strides = [1, 1]} : vector<10x8xbf16> to vector<8x8xbf16>
    %c1_240 = arith.constant 1 : index
    %c0_241 = arith.constant 0 : index
    %c0_242 = arith.constant 0 : index
    %312 = vector.load %arg3[%c1_240, %c0_241, %c0_242] : memref<9x8x16xbf16, #tpu.memory_space<vmem>>, vector<1x8x16xbf16>
    %313 = vector.shape_cast %312 : vector<1x8x16xbf16> to vector<8x16xbf16>
    %cst_243 = arith.constant dense<0.000000e+00> : vector<8x16xf32>
    %314 = tpu.matmul %311, %313, %cst_243 {dimension_numbers = #tpu.dot_dimension_numbers<[1], [0], [0], [1], [0, 0, 1, 1], [], []>} : vector<8x8xbf16>, vector<8x16xbf16>, vector<8x16xf32> -> vector<8x16xf32>
    %315 = arith.addf %310, %314 : vector<8x16xf32>
    %316 = vector.extract_strided_slice %305 {offsets = [2, 0], sizes = [8, 8], strides = [1, 1]} : vector<10x8xbf16> to vector<8x8xbf16>
    %c2_244 = arith.constant 2 : index
    %c0_245 = arith.constant 0 : index
    %c0_246 = arith.constant 0 : index
    %317 = vector.load %arg3[%c2_244, %c0_245, %c0_246] : memref<9x8x16xbf16, #tpu.memory_space<vmem>>, vector<1x8x16xbf16>
    %318 = vector.shape_cast %317 : vector<1x8x16xbf16> to vector<8x16xbf16>
    %cst_247 = arith.constant dense<0.000000e+00> : vector<8x16xf32>
    %319 = tpu.matmul %316, %318, %cst_247 {dimension_numbers = #tpu.dot_dimension_numbers<[1], [0], [0], [1], [0, 0, 1, 1], [], []>} : vector<8x8xbf16>, vector<8x16xbf16>, vector<8x16xf32> -> vector<8x16xf32>
    %320 = arith.addf %315, %319 : vector<8x16xf32>
    %c4_i32_248 = arith.constant 4 : i32
    %321 = arith.addi %0, %c4_i32_248 : i32
    %c2_i32_249 = arith.constant 2 : i32
    %322 = arith.muli %321, %c2_i32_249 : i32
    %c1_i32_250 = arith.constant 1 : i32
    %323 = arith.addi %322, %c1_i32_250 : i32
    %c0_251 = arith.constant 0 : index
    %324 = arith.index_cast %323 : i32 to index
    %c0_252 = arith.constant 0 : index
    %c0_253 = arith.constant 0 : index
    %325 = vector.load %arg2[%c0_251, %324, %c0_252, %c0_253] : memref<1x14x10x8xbf16, #tpu.memory_space<vmem>>, vector<1x1x10x8xbf16>
    %326 = vector.shape_cast %325 : vector<1x1x10x8xbf16> to vector<10x8xbf16>
    %327 = vector.extract_strided_slice %326 {offsets = [0, 0], sizes = [8, 8], strides = [1, 1]} : vector<10x8xbf16> to vector<8x8xbf16>
    %c3_254 = arith.constant 3 : index
    %c0_255 = arith.constant 0 : index
    %c0_256 = arith.constant 0 : index
    %328 = vector.load %arg3[%c3_254, %c0_255, %c0_256] : memref<9x8x16xbf16, #tpu.memory_space<vmem>>, vector<1x8x16xbf16>
    %329 = vector.shape_cast %328 : vector<1x8x16xbf16> to vector<8x16xbf16>
    %cst_257 = arith.constant dense<0.000000e+00> : vector<8x16xf32>
    %330 = tpu.matmul %327, %329, %cst_257 {dimension_numbers = #tpu.dot_dimension_numbers<[1], [0], [0], [1], [0, 0, 1, 1], [], []>} : vector<8x8xbf16>, vector<8x16xbf16>, vector<8x16xf32> -> vector<8x16xf32>
    %331 = arith.addf %320, %330 : vector<8x16xf32>
    %332 = vector.extract_strided_slice %326 {offsets = [1, 0], sizes = [8, 8], strides = [1, 1]} : vector<10x8xbf16> to vector<8x8xbf16>
    %c4_258 = arith.constant 4 : index
    %c0_259 = arith.constant 0 : index
    %c0_260 = arith.constant 0 : index
    %333 = vector.load %arg3[%c4_258, %c0_259, %c0_260] : memref<9x8x16xbf16, #tpu.memory_space<vmem>>, vector<1x8x16xbf16>
    %334 = vector.shape_cast %333 : vector<1x8x16xbf16> to vector<8x16xbf16>
    %cst_261 = arith.constant dense<0.000000e+00> : vector<8x16xf32>
    %335 = tpu.matmul %332, %334, %cst_261 {dimension_numbers = #tpu.dot_dimension_numbers<[1], [0], [0], [1], [0, 0, 1, 1], [], []>} : vector<8x8xbf16>, vector<8x16xbf16>, vector<8x16xf32> -> vector<8x16xf32>
    %336 = arith.addf %331, %335 : vector<8x16xf32>
    %337 = vector.extract_strided_slice %326 {offsets = [2, 0], sizes = [8, 8], strides = [1, 1]} : vector<10x8xbf16> to vector<8x8xbf16>
    %c5_262 = arith.constant 5 : index
    %c0_263 = arith.constant 0 : index
    %c0_264 = arith.constant 0 : index
    %338 = vector.load %arg3[%c5_262, %c0_263, %c0_264] : memref<9x8x16xbf16, #tpu.memory_space<vmem>>, vector<1x8x16xbf16>
    %339 = vector.shape_cast %338 : vector<1x8x16xbf16> to vector<8x16xbf16>
    %cst_265 = arith.constant dense<0.000000e+00> : vector<8x16xf32>
    %340 = tpu.matmul %337, %339, %cst_265 {dimension_numbers = #tpu.dot_dimension_numbers<[1], [0], [0], [1], [0, 0, 1, 1], [], []>} : vector<8x8xbf16>, vector<8x16xbf16>, vector<8x16xf32> -> vector<8x16xf32>
    %341 = arith.addf %336, %340 : vector<8x16xf32>
    %c4_i32_266 = arith.constant 4 : i32
    %342 = arith.addi %0, %c4_i32_266 : i32
    %c2_i32_267 = arith.constant 2 : i32
    %343 = arith.muli %342, %c2_i32_267 : i32
    %c2_i32_268 = arith.constant 2 : i32
    %344 = arith.addi %343, %c2_i32_268 : i32
    %c0_269 = arith.constant 0 : index
    %345 = arith.index_cast %344 : i32 to index
    %c0_270 = arith.constant 0 : index
    %c0_271 = arith.constant 0 : index
    %346 = vector.load %arg2[%c0_269, %345, %c0_270, %c0_271] : memref<1x14x10x8xbf16, #tpu.memory_space<vmem>>, vector<1x1x10x8xbf16>
    %347 = vector.shape_cast %346 : vector<1x1x10x8xbf16> to vector<10x8xbf16>
    %348 = vector.extract_strided_slice %347 {offsets = [0, 0], sizes = [8, 8], strides = [1, 1]} : vector<10x8xbf16> to vector<8x8xbf16>
    %c6_272 = arith.constant 6 : index
    %c0_273 = arith.constant 0 : index
    %c0_274 = arith.constant 0 : index
    %349 = vector.load %arg3[%c6_272, %c0_273, %c0_274] : memref<9x8x16xbf16, #tpu.memory_space<vmem>>, vector<1x8x16xbf16>
    %350 = vector.shape_cast %349 : vector<1x8x16xbf16> to vector<8x16xbf16>
    %cst_275 = arith.constant dense<0.000000e+00> : vector<8x16xf32>
    %351 = tpu.matmul %348, %350, %cst_275 {dimension_numbers = #tpu.dot_dimension_numbers<[1], [0], [0], [1], [0, 0, 1, 1], [], []>} : vector<8x8xbf16>, vector<8x16xbf16>, vector<8x16xf32> -> vector<8x16xf32>
    %352 = arith.addf %341, %351 : vector<8x16xf32>
    %353 = vector.extract_strided_slice %347 {offsets = [1, 0], sizes = [8, 8], strides = [1, 1]} : vector<10x8xbf16> to vector<8x8xbf16>
    %c7_276 = arith.constant 7 : index
    %c0_277 = arith.constant 0 : index
    %c0_278 = arith.constant 0 : index
    %354 = vector.load %arg3[%c7_276, %c0_277, %c0_278] : memref<9x8x16xbf16, #tpu.memory_space<vmem>>, vector<1x8x16xbf16>
    %355 = vector.shape_cast %354 : vector<1x8x16xbf16> to vector<8x16xbf16>
    %cst_279 = arith.constant dense<0.000000e+00> : vector<8x16xf32>
    %356 = tpu.matmul %353, %355, %cst_279 {dimension_numbers = #tpu.dot_dimension_numbers<[1], [0], [0], [1], [0, 0, 1, 1], [], []>} : vector<8x8xbf16>, vector<8x16xbf16>, vector<8x16xf32> -> vector<8x16xf32>
    %357 = arith.addf %352, %356 : vector<8x16xf32>
    %358 = vector.extract_strided_slice %347 {offsets = [2, 0], sizes = [8, 8], strides = [1, 1]} : vector<10x8xbf16> to vector<8x8xbf16>
    %c8_280 = arith.constant 8 : index
    %c0_281 = arith.constant 0 : index
    %c0_282 = arith.constant 0 : index
    %359 = vector.load %arg3[%c8_280, %c0_281, %c0_282] : memref<9x8x16xbf16, #tpu.memory_space<vmem>>, vector<1x8x16xbf16>
    %360 = vector.shape_cast %359 : vector<1x8x16xbf16> to vector<8x16xbf16>
    %cst_283 = arith.constant dense<0.000000e+00> : vector<8x16xf32>
    %361 = tpu.matmul %358, %360, %cst_283 {dimension_numbers = #tpu.dot_dimension_numbers<[1], [0], [0], [1], [0, 0, 1, 1], [], []>} : vector<8x8xbf16>, vector<8x16xbf16>, vector<8x16xf32> -> vector<8x16xf32>
    %362 = arith.addf %357, %361 : vector<8x16xf32>
    %363 = vector.broadcast %1 : vector<1x16xf32> to vector<8x16xf32>
    %364 = arith.addf %362, %363 : vector<8x16xf32>
    %cst_284 = arith.constant 0.000000e+00 : f32
    %365 = vector.broadcast %cst_284 : f32 to vector<8x16xf32>
    %366 = arith.cmpf oge, %364, %365 : vector<8x16xf32>
    %367 = vector.broadcast %2 : vector<1x16xf32> to vector<8x16xf32>
    %368 = arith.mulf %367, %364 : vector<8x16xf32>
    %369 = arith.select %366, %364, %368 : vector<8x16xi1>, vector<8x16xf32>
    %c0_285 = arith.constant 0 : index
    %c4_286 = arith.constant 4 : index
    %c0_287 = arith.constant 0 : index
    %c0_288 = arith.constant 0 : index
    %370 = vector.load %arg6[%c0_285, %c4_286, %c0_287, %c0_288] : memref<1x6x8x16xf32, #tpu.memory_space<vmem>>, vector<1x1x8x16xf32>
    %371 = vector.shape_cast %370 : vector<1x1x8x16xf32> to vector<8x16xf32>
    %372 = vector.shape_cast %369 : vector<8x16xf32> to vector<1x1x8x16xf32>
    tpu.vector_store %arg6[%c0_285, %c4_286, %c0_287, %c0_288], %372 {strides = array<i32>} : memref<1x6x8x16xf32, #tpu.memory_space<vmem>>, vector<1x1x8x16xf32>,
    %cst_289 = arith.constant 0.000000e+00 : f32
    %373 = vector.broadcast %cst_289 : f32 to vector<8x16xf32>
    %c5_i32 = arith.constant 5 : i32
    %374 = arith.addi %0, %c5_i32 : i32
    %c2_i32_290 = arith.constant 2 : i32
    %375 = arith.muli %374, %c2_i32_290 : i32
    %c0_i32_291 = arith.constant 0 : i32
    %376 = arith.addi %375, %c0_i32_291 : i32
    %c0_292 = arith.constant 0 : index
    %377 = arith.index_cast %376 : i32 to index
    %c0_293 = arith.constant 0 : index
    %c0_294 = arith.constant 0 : index
    %378 = vector.load %arg2[%c0_292, %377, %c0_293, %c0_294] : memref<1x14x10x8xbf16, #tpu.memory_space<vmem>>, vector<1x1x10x8xbf16>
    %379 = vector.shape_cast %378 : vector<1x1x10x8xbf16> to vector<10x8xbf16>
    %380 = vector.extract_strided_slice %379 {offsets = [0, 0], sizes = [8, 8], strides = [1, 1]} : vector<10x8xbf16> to vector<8x8xbf16>
    %c0_295 = arith.constant 0 : index
    %c0_296 = arith.constant 0 : index
    %c0_297 = arith.constant 0 : index
    %381 = vector.load %arg3[%c0_295, %c0_296, %c0_297] : memref<9x8x16xbf16, #tpu.memory_space<vmem>>, vector<1x8x16xbf16>
    %382 = vector.shape_cast %381 : vector<1x8x16xbf16> to vector<8x16xbf16>
    %cst_298 = arith.constant dense<0.000000e+00> : vector<8x16xf32>
    %383 = tpu.matmul %380, %382, %cst_298 {dimension_numbers = #tpu.dot_dimension_numbers<[1], [0], [0], [1], [0, 0, 1, 1], [], []>} : vector<8x8xbf16>, vector<8x16xbf16>, vector<8x16xf32> -> vector<8x16xf32>
    %384 = arith.addf %373, %383 : vector<8x16xf32>
    %385 = vector.extract_strided_slice %379 {offsets = [1, 0], sizes = [8, 8], strides = [1, 1]} : vector<10x8xbf16> to vector<8x8xbf16>
    %c1_299 = arith.constant 1 : index
    %c0_300 = arith.constant 0 : index
    %c0_301 = arith.constant 0 : index
    %386 = vector.load %arg3[%c1_299, %c0_300, %c0_301] : memref<9x8x16xbf16, #tpu.memory_space<vmem>>, vector<1x8x16xbf16>
    %387 = vector.shape_cast %386 : vector<1x8x16xbf16> to vector<8x16xbf16>
    %cst_302 = arith.constant dense<0.000000e+00> : vector<8x16xf32>
    %388 = tpu.matmul %385, %387, %cst_302 {dimension_numbers = #tpu.dot_dimension_numbers<[1], [0], [0], [1], [0, 0, 1, 1], [], []>} : vector<8x8xbf16>, vector<8x16xbf16>, vector<8x16xf32> -> vector<8x16xf32>
    %389 = arith.addf %384, %388 : vector<8x16xf32>
    %390 = vector.extract_strided_slice %379 {offsets = [2, 0], sizes = [8, 8], strides = [1, 1]} : vector<10x8xbf16> to vector<8x8xbf16>
    %c2_303 = arith.constant 2 : index
    %c0_304 = arith.constant 0 : index
    %c0_305 = arith.constant 0 : index
    %391 = vector.load %arg3[%c2_303, %c0_304, %c0_305] : memref<9x8x16xbf16, #tpu.memory_space<vmem>>, vector<1x8x16xbf16>
    %392 = vector.shape_cast %391 : vector<1x8x16xbf16> to vector<8x16xbf16>
    %cst_306 = arith.constant dense<0.000000e+00> : vector<8x16xf32>
    %393 = tpu.matmul %390, %392, %cst_306 {dimension_numbers = #tpu.dot_dimension_numbers<[1], [0], [0], [1], [0, 0, 1, 1], [], []>} : vector<8x8xbf16>, vector<8x16xbf16>, vector<8x16xf32> -> vector<8x16xf32>
    %394 = arith.addf %389, %393 : vector<8x16xf32>
    %c5_i32_307 = arith.constant 5 : i32
    %395 = arith.addi %0, %c5_i32_307 : i32
    %c2_i32_308 = arith.constant 2 : i32
    %396 = arith.muli %395, %c2_i32_308 : i32
    %c1_i32_309 = arith.constant 1 : i32
    %397 = arith.addi %396, %c1_i32_309 : i32
    %c0_310 = arith.constant 0 : index
    %398 = arith.index_cast %397 : i32 to index
    %c0_311 = arith.constant 0 : index
    %c0_312 = arith.constant 0 : index
    %399 = vector.load %arg2[%c0_310, %398, %c0_311, %c0_312] : memref<1x14x10x8xbf16, #tpu.memory_space<vmem>>, vector<1x1x10x8xbf16>
    %400 = vector.shape_cast %399 : vector<1x1x10x8xbf16> to vector<10x8xbf16>
    %401 = vector.extract_strided_slice %400 {offsets = [0, 0], sizes = [8, 8], strides = [1, 1]} : vector<10x8xbf16> to vector<8x8xbf16>
    %c3_313 = arith.constant 3 : index
    %c0_314 = arith.constant 0 : index
    %c0_315 = arith.constant 0 : index
    %402 = vector.load %arg3[%c3_313, %c0_314, %c0_315] : memref<9x8x16xbf16, #tpu.memory_space<vmem>>, vector<1x8x16xbf16>
    %403 = vector.shape_cast %402 : vector<1x8x16xbf16> to vector<8x16xbf16>
    %cst_316 = arith.constant dense<0.000000e+00> : vector<8x16xf32>
    %404 = tpu.matmul %401, %403, %cst_316 {dimension_numbers = #tpu.dot_dimension_numbers<[1], [0], [0], [1], [0, 0, 1, 1], [], []>} : vector<8x8xbf16>, vector<8x16xbf16>, vector<8x16xf32> -> vector<8x16xf32>
    %405 = arith.addf %394, %404 : vector<8x16xf32>
    %406 = vector.extract_strided_slice %400 {offsets = [1, 0], sizes = [8, 8], strides = [1, 1]} : vector<10x8xbf16> to vector<8x8xbf16>
    %c4_317 = arith.constant 4 : index
    %c0_318 = arith.constant 0 : index
    %c0_319 = arith.constant 0 : index
    %407 = vector.load %arg3[%c4_317, %c0_318, %c0_319] : memref<9x8x16xbf16, #tpu.memory_space<vmem>>, vector<1x8x16xbf16>
    %408 = vector.shape_cast %407 : vector<1x8x16xbf16> to vector<8x16xbf16>
    %cst_320 = arith.constant dense<0.000000e+00> : vector<8x16xf32>
    %409 = tpu.matmul %406, %408, %cst_320 {dimension_numbers = #tpu.dot_dimension_numbers<[1], [0], [0], [1], [0, 0, 1, 1], [], []>} : vector<8x8xbf16>, vector<8x16xbf16>, vector<8x16xf32> -> vector<8x16xf32>
    %410 = arith.addf %405, %409 : vector<8x16xf32>
    %411 = vector.extract_strided_slice %400 {offsets = [2, 0], sizes = [8, 8], strides = [1, 1]} : vector<10x8xbf16> to vector<8x8xbf16>
    %c5_321 = arith.constant 5 : index
    %c0_322 = arith.constant 0 : index
    %c0_323 = arith.constant 0 : index
    %412 = vector.load %arg3[%c5_321, %c0_322, %c0_323] : memref<9x8x16xbf16, #tpu.memory_space<vmem>>, vector<1x8x16xbf16>
    %413 = vector.shape_cast %412 : vector<1x8x16xbf16> to vector<8x16xbf16>
    %cst_324 = arith.constant dense<0.000000e+00> : vector<8x16xf32>
    %414 = tpu.matmul %411, %413, %cst_324 {dimension_numbers = #tpu.dot_dimension_numbers<[1], [0], [0], [1], [0, 0, 1, 1], [], []>} : vector<8x8xbf16>, vector<8x16xbf16>, vector<8x16xf32> -> vector<8x16xf32>
    %415 = arith.addf %410, %414 : vector<8x16xf32>
    %c5_i32_325 = arith.constant 5 : i32
    %416 = arith.addi %0, %c5_i32_325 : i32
    %c2_i32_326 = arith.constant 2 : i32
    %417 = arith.muli %416, %c2_i32_326 : i32
    %c2_i32_327 = arith.constant 2 : i32
    %418 = arith.addi %417, %c2_i32_327 : i32
    %c0_328 = arith.constant 0 : index
    %419 = arith.index_cast %418 : i32 to index
    %c0_329 = arith.constant 0 : index
    %c0_330 = arith.constant 0 : index
    %420 = vector.load %arg2[%c0_328, %419, %c0_329, %c0_330] : memref<1x14x10x8xbf16, #tpu.memory_space<vmem>>, vector<1x1x10x8xbf16>
    %421 = vector.shape_cast %420 : vector<1x1x10x8xbf16> to vector<10x8xbf16>
    %422 = vector.extract_strided_slice %421 {offsets = [0, 0], sizes = [8, 8], strides = [1, 1]} : vector<10x8xbf16> to vector<8x8xbf16>
    %c6_331 = arith.constant 6 : index
    %c0_332 = arith.constant 0 : index
    %c0_333 = arith.constant 0 : index
    %423 = vector.load %arg3[%c6_331, %c0_332, %c0_333] : memref<9x8x16xbf16, #tpu.memory_space<vmem>>, vector<1x8x16xbf16>
    %424 = vector.shape_cast %423 : vector<1x8x16xbf16> to vector<8x16xbf16>
    %cst_334 = arith.constant dense<0.000000e+00> : vector<8x16xf32>
    %425 = tpu.matmul %422, %424, %cst_334 {dimension_numbers = #tpu.dot_dimension_numbers<[1], [0], [0], [1], [0, 0, 1, 1], [], []>} : vector<8x8xbf16>, vector<8x16xbf16>, vector<8x16xf32> -> vector<8x16xf32>
    %426 = arith.addf %415, %425 : vector<8x16xf32>
    %427 = vector.extract_strided_slice %421 {offsets = [1, 0], sizes = [8, 8], strides = [1, 1]} : vector<10x8xbf16> to vector<8x8xbf16>
    %c7_335 = arith.constant 7 : index
    %c0_336 = arith.constant 0 : index
    %c0_337 = arith.constant 0 : index
    %428 = vector.load %arg3[%c7_335, %c0_336, %c0_337] : memref<9x8x16xbf16, #tpu.memory_space<vmem>>, vector<1x8x16xbf16>
    %429 = vector.shape_cast %428 : vector<1x8x16xbf16> to vector<8x16xbf16>
    %cst_338 = arith.constant dense<0.000000e+00> : vector<8x16xf32>
    %430 = tpu.matmul %427, %429, %cst_338 {dimension_numbers = #tpu.dot_dimension_numbers<[1], [0], [0], [1], [0, 0, 1, 1], [], []>} : vector<8x8xbf16>, vector<8x16xbf16>, vector<8x16xf32> -> vector<8x16xf32>
    %431 = arith.addf %426, %430 : vector<8x16xf32>
    %432 = vector.extract_strided_slice %421 {offsets = [2, 0], sizes = [8, 8], strides = [1, 1]} : vector<10x8xbf16> to vector<8x8xbf16>
    %c8_339 = arith.constant 8 : index
    %c0_340 = arith.constant 0 : index
    %c0_341 = arith.constant 0 : index
    %433 = vector.load %arg3[%c8_339, %c0_340, %c0_341] : memref<9x8x16xbf16, #tpu.memory_space<vmem>>, vector<1x8x16xbf16>
    %434 = vector.shape_cast %433 : vector<1x8x16xbf16> to vector<8x16xbf16>
    %cst_342 = arith.constant dense<0.000000e+00> : vector<8x16xf32>
    %435 = tpu.matmul %432, %434, %cst_342 {dimension_numbers = #tpu.dot_dimension_numbers<[1], [0], [0], [1], [0, 0, 1, 1], [], []>} : vector<8x8xbf16>, vector<8x16xbf16>, vector<8x16xf32> -> vector<8x16xf32>
    %436 = arith.addf %431, %435 : vector<8x16xf32>
    %437 = vector.broadcast %1 : vector<1x16xf32> to vector<8x16xf32>
    %438 = arith.addf %436, %437 : vector<8x16xf32>
    %cst_343 = arith.constant 0.000000e+00 : f32
    %439 = vector.broadcast %cst_343 : f32 to vector<8x16xf32>
    %440 = arith.cmpf oge, %438, %439 : vector<8x16xf32>
    %441 = vector.broadcast %2 : vector<1x16xf32> to vector<8x16xf32>
    %442 = arith.mulf %441, %438 : vector<8x16xf32>
    %443 = arith.select %440, %438, %442 : vector<8x16xi1>, vector<8x16xf32>
    %c0_344 = arith.constant 0 : index
    %c5_345 = arith.constant 5 : index
    %c0_346 = arith.constant 0 : index
    %c0_347 = arith.constant 0 : index
    %444 = vector.load %arg6[%c0_344, %c5_345, %c0_346, %c0_347] : memref<1x6x8x16xf32, #tpu.memory_space<vmem>>, vector<1x1x8x16xf32>
    %445 = vector.shape_cast %444 : vector<1x1x8x16xf32> to vector<8x16xf32>
    %446 = vector.shape_cast %443 : vector<8x16xf32> to vector<1x1x8x16xf32>
    tpu.vector_store %arg6[%c0_344, %c5_345, %c0_346, %c0_347], %446 {strides = array<i32>} : memref<1x6x8x16xf32, #tpu.memory_space<vmem>>, vector<1x1x8x16xf32>,
    return
  }
  func.func @transform_0(%arg0: i32, %arg1: i32) -> (i32, i32, i32, i32) {
    %c0_i32 = arith.constant 0 : i32
    %c0_i32_0 = arith.constant 0 : i32
    %c0_i32_1 = arith.constant 0 : i32
    %c0_i32_2 = arith.constant 0 : i32
    return %arg0, %c0_i32, %c0_i32_0, %c0_i32_1 : i32, i32, i32, i32
  }
  func.func @transform_1(%arg0: i32, %arg1: i32) -> (i32, i32, i32) {
    %c0_i32 = arith.constant 0 : i32
    %c0_i32_0 = arith.constant 0 : i32
    %c0_i32_1 = arith.constant 0 : i32
    %c0_i32_2 = arith.constant 0 : i32
    return %c0_i32, %c0_i32_0, %c0_i32_1 : i32, i32, i32
  }
  func.func @transform_2(%arg0: i32, %arg1: i32) -> (i32, i32) {
    %c0_i32 = arith.constant 0 : i32
    %c0_i32_0 = arith.constant 0 : i32
    %c0_i32_1 = arith.constant 0 : i32
    return %c0_i32, %c0_i32_0 : i32, i32
  }
  func.func @transform_3(%arg0: i32, %arg1: i32) -> (i32, i32) {
    %c0_i32 = arith.constant 0 : i32
    %c0_i32_0 = arith.constant 0 : i32
    %c0_i32_1 = arith.constant 0 : i32
    return %c0_i32, %c0_i32_0 : i32, i32
  }
  func.func @transform_4(%arg0: i32, %arg1: i32) -> (i32, i32, i32, i32) {
    %c0_i32 = arith.constant 0 : i32
    %c0_i32_0 = arith.constant 0 : i32
    %c0_i32_1 = arith.constant 0 : i32
    return %arg0, %arg1, %c0_i32, %c0_i32_0 : i32, i32, i32, i32
  }
}

</mosaic_0001>

<llo_original>
// kernel: tpu_custom_call.1
$region0: #{tpu_custom_call.1}
  #allocation0 [shape = 'u32[]', space=smem, size = 0x4, offset = 0x4, fixed_abs, tag = 'smem constant byte address 0x4 - core index']
  #allocation1 [shape = 'u32[144,128]{1,0:T(1,128)}', space=vmem, size = 0x12000, scoped, tag = 'internal scratch']
  %s0 = inlined_call_operand.vmem [shape: bf16[1,14,10,8], index: 0, kind: input, shape index: {}]
  %s1 = inlined_call_operand.vmem [shape: bf16[9,8,16], index: 1, kind: input, shape index: {}]
  %s2 = inlined_call_operand.vmem [shape: f32[1,16], index: 2, kind: input, shape index: {}]
  %s3 = inlined_call_operand.vmem [shape: f32[1,16], index: 3, kind: input, shape index: {}]
  %s4 = inlined_call_operand.hbm [shape: f32[1,6,8,16], index: 4, kind: output, shape index: {}]
  %s5 = sld [smem:[#allocation0]]
  $region26: #{tpu_custom_call.1} parent=0
    _
  %s7 = ssub.s32 1, %s5
  %s8 = scalar_select 0, %s7, %s5
  $region1: #{tpu_custom_call.1} parent=0
    #allocation2 [shape = 'u8[24576]{0}', space=vmem, size = 0x6000, scoped, tag = 'output window, operand 0, single buffered']
    #allocation3 [shape = 's32[1]{0}', space=sflag, size = 0x4, scoped, tag = 'scoped memory for tpu_custom_call.1']
    %9 = vsyncpa [#allocation3], 0
    // Predicated region
    $region2: #{tpu_custom_call.1} parent=1 // pred_check
      _
    $region3: #{tpu_custom_call.1} parent=1 // pred_check_branch
      %11 = sbr.rel (0) target = $region5
    $region4: #{tpu_custom_call.1} parent=1 // pred_region
      _
    $region5: #{tpu_custom_call.1} parent=1 // pred_fallthru
      _
    // Predicated region
    $region6: #{tpu_custom_call.1} parent=1 // pred_check
      _
    $region7: #{tpu_custom_call.1} parent=1 // pred_check_branch
      %13 = sbr.rel (0) target = $region9
    $region8: #{tpu_custom_call.1} parent=1 // pred_region
      _
    $region9: #{tpu_custom_call.1} parent=1 // pred_fallthru
      _
    // Predicated region
    $region10: #{tpu_custom_call.1} parent=1 // pred_check
      _
    $region11: #{tpu_custom_call.1} parent=1 // pred_check_branch
      %15 = sbr.rel (0) target = $region13
    $region12: #{tpu_custom_call.1} parent=1 // pred_region
      _
    $region13: #{tpu_custom_call.1} parent=1 // pred_fallthru
      _
    // Predicated region
    $region14: #{tpu_custom_call.1} parent=1 // pred_check
      _
    $region15: #{tpu_custom_call.1} parent=1 // pred_check_branch
      %17 = sbr.rel (0) target = $region17
    $region16: #{tpu_custom_call.1} parent=1 // pred_region
      _
    $region17: #{tpu_custom_call.1} parent=1 // pred_fallthru
      _
    %s19 = smul.u32 0, 6
    %v20 = vld [vmem:[%s2] sm:$0x1]
    %v21 = vld [vmem:[%s3] sm:$0x1]
    %s22 = smul.u32 0, 12
    %s23 = smul.u32 %s22, 2
    %s24 = smul.addr %s23, 4
    %s25 = scalar_lea.vmem %s0, %s24
    %v26 = vld [vmem:[%s25] sm:$0xf]
    %v27 = vld [vmem:[%s25 + $0x4] sm:$0x1]
    %v28 = vld [vmem:[%s1] sm:$0xf]
    %s29 = scalar_lea.vmem %s1, 4
    %v30 = vld [vmem:[%s29] sm:$0xf]
    %v33 = vunpack.c.l.b16 %v26
    %v34 = vunpack.c.l.b16 %v27
    %v35 = vpack.c.b16 %v34, %v33
    %v37 = vshrl.u32 %v35, 16
    %v39 = vshll.u32 %v35, 16
    %v41 = vrot.slane %v39, 1
    %v42 = vor.u32 %v37, %v41
    %vm43 = vcmask 64512
    %v45 = vsel %vm43, %v42, 0
    %vm47 = vcmask 1043456
    %v49 = vsel %vm47, %v30, 0
    %51 = vmatprep.subr.bf16.mxu0 0
    %52 = vmatpush1.bf16.msra.mxu0 %v49
    %53 = vmatprep.subr.bf16.mxu0 0
    %54 = vmatpush1.bf16.msra.mxu0 0
    %55 = vmatprep.subr.bf16.mxu0 0
    %56 = vmatpush1.bf16.msra.mxu0 0
    %57 = vmatprep.subr.bf16.mxu0 0
    %58 = vmatpush1.bf16.msra.mxu0 0
    %59 = vmatprep.subr.bf16.mxu0 0
    %60 = vmatpush1.bf16.msra.mxu0 0
    %61 = vmatprep.subr.bf16.mxu0 0
    %62 = vmatpush1.bf16.msra.mxu0 0
    %63 = vmatprep.subr.bf16.mxu0 0
    %64 = vmatpush1.bf16.msra.mxu0 0
    %65 = vmatprep.subr.bf16.mxu0 0
    %66 = vmatpush1.bf16.msra.mxu0 0
    %67 = vmatprep.subr.bf16.mxu0 0
    %68 = vmatpush1.bf16.msra.mxu0 0
    %69 = vmatprep.subr.bf16.mxu0 0
    %70 = vmatpush1.bf16.msra.mxu0 0
    %71 = vmatprep.subr.bf16.mxu0 0
    %72 = vmatpush1.bf16.msra.mxu0 0
    %73 = vmatprep.subr.bf16.mxu0 0
    %74 = vmatpush1.bf16.msra.mxu0 0
    %75 = vmatprep.subr.bf16.mxu0 0
    %76 = vmatpush1.bf16.msra.mxu0 0
    %77 = vmatprep.subr.bf16.mxu0 0
    %78 = vmatpush1.bf16.msra.mxu0 0
    %79 = vmatprep.subr.bf16.mxu0 0
    %80 = vmatpush1.bf16.msra.mxu0 0
    %81 = vmatprep.subr.bf16.mxu0 0
    %82 = vmatpush1.bf16.msra.mxu0 0
    %83 = vmatprep.mubr.bf16.mxu0 0
    %84 = vmatmul.mubr.bf16.gmra.mrb[0].mxu0 %v45
    %v85 = vpop.f32.mrb[0].mxu0
    %v86 = vadd.f32 0.0, %v85
    %v87 = vpop.f32.mrb[0].mxu0
    %v88 = vpop.f32.mrb[0].mxu0
    %v89 = vpop.f32.mrb[0].mxu0
    %90 = vdwg.mxu0
    %v92 = vsel %vm43, %v26, 0
    %v95 = vsel %vm47, %v28, 0
    %97 = vmatprep.subr.bf16.mxu0 0
    %98 = vmatpush1.bf16.msra.mxu0 %v95
    %99 = vmatprep.subr.bf16.mxu0 0
    %100 = vmatpush1.bf16.msra.mxu0 0
    %101 = vmatprep.subr.bf16.mxu0 0
    %102 = vmatpush1.bf16.msra.mxu0 0
    %103 = vmatprep.subr.bf16.mxu0 0
    %104 = vmatpush1.bf16.msra.mxu0 0
    %105 = vmatprep.subr.bf16.mxu0 0
    %106 = vmatpush1.bf16.msra.mxu0 0
    %107 = vmatprep.subr.bf16.mxu0 0
    %108 = vmatpush1.bf16.msra.mxu0 0
    %109 = vmatprep.subr.bf16.mxu0 0
    %110 = vmatpush1.bf16.msra.mxu0 0
    %111 = vmatprep.subr.bf16.mxu0 0
    %112 = vmatpush1.bf16.msra.mxu0 0
    %113 = vmatprep.subr.bf16.mxu0 0
    %114 = vmatpush1.bf16.msra.mxu0 0
    %115 = vmatprep.subr.bf16.mxu0 0
    %116 = vmatpush1.bf16.msra.mxu0 0
    %117 = vmatprep.subr.bf16.mxu0 0
    %118 = vmatpush1.bf16.msra.mxu0 0
    %119 = vmatprep.subr.bf16.mxu0 0
    %120 = vmatpush1.bf16.msra.mxu0 0
    %121 = vmatprep.subr.bf16.mxu0 0
    %122 = vmatpush1.bf16.msra.mxu0 0
    %123 = vmatprep.subr.bf16.mxu0 0
    %124 = vmatpush1.bf16.msra.mxu0 0
    %125 = vmatprep.subr.bf16.mxu0 0
    %126 = vmatpush1.bf16.msra.mxu0 0
    %127 = vmatprep.subr.bf16.mxu0 0
    %128 = vmatpush1.bf16.msra.mxu0 0
    %129 = vmatprep.mubr.bf16.mxu0 0
    %130 = vmatmul.mubr.bf16.gmra.mrb[0].mxu0 %v92
    %v131 = vpop.f32.mrb[0].mxu0
    %v132 = vadd.f32 %v86, %v131
    %v133 = vpop.f32.mrb[0].mxu0
    %v134 = vpop.f32.mrb[0].mxu0
    %v135 = vpop.f32.mrb[0].mxu0
    %136 = vdwg.mxu0
    %s137 = scalar_lea.vmem %s1, 8
    %v138 = vld [vmem:[%s137] sm:$0xf]
    %v139 = vrot.slane %v35, 1
    %v141 = vsel %vm43, %v139, 0
    %v144 = vsel %vm47, %v138, 0
    %146 = vmatprep.subr.bf16.mxu0 0
    %147 = vmatpush1.bf16.msra.mxu0 %v144
    %148 = vmatprep.subr.bf16.mxu0 0
    %149 = vmatpush1.bf16.msra.mxu0 0
    %150 = vmatprep.subr.bf16.mxu0 0
    %151 = vmatpush1.bf16.msra.mxu0 0
    %152 = vmatprep.subr.bf16.mxu0 0
    %153 = vmatpush1.bf16.msra.mxu0 0
    %154 = vmatprep.subr.bf16.mxu0 0
    %155 = vmatpush1.bf16.msra.mxu0 0
    %156 = vmatprep.subr.bf16.mxu0 0
    %157 = vmatpush1.bf16.msra.mxu0 0
    %158 = vmatprep.subr.bf16.mxu0 0
    %159 = vmatpush1.bf16.msra.mxu0 0
    %160 = vmatprep.subr.bf16.mxu0 0
    %161 = vmatpush1.bf16.msra.mxu0 0
    %162 = vmatprep.subr.bf16.mxu0 0
    %163 = vmatpush1.bf16.msra.mxu0 0
    %164 = vmatprep.subr.bf16.mxu0 0
    %165 = vmatpush1.bf16.msra.mxu0 0
    %166 = vmatprep.subr.bf16.mxu0 0
    %167 = vmatpush1.bf16.msra.mxu0 0
    %168 = vmatprep.subr.bf16.mxu0 0
    %169 = vmatpush1.bf16.msra.mxu0 0
    %170 = vmatprep.subr.bf16.mxu0 0
    %171 = vmatpush1.bf16.msra.mxu0 0
    %172 = vmatprep.subr.bf16.mxu0 0
    %173 = vmatpush1.bf16.msra.mxu0 0
    %174 = vmatprep.subr.bf16.mxu0 0
    %175 = vmatpush1.bf16.msra.mxu0 0
    %176 = vmatprep.subr.bf16.mxu0 0
    %177 = vmatpush1.bf16.msra.mxu0 0
    %178 = vmatprep.mubr.bf16.mxu0 0
    %179 = vmatmul.mubr.bf16.gmra.mrb[0].mxu0 %v141
    %v180 = vpop.f32.mrb[0].mxu0
    %v181 = vadd.f32 0.0, %v180
    %v182 = vpop.f32.mrb[0].mxu0
    %v183 = vpop.f32.mrb[0].mxu0
    %v184 = vpop.f32.mrb[0].mxu0
    %185 = vdwg.mxu0
    %v186 = vadd.f32 %v132, %v181
    %s187 = sadd.s32 %s22, 1
    %s188 = smul.u32 %s187, 2
    %s189 = smul.addr %s188, 4
    %s190 = scalar_lea.vmem %s0, %s189
    %v191 = vld [vmem:[%s190] sm:$0xf]
    %v192 = vld [vmem:[%s190 + $0x4] sm:$0x1]
    %s193 = scalar_lea.vmem %s1, 12
    %v194 = vld [vmem:[%s193] sm:$0xf]
    %v196 = vsel %vm43, %v191, 0
    %v199 = vsel %vm47, %v194, 0
    %201 = vmatprep.subr.bf16.mxu0 0
    %202 = vmatpush1.bf16.msra.mxu0 %v199
    %203 = vmatprep.subr.bf16.mxu0 0
    %204 = vmatpush1.bf16.msra.mxu0 0
    %205 = vmatprep.subr.bf16.mxu0 0
    %206 = vmatpush1.bf16.msra.mxu0 0
    %207 = vmatprep.subr.bf16.mxu0 0
    %208 = vmatpush1.bf16.msra.mxu0 0
    %209 = vmatprep.subr.bf16.mxu0 0
    %210 = vmatpush1.bf16.msra.mxu0 0
    %211 = vmatprep.subr.bf16.mxu0 0
    %212 = vmatpush1.bf16.msra.mxu0 0
    %213 = vmatprep.subr.bf16.mxu0 0
    %214 = vmatpush1.bf16.msra.mxu0 0
    %215 = vmatprep.subr.bf16.mxu0 0
    %216 = vmatpush1.bf16.msra.mxu0 0
    %217 = vmatprep.subr.bf16.mxu0 0
    %218 = vmatpush1.bf16.msra.mxu0 0
    %219 = vmatprep.subr.bf16.mxu0 0
    %220 = vmatpush1.bf16.msra.mxu0 0
    %221 = vmatprep.subr.bf16.mxu0 0
    %222 = vmatpush1.bf16.msra.mxu0 0
    %223 = vmatprep.subr.bf16.mxu0 0
    %224 = vmatpush1.bf16.msra.mxu0 0
    %225 = vmatprep.subr.bf16.mxu0 0
    %226 = vmatpush1.bf16.msra.mxu0 0
    %227 = vmatprep.subr.bf16.mxu0 0
    %228 = vmatpush1.bf16.msra.mxu0 0
    %229 = vmatprep.subr.bf16.mxu0 0
    %230 = vmatpush1.bf16.msra.mxu0 0
    %231 = vmatprep.subr.bf16.mxu0 0
    %232 = vmatpush1.bf16.msra.mxu0 0
    %233 = vmatprep.mubr.bf16.mxu0 0
    %234 = vmatmul.mubr.bf16.gmra.mrb[0].mxu0 %v196
    %v235 = vpop.f32.mrb[0].mxu0
    %v236 = vadd.f32 0.0, %v235
    %v237 = vpop.f32.mrb[0].mxu0
    %v238 = vpop.f32.mrb[0].mxu0
    %v239 = vpop.f32.mrb[0].mxu0
    %240 = vdwg.mxu0
    %v241 = vadd.f32 %v186, %v236
    %s242 = scalar_lea.vmem %s1, 16
    %v243 = vld [vmem:[%s242] sm:$0xf]
    %v246 = vunpack.c.l.b16 %v191
    %v247 = vunpack.c.l.b16 %v192
    %v248 = vpack.c.b16 %v247, %v246
    %v250 = vshrl.u32 %v248, 16
    %v252 = vshll.u32 %v248, 16
    %v254 = vrot.slane %v252, 1
    %v255 = vor.u32 %v250, %v254
    %v257 = vsel %vm43, %v255, 0
    %v260 = vsel %vm47, %v243, 0
    %262 = vmatprep.subr.bf16.mxu0 0
    %263 = vmatpush1.bf16.msra.mxu0 %v260
    %264 = vmatprep.subr.bf16.mxu0 0
    %265 = vmatpush1.bf16.msra.mxu0 0
    %266 = vmatprep.subr.bf16.mxu0 0
    %267 = vmatpush1.bf16.msra.mxu0 0
    %268 = vmatprep.subr.bf16.mxu0 0
    %269 = vmatpush1.bf16.msra.mxu0 0
    %270 = vmatprep.subr.bf16.mxu0 0
    %271 = vmatpush1.bf16.msra.mxu0 0
    %272 = vmatprep.subr.bf16.mxu0 0
    %273 = vmatpush1.bf16.msra.mxu0 0
    %274 = vmatprep.subr.bf16.mxu0 0
    %275 = vmatpush1.bf16.msra.mxu0 0
    %276 = vmatprep.subr.bf16.mxu0 0
    %277 = vmatpush1.bf16.msra.mxu0 0
    %278 = vmatprep.subr.bf16.mxu0 0
    %279 = vmatpush1.bf16.msra.mxu0 0
    %280 = vmatprep.subr.bf16.mxu0 0
    %281 = vmatpush1.bf16.msra.mxu0 0
    %282 = vmatprep.subr.bf16.mxu0 0
    %283 = vmatpush1.bf16.msra.mxu0 0
    %284 = vmatprep.subr.bf16.mxu0 0
    %285 = vmatpush1.bf16.msra.mxu0 0
    %286 = vmatprep.subr.bf16.mxu0 0
    %287 = vmatpush1.bf16.msra.mxu0 0
    %288 = vmatprep.subr.bf16.mxu0 0
    %289 = vmatpush1.bf16.msra.mxu0 0
    %290 = vmatprep.subr.bf16.mxu0 0
    %291 = vmatpush1.bf16.msra.mxu0 0
    %292 = vmatprep.subr.bf16.mxu0 0
    %293 = vmatpush1.bf16.msra.mxu0 0
    %294 = vmatprep.mubr.bf16.mxu0 0
    %295 = vmatmul.mubr.bf16.gmra.mrb[0].mxu0 %v257
    %v296 = vpop.f32.mrb[0].mxu0
    %v297 = vadd.f32 0.0, %v296
    %v298 = vpop.f32.mrb[0].mxu0
    %v299 = vpop.f32.mrb[0].mxu0
    %v300 = vpop.f32.mrb[0].mxu0
    %301 = vdwg.mxu0
    %v302 = vadd.f32 %v241, %v297
    %s303 = scalar_lea.vmem %s1, 20
    %v304 = vld [vmem:[%s303] sm:$0xf]
    %v305 = vrot.slane %v248, 1
    %v307 = vsel %vm43, %v305, 0
    %v310 = vsel %vm47, %v304, 0
    %312 = vmatprep.subr.bf16.mxu0 0
    %313 = vmatpush1.bf16.msra.mxu0 %v310
    %314 = vmatprep.subr.bf16.mxu0 0
    %315 = vmatpush1.bf16.msra.mxu0 0
    %316 = vmatprep.subr.bf16.mxu0 0
    %317 = vmatpush1.bf16.msra.mxu0 0
    %318 = vmatprep.subr.bf16.mxu0 0
    %319 = vmatpush1.bf16.msra.mxu0 0
    %320 = vmatprep.subr.bf16.mxu0 0
    %321 = vmatpush1.bf16.msra.mxu0 0
    %322 = vmatprep.subr.bf16.mxu0 0
    %323 = vmatpush1.bf16.msra.mxu0 0
    %324 = vmatprep.subr.bf16.mxu0 0
    %325 = vmatpush1.bf16.msra.mxu0 0
    %326 = vmatprep.subr.bf16.mxu0 0
    %327 = vmatpush1.bf16.msra.mxu0 0
    %328 = vmatprep.subr.bf16.mxu0 0
    %329 = vmatpush1.bf16.msra.mxu0 0
    %330 = vmatprep.subr.bf16.mxu0 0
    %331 = vmatpush1.bf16.msra.mxu0 0
    %332 = vmatprep.subr.bf16.mxu0 0
    %333 = vmatpush1.bf16.msra.mxu0 0
    %334 = vmatprep.subr.bf16.mxu0 0
    %335 = vmatpush1.bf16.msra.mxu0 0
    %336 = vmatprep.subr.bf16.mxu0 0
    %337 = vmatpush1.bf16.msra.mxu0 0
    %338 = vmatprep.subr.bf16.mxu0 0
    %339 = vmatpush1.bf16.msra.mxu0 0
    %340 = vmatprep.subr.bf16.mxu0 0
    %341 = vmatpush1.bf16.msra.mxu0 0
    %342 = vmatprep.subr.bf16.mxu0 0
    %343 = vmatpush1.bf16.msra.mxu0 0
    %344 = vmatprep.mubr.bf16.mxu0 0
    %345 = vmatmul.mubr.bf16.gmra.mrb[0].mxu0 %v307
    %v346 = vpop.f32.mrb[0].mxu0
    %v347 = vadd.f32 0.0, %v346
    %v348 = vpop.f32.mrb[0].mxu0
    %v349 = vpop.f32.mrb[0].mxu0
    %v350 = vpop.f32.mrb[0].mxu0
    %351 = vdwg.mxu0
    %v352 = vadd.f32 %v302, %v347
    %s353 = sadd.s32 %s22, 2
    %s354 = smul.u32 %s353, 2
    %s355 = smul.addr %s354, 4
    %s356 = scalar_lea.vmem %s0, %s355
    %v357 = vld [vmem:[%s356] sm:$0xf]
    %v358 = vld [vmem:[%s356 + $0x4] sm:$0x1]
    %s359 = scalar_lea.vmem %s1, 24
    %v360 = vld [vmem:[%s359] sm:$0xf]
    %v362 = vsel %vm43, %v357, 0
    %v365 = vsel %vm47, %v360, 0
    %367 = vmatprep.subr.bf16.mxu0 0
    %368 = vmatpush1.bf16.msra.mxu0 %v365
    %369 = vmatprep.subr.bf16.mxu0 0
    %370 = vmatpush1.bf16.msra.mxu0 0
    %371 = vmatprep.subr.bf16.mxu0 0
    %372 = vmatpush1.bf16.msra.mxu0 0
    %373 = vmatprep.subr.bf16.mxu0 0
    %374 = vmatpush1.bf16.msra.mxu0 0
    %375 = vmatprep.subr.bf16.mxu0 0
    %376 = vmatpush1.bf16.msra.mxu0 0
    %377 = vmatprep.subr.bf16.mxu0 0
    %378 = vmatpush1.bf16.msra.mxu0 0
    %379 = vmatprep.subr.bf16.mxu0 0
    %380 = vmatpush1.bf16.msra.mxu0 0
    %381 = vmatprep.subr.bf16.mxu0 0
    %382 = vmatpush1.bf16.msra.mxu0 0
    %383 = vmatprep.subr.bf16.mxu0 0
    %384 = vmatpush1.bf16.msra.mxu0 0
    %385 = vmatprep.subr.bf16.mxu0 0
    %386 = vmatpush1.bf16.msra.mxu0 0
    %387 = vmatprep.subr.bf16.mxu0 0
    %388 = vmatpush1.bf16.msra.mxu0 0
    %389 = vmatprep.subr.bf16.mxu0 0
    %390 = vmatpush1.bf16.msra.mxu0 0
    %391 = vmatprep.subr.bf16.mxu0 0
    %392 = vmatpush1.bf16.msra.mxu0 0
    %393 = vmatprep.subr.bf16.mxu0 0
    %394 = vmatpush1.bf16.msra.mxu0 0
    %395 = vmatprep.subr.bf16.mxu0 0
    %396 = vmatpush1.bf16.msra.mxu0 0
    %397 = vmatprep.subr.bf16.mxu0 0
    %398 = vmatpush1.bf16.msra.mxu0 0
    %399 = vmatprep.mubr.bf16.mxu0 0
    %400 = vmatmul.mubr.bf16.gmra.mrb[0].mxu0 %v362
    %v401 = vpop.f32.mrb[0].mxu0
    %v402 = vadd.f32 0.0, %v401
    %v403 = vpop.f32.mrb[0].mxu0
    %v404 = vpop.f32.mrb[0].mxu0
    %v405 = vpop.f32.mrb[0].mxu0
    %406 = vdwg.mxu0
    %v407 = vadd.f32 %v352, %v402
    %s408 = scalar_lea.vmem %s1, 28
    %v409 = vld [vmem:[%s408] sm:$0xf]
    %v412 = vunpack.c.l.b16 %v357
    %v413 = vunpack.c.l.b16 %v358
    %v414 = vpack.c.b16 %v413, %v412
    %v416 = vshrl.u32 %v414, 16
    %v418 = vshll.u32 %v414, 16
    %v420 = vrot.slane %v418, 1
    %v421 = vor.u32 %v416, %v420
    %v423 = vsel %vm43, %v421, 0
    %v426 = vsel %vm47, %v409, 0
    %428 = vmatprep.subr.bf16.mxu0 0
    %429 = vmatpush1.bf16.msra.mxu0 %v426
    %430 = vmatprep.subr.bf16.mxu0 0
    %431 = vmatpush1.bf16.msra.mxu0 0
    %432 = vmatprep.subr.bf16.mxu0 0
    %433 = vmatpush1.bf16.msra.mxu0 0
    %434 = vmatprep.subr.bf16.mxu0 0
    %435 = vmatpush1.bf16.msra.mxu0 0
    %436 = vmatprep.subr.bf16.mxu0 0
    %437 = vmatpush1.bf16.msra.mxu0 0
    %438 = vmatprep.subr.bf16.mxu0 0
    %439 = vmatpush1.bf16.msra.mxu0 0
    %440 = vmatprep.subr.bf16.mxu0 0
    %441 = vmatpush1.bf16.msra.mxu0 0
    %442 = vmatprep.subr.bf16.mxu0 0
    %443 = vmatpush1.bf16.msra.mxu0 0
    %444 = vmatprep.subr.bf16.mxu0 0
    %445 = vmatpush1.bf16.msra.mxu0 0
    %446 = vmatprep.subr.bf16.mxu0 0
    %447 = vmatpush1.bf16.msra.mxu0 0
    %448 = vmatprep.subr.bf16.mxu0 0
    %449 = vmatpush1.bf16.msra.mxu0 0
    %450 = vmatprep.subr.bf16.mxu0 0
    %451 = vmatpush1.bf16.msra.mxu0 0
    %452 = vmatprep.subr.bf16.mxu0 0
    %453 = vmatpush1.bf16.msra.mxu0 0
    %454 = vmatprep.subr.bf16.mxu0 0
    %455 = vmatpush1.bf16.msra.mxu0 0
    %456 = vmatprep.subr.bf16.mxu0 0
    %457 = vmatpush1.bf16.msra.mxu0 0
    %458 = vmatprep.subr.bf16.mxu0 0
    %459 = vmatpush1.bf16.msra.mxu0 0
    %460 = vmatprep.mubr.bf16.mxu0 0
    %461 = vmatmul.mubr.bf16.gmra.mrb[0].mxu0 %v423
    %v462 = vpop.f32.mrb[0].mxu0
    %v463 = vadd.f32 0.0, %v462
    %v464 = vpop.f32.mrb[0].mxu0
    %v465 = vpop.f32.mrb[0].mxu0
    %v466 = vpop.f32.mrb[0].mxu0
    %467 = vdwg.mxu0
    %v468 = vadd.f32 %v407, %v463
    %s469 = scalar_lea.vmem %s1, 32
    %v470 = vld [vmem:[%s469] sm:$0xf]
    %v471 = vrot.slane %v414, 1
    %v473 = vsel %vm43, %v471, 0
    %v476 = vsel %vm47, %v470, 0
    %478 = vmatprep.subr.bf16.mxu0 0
    %479 = vmatpush1.bf16.msra.mxu0 %v476
    %480 = vmatprep.subr.bf16.mxu0 0
    %481 = vmatpush1.bf16.msra.mxu0 0
    %482 = vmatprep.subr.bf16.mxu0 0
    %483 = vmatpush1.bf16.msra.mxu0 0
    %484 = vmatprep.subr.bf16.mxu0 0
    %485 = vmatpush1.bf16.msra.mxu0 0
    %486 = vmatprep.subr.bf16.mxu0 0
    %487 = vmatpush1.bf16.msra.mxu0 0
    %488 = vmatprep.subr.bf16.mxu0 0
    %489 = vmatpush1.bf16.msra.mxu0 0
    %490 = vmatprep.subr.bf16.mxu0 0
    %491 = vmatpush1.bf16.msra.mxu0 0
    %492 = vmatprep.subr.bf16.mxu0 0
    %493 = vmatpush1.bf16.msra.mxu0 0
    %494 = vmatprep.subr.bf16.mxu0 0
    %495 = vmatpush1.bf16.msra.mxu0 0
    %496 = vmatprep.subr.bf16.mxu0 0
    %497 = vmatpush1.bf16.msra.mxu0 0
    %498 = vmatprep.subr.bf16.mxu0 0
    %499 = vmatpush1.bf16.msra.mxu0 0
    %500 = vmatprep.subr.bf16.mxu0 0
    %501 = vmatpush1.bf16.msra.mxu0 0
    %502 = vmatprep.subr.bf16.mxu0 0
    %503 = vmatpush1.bf16.msra.mxu0 0
    %504 = vmatprep.subr.bf16.mxu0 0
    %505 = vmatpush1.bf16.msra.mxu0 0
    %506 = vmatprep.subr.bf16.mxu0 0
    %507 = vmatpush1.bf16.msra.mxu0 0
    %508 = vmatprep.subr.bf16.mxu0 0
    %509 = vmatpush1.bf16.msra.mxu0 0
    %510 = vmatprep.mubr.bf16.mxu0 0
    %511 = vmatmul.mubr.bf16.gmra.mrb[0].mxu0 %v473
    %v512 = vpop.f32.mrb[0].mxu0
    %v513 = vadd.f32 0.0, %v512
    %v514 = vpop.f32.mrb[0].mxu0
    %v515 = vpop.f32.mrb[0].mxu0
    %v516 = vpop.f32.mrb[0].mxu0
    %517 = vdwg.mxu0
    %v518 = vadd.f32 %v468, %v513
    %v520 = vlaneseq
    %v521 = vshrl.u32 %v520, 7
    %v522 = vsub.s32 0, %v521
    %v523 = vrot.slane %v20, %v522
    %v525 = vadd.f32 %v518, %v523
    %vm526 = vcmp.ge.f32.partialorder %v525, 0.0
    %v528 = vlaneseq
    %v529 = vshrl.u32 %v528, 7
    %v530 = vsub.s32 0, %v529
    %v531 = vrot.slane %v21, %v530
    %v533 = vmul.f32 %v531, %v525
    %v534 = vsel %vm526, %v525, %v533
    %vm535 = vcmask 130048
    %536 = vst.msk [vmem:[#allocation2] sm:$0xff] %vm535, %v534
    %s537 = sadd.s32 %s19, 1
    %s538 = smul.u32 %s537, 2
    %s539 = smul.u32 %s538, 2
    %s540 = smul.addr %s539, 4
    %s541 = scalar_lea.vmem %s0, %s540
    %v542 = vld [vmem:[%s541] sm:$0xf]
    %v543 = vld [vmem:[%s541 + $0x4] sm:$0x1]
    %v544 = vld [vmem:[%s1] sm:$0xf]
    %v545 = vld [vmem:[%s29] sm:$0xf]
    %v548 = vunpack.c.l.b16 %v542
    %v549 = vunpack.c.l.b16 %v543
    %v550 = vpack.c.b16 %v549, %v548
    %v552 = vshrl.u32 %v550, 16
    %v554 = vshll.u32 %v550, 16
    %v556 = vrot.slane %v554, 1
    %v557 = vor.u32 %v552, %v556
    %v559 = vsel %vm43, %v557, 0
    %v562 = vsel %vm47, %v545, 0
    %564 = vmatprep.subr.bf16.mxu0 0
    %565 = vmatpush1.bf16.msra.mxu0 %v562
    %566 = vmatprep.subr.bf16.mxu0 0
    %567 = vmatpush1.bf16.msra.mxu0 0
    %568 = vmatprep.subr.bf16.mxu0 0
    %569 = vmatpush1.bf16.msra.mxu0 0
    %570 = vmatprep.subr.bf16.mxu0 0
    %571 = vmatpush1.bf16.msra.mxu0 0
    %572 = vmatprep.subr.bf16.mxu0 0
    %573 = vmatpush1.bf16.msra.mxu0 0
    %574 = vmatprep.subr.bf16.mxu0 0
    %575 = vmatpush1.bf16.msra.mxu0 0
    %576 = vmatprep.subr.bf16.mxu0 0
    %577 = vmatpush1.bf16.msra.mxu0 0
    %578 = vmatprep.subr.bf16.mxu0 0
    %579 = vmatpush1.bf16.msra.mxu0 0
    %580 = vmatprep.subr.bf16.mxu0 0
    %581 = vmatpush1.bf16.msra.mxu0 0
    %582 = vmatprep.subr.bf16.mxu0 0
    %583 = vmatpush1.bf16.msra.mxu0 0
    %584 = vmatprep.subr.bf16.mxu0 0
    %585 = vmatpush1.bf16.msra.mxu0 0
    %586 = vmatprep.subr.bf16.mxu0 0
    %587 = vmatpush1.bf16.msra.mxu0 0
    %588 = vmatprep.subr.bf16.mxu0 0
    %589 = vmatpush1.bf16.msra.mxu0 0
    %590 = vmatprep.subr.bf16.mxu0 0
    %591 = vmatpush1.bf16.msra.mxu0 0
    %592 = vmatprep.subr.bf16.mxu0 0
    %593 = vmatpush1.bf16.msra.mxu0 0
    %594 = vmatprep.subr.bf16.mxu0 0
    %595 = vmatpush1.bf16.msra.mxu0 0
    %596 = vmatprep.mubr.bf16.mxu0 0
    %597 = vmatmul.mubr.bf16.gmra.mrb[0].mxu0 %v559
    %v598 = vpop.f32.mrb[0].mxu0
    %v599 = vadd.f32 0.0, %v598
    %v600 = vpop.f32.mrb[0].mxu0
    %v601 = vpop.f32.mrb[0].mxu0
    %v602 = vpop.f32.mrb[0].mxu0
    %603 = vdwg.mxu0
    %v605 = vsel %vm43, %v542, 0
    %v608 = vsel %vm47, %v544, 0
    %610 = vmatprep.subr.bf16.mxu0 0
    %611 = vmatpush1.bf16.msra.mxu0 %v608
    %612 = vmatprep.subr.bf16.mxu0 0
    %613 = vmatpush1.bf16.msra.mxu0 0
    %614 = vmatprep.subr.bf16.mxu0 0
    %615 = vmatpush1.bf16.msra.mxu0 0
    %616 = vmatprep.subr.bf16.mxu0 0
    %617 = vmatpush1.bf16.msra.mxu0 0
    %618 = vmatprep.subr.bf16.mxu0 0
    %619 = vmatpush1.bf16.msra.mxu0 0
    %620 = vmatprep.subr.bf16.mxu0 0
    %621 = vmatpush1.bf16.msra.mxu0 0
    %622 = vmatprep.subr.bf16.mxu0 0
    %623 = vmatpush1.bf16.msra.mxu0 0
    %624 = vmatprep.subr.bf16.mxu0 0
    %625 = vmatpush1.bf16.msra.mxu0 0
    %626 = vmatprep.subr.bf16.mxu0 0
    %627 = vmatpush1.bf16.msra.mxu0 0
    %628 = vmatprep.subr.bf16.mxu0 0
    %629 = vmatpush1.bf16.msra.mxu0 0
    %630 = vmatprep.subr.bf16.mxu0 0
    %631 = vmatpush1.bf16.msra.mxu0 0
    %632 = vmatprep.subr.bf16.mxu0 0
    %633 = vmatpush1.bf16.msra.mxu0 0
    %634 = vmatprep.subr.bf16.mxu0 0
    %635 = vmatpush1.bf16.msra.mxu0 0
    %636 = vmatprep.subr.bf16.mxu0 0
    %637 = vmatpush1.bf16.msra.mxu0 0
    %638 = vmatprep.subr.bf16.mxu0 0
    %639 = vmatpush1.bf16.msra.mxu0 0
    %640 = vmatprep.subr.bf16.mxu0 0
    %641 = vmatpush1.bf16.msra.mxu0 0
    %642 = vmatprep.mubr.bf16.mxu0 0
    %643 = vmatmul.mubr.bf16.gmra.mrb[0].mxu0 %v605
    %v644 = vpop.f32.mrb[0].mxu0
    %v645 = vadd.f32 %v599, %v644
    %v646 = vpop.f32.mrb[0].mxu0
    %v647 = vpop.f32.mrb[0].mxu0
    %v648 = vpop.f32.mrb[0].mxu0
    %649 = vdwg.mxu0
    %v650 = vld [vmem:[%s137] sm:$0xf]
    %v651 = vrot.slane %v550, 1
    %v653 = vsel %vm43, %v651, 0
    %v656 = vsel %vm47, %v650, 0
    %658 = vmatprep.subr.bf16.mxu0 0
    %659 = vmatpush1.bf16.msra.mxu0 %v656
    %660 = vmatprep.subr.bf16.mxu0 0
    %661 = vmatpush1.bf16.msra.mxu0 0
    %662 = vmatprep.subr.bf16.mxu0 0
    %663 = vmatpush1.bf16.msra.mxu0 0
    %664 = vmatprep.subr.bf16.mxu0 0
    %665 = vmatpush1.bf16.msra.mxu0 0
    %666 = vmatprep.subr.bf16.mxu0 0
    %667 = vmatpush1.bf16.msra.mxu0 0
    %668 = vmatprep.subr.bf16.mxu0 0
    %669 = vmatpush1.bf16.msra.mxu0 0
    %670 = vmatprep.subr.bf16.mxu0 0
    %671 = vmatpush1.bf16.msra.mxu0 0
    %672 = vmatprep.subr.bf16.mxu0 0
    %673 = vmatpush1.bf16.msra.mxu0 0
    %674 = vmatprep.subr.bf16.mxu0 0
    %675 = vmatpush1.bf16.msra.mxu0 0
    %676 = vmatprep.subr.bf16.mxu0 0
    %677 = vmatpush1.bf16.msra.mxu0 0
    %678 = vmatprep.subr.bf16.mxu0 0
    %679 = vmatpush1.bf16.msra.mxu0 0
    %680 = vmatprep.subr.bf16.mxu0 0
    %681 = vmatpush1.bf16.msra.mxu0 0
    %682 = vmatprep.subr.bf16.mxu0 0
    %683 = vmatpush1.bf16.msra.mxu0 0
    %684 = vmatprep.subr.bf16.mxu0 0
    %685 = vmatpush1.bf16.msra.mxu0 0
    %686 = vmatprep.subr.bf16.mxu0 0
    %687 = vmatpush1.bf16.msra.mxu0 0
    %688 = vmatprep.subr.bf16.mxu0 0
    %689 = vmatpush1.bf16.msra.mxu0 0
    %690 = vmatprep.mubr.bf16.mxu0 0
    %691 = vmatmul.mubr.bf16.gmra.mrb[0].mxu0 %v653
    %v692 = vpop.f32.mrb[0].mxu0
    %v693 = vadd.f32 0.0, %v692
    %v694 = vpop.f32.mrb[0].mxu0
    %v695 = vpop.f32.mrb[0].mxu0
    %v696 = vpop.f32.mrb[0].mxu0
    %697 = vdwg.mxu0
    %v698 = vadd.f32 %v645, %v693
    %s699 = sadd.s32 %s538, 1
    %s700 = smul.u32 %s699, 2
    %s701 = smul.addr %s700, 4
    %s702 = scalar_lea.vmem %s0, %s701
    %v703 = vld [vmem:[%s702] sm:$0xf]
    %v704 = vld [vmem:[%s702 + $0x4] sm:$0x1]
    %v705 = vld [vmem:[%s193] sm:$0xf]
    %v707 = vsel %vm43, %v703, 0
    %v710 = vsel %vm47, %v705, 0
    %712 = vmatprep.subr.bf16.mxu0 0
    %713 = vmatpush1.bf16.msra.mxu0 %v710
    %714 = vmatprep.subr.bf16.mxu0 0
    %715 = vmatpush1.bf16.msra.mxu0 0
    %716 = vmatprep.subr.bf16.mxu0 0
    %717 = vmatpush1.bf16.msra.mxu0 0
    %718 = vmatprep.subr.bf16.mxu0 0
    %719 = vmatpush1.bf16.msra.mxu0 0
    %720 = vmatprep.subr.bf16.mxu0 0
    %721 = vmatpush1.bf16.msra.mxu0 0
    %722 = vmatprep.subr.bf16.mxu0 0
    %723 = vmatpush1.bf16.msra.mxu0 0
    %724 = vmatprep.subr.bf16.mxu0 0
    %725 = vmatpush1.bf16.msra.mxu0 0
    %726 = vmatprep.subr.bf16.mxu0 0
    %727 = vmatpush1.bf16.msra.mxu0 0
    %728 = vmatprep.subr.bf16.mxu0 0
    %729 = vmatpush1.bf16.msra.mxu0 0
    %730 = vmatprep.subr.bf16.mxu0 0
    %731 = vmatpush1.bf16.msra.mxu0 0
    %732 = vmatprep.subr.bf16.mxu0 0
    %733 = vmatpush1.bf16.msra.mxu0 0
    %734 = vmatprep.subr.bf16.mxu0 0
    %735 = vmatpush1.bf16.msra.mxu0 0
    %736 = vmatprep.subr.bf16.mxu0 0
    %737 = vmatpush1.bf16.msra.mxu0 0
    %738 = vmatprep.subr.bf16.mxu0 0
    %739 = vmatpush1.bf16.msra.mxu0 0
    %740 = vmatprep.subr.bf16.mxu0 0
    %741 = vmatpush1.bf16.msra.mxu0 0
    %742 = vmatprep.subr.bf16.mxu0 0
    %743 = vmatpush1.bf16.msra.mxu0 0
    %744 = vmatprep.mubr.bf16.mxu0 0
    %745 = vmatmul.mubr.bf16.gmra.mrb[0].mxu0 %v707
    %v746 = vpop.f32.mrb[0].mxu0
    %v747 = vadd.f32 0.0, %v746
    %v748 = vpop.f32.mrb[0].mxu0
    %v749 = vpop.f32.mrb[0].mxu0
    %v750 = vpop.f32.mrb[0].mxu0
    %751 = vdwg.mxu0
    %v752 = vadd.f32 %v698, %v747
    %v753 = vld [vmem:[%s242] sm:$0xf]
    %v756 = vunpack.c.l.b16 %v703
    %v757 = vunpack.c.l.b16 %v704
    %v758 = vpack.c.b16 %v757, %v756
    %v760 = vshrl.u32 %v758, 16
    %v762 = vshll.u32 %v758, 16
    %v764 = vrot.slane %v762, 1
    %v765 = vor.u32 %v760, %v764
    %v767 = vsel %vm43, %v765, 0
    %v770 = vsel %vm47, %v753, 0
    %772 = vmatprep.subr.bf16.mxu0 0
    %773 = vmatpush1.bf16.msra.mxu0 %v770
    %774 = vmatprep.subr.bf16.mxu0 0
    %775 = vmatpush1.bf16.msra.mxu0 0
    %776 = vmatprep.subr.bf16.mxu0 0
    %777 = vmatpush1.bf16.msra.mxu0 0
    %778 = vmatprep.subr.bf16.mxu0 0
    %779 = vmatpush1.bf16.msra.mxu0 0
    %780 = vmatprep.subr.bf16.mxu0 0
    %781 = vmatpush1.bf16.msra.mxu0 0
    %782 = vmatprep.subr.bf16.mxu0 0
    %783 = vmatpush1.bf16.msra.mxu0 0
    %784 = vmatprep.subr.bf16.mxu0 0
    %785 = vmatpush1.bf16.msra.mxu0 0
    %786 = vmatprep.subr.bf16.mxu0 0
    %787 = vmatpush1.bf16.msra.mxu0 0
    %788 = vmatprep.subr.bf16.mxu0 0
    %789 = vmatpush1.bf16.msra.mxu0 0
    %790 = vmatprep.subr.bf16.mxu0 0
    %791 = vmatpush1.bf16.msra.mxu0 0
    %792 = vmatprep.subr.bf16.mxu0 0
    %793 = vmatpush1.bf16.msra.mxu0 0
    %794 = vmatprep.subr.bf16.mxu0 0
    %795 = vmatpush1.bf16.msra.mxu0 0
    %796 = vmatprep.subr.bf16.mxu0 0
    %797 = vmatpush1.bf16.msra.mxu0 0
    %798 = vmatprep.subr.bf16.mxu0 0
    %799 = vmatpush1.bf16.msra.mxu0 0
    %800 = vmatprep.subr.bf16.mxu0 0
    %801 = vmatpush1.bf16.msra.mxu0 0
    %802 = vmatprep.subr.bf16.mxu0 0
    %803 = vmatpush1.bf16.msra.mxu0 0
    %804 = vmatprep.mubr.bf16.mxu0 0
    %805 = vmatmul.mubr.bf16.gmra.mrb[0].mxu0 %v767
    %v806 = vpop.f32.mrb[0].mxu0
    %v807 = vadd.f32 0.0, %v806
    %v808 = vpop.f32.mrb[0].mxu0
    %v809 = vpop.f32.mrb[0].mxu0
    %v810 = vpop.f32.mrb[0].mxu0
    %811 = vdwg.mxu0
    %v812 = vadd.f32 %v752, %v807
    %v813 = vld [vmem:[%s303] sm:$0xf]
    %v814 = vrot.slane %v758, 1
    %v816 = vsel %vm43, %v814, 0
    %v819 = vsel %vm47, %v813, 0
    %821 = vmatprep.subr.bf16.mxu0 0
    %822 = vmatpush1.bf16.msra.mxu0 %v819
    %823 = vmatprep.subr.bf16.mxu0 0
    %824 = vmatpush1.bf16.msra.mxu0 0
    %825 = vmatprep.subr.bf16.mxu0 0
    %826 = vmatpush1.bf16.msra.mxu0 0
    %827 = vmatprep.subr.bf16.mxu0 0
    %828 = vmatpush1.bf16.msra.mxu0 0
    %829 = vmatprep.subr.bf16.mxu0 0
    %830 = vmatpush1.bf16.msra.mxu0 0
    %831 = vmatprep.subr.bf16.mxu0 0
    %832 = vmatpush1.bf16.msra.mxu0 0
    %833 = vmatprep.subr.bf16.mxu0 0
    %834 = vmatpush1.bf16.msra.mxu0 0
    %835 = vmatprep.subr.bf16.mxu0 0
    %836 = vmatpush1.bf16.msra.mxu0 0
    %837 = vmatprep.subr.bf16.mxu0 0
    %838 = vmatpush1.bf16.msra.mxu0 0
    %839 = vmatprep.subr.bf16.mxu0 0
    %840 = vmatpush1.bf16.msra.mxu0 0
    %841 = vmatprep.subr.bf16.mxu0 0
    %842 = vmatpush1.bf16.msra.mxu0 0
    %843 = vmatprep.subr.bf16.mxu0 0
    %844 = vmatpush1.bf16.msra.mxu0 0
    %845 = vmatprep.subr.bf16.mxu0 0
    %846 = vmatpush1.bf16.msra.mxu0 0
    %847 = vmatprep.subr.bf16.mxu0 0
    %848 = vmatpush1.bf16.msra.mxu0 0
    %849 = vmatprep.subr.bf16.mxu0 0
    %850 = vmatpush1.bf16.msra.mxu0 0
    %851 = vmatprep.subr.bf16.mxu0 0
    %852 = vmatpush1.bf16.msra.mxu0 0
    %853 = vmatprep.mubr.bf16.mxu0 0
    %854 = vmatmul.mubr.bf16.gmra.mrb[0].mxu0 %v816
    %v855 = vpop.f32.mrb[0].mxu0
    %v856 = vadd.f32 0.0, %v855
    %v857 = vpop.f32.mrb[0].mxu0
    %v858 = vpop.f32.mrb[0].mxu0
    %v859 = vpop.f32.mrb[0].mxu0
    %860 = vdwg.mxu0
    %v861 = vadd.f32 %v812, %v856
    %s862 = sadd.s32 %s538, 2
    %s863 = smul.u32 %s862, 2
    %s864 = smul.addr %s863, 4
    %s865 = scalar_lea.vmem %s0, %s864
    %v866 = vld [vmem:[%s865] sm:$0xf]
    %v867 = vld [vmem:[%s865 + $0x4] sm:$0x1]
    %v868 = vld [vmem:[%s359] sm:$0xf]
    %v870 = vsel %vm43, %v866, 0
    %v873 = vsel %vm47, %v868, 0
    %875 = vmatprep.subr.bf16.mxu0 0
    %876 = vmatpush1.bf16.msra.mxu0 %v873
    %877 = vmatprep.subr.bf16.mxu0 0
    %878 = vmatpush1.bf16.msra.mxu0 0
    %879 = vmatprep.subr.bf16.mxu0 0
    %880 = vmatpush1.bf16.msra.mxu0 0
    %881 = vmatprep.subr.bf16.mxu0 0
    %882 = vmatpush1.bf16.msra.mxu0 0
    %883 = vmatprep.subr.bf16.mxu0 0
    %884 = vmatpush1.bf16.msra.mxu0 0
    %885 = vmatprep.subr.bf16.mxu0 0
    %886 = vmatpush1.bf16.msra.mxu0 0
    %887 = vmatprep.subr.bf16.mxu0 0
    %888 = vmatpush1.bf16.msra.mxu0 0
    %889 = vmatprep.subr.bf16.mxu0 0
    %890 = vmatpush1.bf16.msra.mxu0 0
    %891 = vmatprep.subr.bf16.mxu0 0
    %892 = vmatpush1.bf16.msra.mxu0 0
    %893 = vmatprep.subr.bf16.mxu0 0
    %894 = vmatpush1.bf16.msra.mxu0 0
    %895 = vmatprep.subr.bf16.mxu0 0
    %896 = vmatpush1.bf16.msra.mxu0 0
    %897 = vmatprep.subr.bf16.mxu0 0
    %898 = vmatpush1.bf16.msra.mxu0 0
    %899 = vmatprep.subr.bf16.mxu0 0
    %900 = vmatpush1.bf16.msra.mxu0 0
    %901 = vmatprep.subr.bf16.mxu0 0
    %902 = vmatpush1.bf16.msra.mxu0 0
    %903 = vmatprep.subr.bf16.mxu0 0
    %904 = vmatpush1.bf16.msra.mxu0 0
    %905 = vmatprep.subr.bf16.mxu0 0
    %906 = vmatpush1.bf16.msra.mxu0 0
    %907 = vmatprep.mubr.bf16.mxu0 0
    %908 = vmatmul.mubr.bf16.gmra.mrb[0].mxu0 %v870
    %v909 = vpop.f32.mrb[0].mxu0
    %v910 = vadd.f32 0.0, %v909
    %v911 = vpop.f32.mrb[0].mxu0
    %v912 = vpop.f32.mrb[0].mxu0
    %v913 = vpop.f32.mrb[0].mxu0
    %914 = vdwg.mxu0
    %v915 = vadd.f32 %v861, %v910
    %v916 = vld [vmem:[%s408] sm:$0xf]
    %v919 = vunpack.c.l.b16 %v866
    %v920 = vunpack.c.l.b16 %v867
    %v921 = vpack.c.b16 %v920, %v919
    %v923 = vshrl.u32 %v921, 16
    %v925 = vshll.u32 %v921, 16
    %v927 = vrot.slane %v925, 1
    %v928 = vor.u32 %v923, %v927
    %v930 = vsel %vm43, %v928, 0
    %v933 = vsel %vm47, %v916, 0
    %935 = vmatprep.subr.bf16.mxu0 0
    %936 = vmatpush1.bf16.msra.mxu0 %v933
    %937 = vmatprep.subr.bf16.mxu0 0
    %938 = vmatpush1.bf16.msra.mxu0 0
    %939 = vmatprep.subr.bf16.mxu0 0
    %940 = vmatpush1.bf16.msra.mxu0 0
    %941 = vmatprep.subr.bf16.mxu0 0
    %942 = vmatpush1.bf16.msra.mxu0 0
    %943 = vmatprep.subr.bf16.mxu0 0
    %944 = vmatpush1.bf16.msra.mxu0 0
    %945 = vmatprep.subr.bf16.mxu0 0
    %946 = vmatpush1.bf16.msra.mxu0 0
    %947 = vmatprep.subr.bf16.mxu0 0
    %948 = vmatpush1.bf16.msra.mxu0 0
    %949 = vmatprep.subr.bf16.mxu0 0
    %950 = vmatpush1.bf16.msra.mxu0 0
    %951 = vmatprep.subr.bf16.mxu0 0
    %952 = vmatpush1.bf16.msra.mxu0 0
    %953 = vmatprep.subr.bf16.mxu0 0
    %954 = vmatpush1.bf16.msra.mxu0 0
    %955 = vmatprep.subr.bf16.mxu0 0
    %956 = vmatpush1.bf16.msra.mxu0 0
    %957 = vmatprep.subr.bf16.mxu0 0
    %958 = vmatpush1.bf16.msra.mxu0 0
    %959 = vmatprep.subr.bf16.mxu0 0
    %960 = vmatpush1.bf16.msra.mxu0 0
    %961 = vmatprep.subr.bf16.mxu0 0
    %962 = vmatpush1.bf16.msra.mxu0 0
    %963 = vmatprep.subr.bf16.mxu0 0
    %964 = vmatpush1.bf16.msra.mxu0 0
    %965 = vmatprep.subr.bf16.mxu0 0
    %966 = vmatpush1.bf16.msra.mxu0 0
    %967 = vmatprep.mubr.bf16.mxu0 0
    %968 = vmatmul.mubr.bf16.gmra.mrb[0].mxu0 %v930
    %v969 = vpop.f32.mrb[0].mxu0
    %v970 = vadd.f32 0.0, %v969
    %v971 = vpop.f32.mrb[0].mxu0
    %v972 = vpop.f32.mrb[0].mxu0
    %v973 = vpop.f32.mrb[0].mxu0
    %974 = vdwg.mxu0
    %v975 = vadd.f32 %v915, %v970
    %v976 = vld [vmem:[%s469] sm:$0xf]
    %v977 = vrot.slane %v921, 1
    %v979 = vsel %vm43, %v977, 0
    %v982 = vsel %vm47, %v976, 0
    %984 = vmatprep.subr.bf16.mxu0 0
    %985 = vmatpush1.bf16.msra.mxu0 %v982
    %986 = vmatprep.subr.bf16.mxu0 0
    %987 = vmatpush1.bf16.msra.mxu0 0
    %988 = vmatprep.subr.bf16.mxu0 0
    %989 = vmatpush1.bf16.msra.mxu0 0
    %990 = vmatprep.subr.bf16.mxu0 0
    %991 = vmatpush1.bf16.msra.mxu0 0
    %992 = vmatprep.subr.bf16.mxu0 0
    %993 = vmatpush1.bf16.msra.mxu0 0
    %994 = vmatprep.subr.bf16.mxu0 0
    %995 = vmatpush1.bf16.msra.mxu0 0
    %996 = vmatprep.subr.bf16.mxu0 0
    %997 = vmatpush1.bf16.msra.mxu0 0
    %998 = vmatprep.subr.bf16.mxu0 0
    %999 = vmatpush1.bf16.msra.mxu0 0
    %1000 = vmatprep.subr.bf16.mxu0 0
    %1001 = vmatpush1.bf16.msra.mxu0 0
    %1002 = vmatprep.subr.bf16.mxu0 0
    %1003 = vmatpush1.bf16.msra.mxu0 0
    %1004 = vmatprep.subr.bf16.mxu0 0
    %1005 = vmatpush1.bf16.msra.mxu0 0
    %1006 = vmatprep.subr.bf16.mxu0 0
    %1007 = vmatpush1.bf16.msra.mxu0 0
    %1008 = vmatprep.subr.bf16.mxu0 0
    %1009 = vmatpush1.bf16.msra.mxu0 0
    %1010 = vmatprep.subr.bf16.mxu0 0
    %1011 = vmatpush1.bf16.msra.mxu0 0
    %1012 = vmatprep.subr.bf16.mxu0 0
    %1013 = vmatpush1.bf16.msra.mxu0 0
    %1014 = vmatprep.subr.bf16.mxu0 0
    %1015 = vmatpush1.bf16.msra.mxu0 0
    %1016 = vmatprep.mubr.bf16.mxu0 0
    %1017 = vmatmul.mubr.bf16.gmra.mrb[0].mxu0 %v979
    %v1018 = vpop.f32.mrb[0].mxu0
    %v1019 = vadd.f32 0.0, %v1018
    %v1020 = vpop.f32.mrb[0].mxu0
    %v1021 = vpop.f32.mrb[0].mxu0
    %v1022 = vpop.f32.mrb[0].mxu0
    %1023 = vdwg.mxu0
    %v1024 = vadd.f32 %v975, %v1019
    %v1025 = vadd.f32 %v1024, %v523
    %vm1026 = vcmp.ge.f32.partialorder %v1025, 0.0
    %v1027 = vmul.f32 %v531, %v1025
    %v1028 = vsel %vm1026, %v1025, %v1027
    %s1029 = scalar_lea.vmem [#allocation2], 8
    %1030 = vst.msk [vmem:[%s1029] sm:$0xff] %vm535, %v1028
    %s1031 = sadd.s32 %s19, 2
    %s1032 = smul.u32 %s1031, 2
    %s1033 = smul.u32 %s1032, 2
    %s1034 = smul.addr %s1033, 4
    %s1035 = scalar_lea.vmem %s0, %s1034
    %v1036 = vld [vmem:[%s1035] sm:$0xf]
    %v1037 = vld [vmem:[%s1035 + $0x4] sm:$0x1]
    %v1038 = vld [vmem:[%s1] sm:$0xf]
    %v1039 = vld [vmem:[%s29] sm:$0xf]
    %v1042 = vunpack.c.l.b16 %v1036
    %v1043 = vunpack.c.l.b16 %v1037
    %v1044 = vpack.c.b16 %v1043, %v1042
    %v1046 = vshrl.u32 %v1044, 16
    %v1048 = vshll.u32 %v1044, 16
    %v1050 = vrot.slane %v1048, 1
    %v1051 = vor.u32 %v1046, %v1050
    %v1053 = vsel %vm43, %v1051, 0
    %v1056 = vsel %vm47, %v1039, 0
    %1058 = vmatprep.subr.bf16.mxu0 0
    %1059 = vmatpush1.bf16.msra.mxu0 %v1056
    %1060 = vmatprep.subr.bf16.mxu0 0
    %1061 = vmatpush1.bf16.msra.mxu0 0
    %1062 = vmatprep.subr.bf16.mxu0 0
    %1063 = vmatpush1.bf16.msra.mxu0 0
    %1064 = vmatprep.subr.bf16.mxu0 0
    %1065 = vmatpush1.bf16.msra.mxu0 0
    %1066 = vmatprep.subr.bf16.mxu0 0
    %1067 = vmatpush1.bf16.msra.mxu0 0
    %1068 = vmatprep.subr.bf16.mxu0 0
    %1069 = vmatpush1.bf16.msra.mxu0 0
    %1070 = vmatprep.subr.bf16.mxu0 0
    %1071 = vmatpush1.bf16.msra.mxu0 0
    %1072 = vmatprep.subr.bf16.mxu0 0
    %1073 = vmatpush1.bf16.msra.mxu0 0
    %1074 = vmatprep.subr.bf16.mxu0 0
    %1075 = vmatpush1.bf16.msra.mxu0 0
    %1076 = vmatprep.subr.bf16.mxu0 0
    %1077 = vmatpush1.bf16.msra.mxu0 0
    %1078 = vmatprep.subr.bf16.mxu0 0
    %1079 = vmatpush1.bf16.msra.mxu0 0
    %1080 = vmatprep.subr.bf16.mxu0 0
    %1081 = vmatpush1.bf16.msra.mxu0 0
    %1082 = vmatprep.subr.bf16.mxu0 0
    %1083 = vmatpush1.bf16.msra.mxu0 0
    %1084 = vmatprep.subr.bf16.mxu0 0
    %1085 = vmatpush1.bf16.msra.mxu0 0
    %1086 = vmatprep.subr.bf16.mxu0 0
    %1087 = vmatpush1.bf16.msra.mxu0 0
    %1088 = vmatprep.subr.bf16.mxu0 0
    %1089 = vmatpush1.bf16.msra.mxu0 0
    %1090 = vmatprep.mubr.bf16.mxu0 0
    %1091 = vmatmul.mubr.bf16.gmra.mrb[0].mxu0 %v1053
    %v1092 = vpop.f32.mrb[0].mxu0
    %v1093 = vadd.f32 0.0, %v1092
    %v1094 = vpop.f32.mrb[0].mxu0
    %v1095 = vpop.f32.mrb[0].mxu0
    %v1096 = vpop.f32.mrb[0].mxu0
    %1097 = vdwg.mxu0
    %v1099 = vsel %vm43, %v1036, 0
    %v1102 = vsel %vm47, %v1038, 0
    %1104 = vmatprep.subr.bf16.mxu0 0
    %1105 = vmatpush1.bf16.msra.mxu0 %v1102
    %1106 = vmatprep.subr.bf16.mxu0 0
    %1107 = vmatpush1.bf16.msra.mxu0 0
    %1108 = vmatprep.subr.bf16.mxu0 0
    %1109 = vmatpush1.bf16.msra.mxu0 0
    %1110 = vmatprep.subr.bf16.mxu0 0
    %1111 = vmatpush1.bf16.msra.mxu0 0
    %1112 = vmatprep.subr.bf16.mxu0 0
    %1113 = vmatpush1.bf16.msra.mxu0 0
    %1114 = vmatprep.subr.bf16.mxu0 0
    %1115 = vmatpush1.bf16.msra.mxu0 0
    %1116 = vmatprep.subr.bf16.mxu0 0
    %1117 = vmatpush1.bf16.msra.mxu0 0
    %1118 = vmatprep.subr.bf16.mxu0 0
    %1119 = vmatpush1.bf16.msra.mxu0 0
    %1120 = vmatprep.subr.bf16.mxu0 0
    %1121 = vmatpush1.bf16.msra.mxu0 0
    %1122 = vmatprep.subr.bf16.mxu0 0
    %1123 = vmatpush1.bf16.msra.mxu0 0
    %1124 = vmatprep.subr.bf16.mxu0 0
    %1125 = vmatpush1.bf16.msra.mxu0 0
    %1126 = vmatprep.subr.bf16.mxu0 0
    %1127 = vmatpush1.bf16.msra.mxu0 0
    %1128 = vmatprep.subr.bf16.mxu0 0
    %1129 = vmatpush1.bf16.msra.mxu0 0
    %1130 = vmatprep.subr.bf16.mxu0 0
    %1131 = vmatpush1.bf16.msra.mxu0 0
    %1132 = vmatprep.subr.bf16.mxu0 0
    %1133 = vmatpush1.bf16.msra.mxu0 0
    %1134 = vmatprep.subr.bf16.mxu0 0
    %1135 = vmatpush1.bf16.msra.mxu0 0
    %1136 = vmatprep.mubr.bf16.mxu0 0
    %1137 = vmatmul.mubr.bf16.gmra.mrb[0].mxu0 %v1099
    %v1138 = vpop.f32.mrb[0].mxu0
    %v1139 = vadd.f32 %v1093, %v1138
    %v1140 = vpop.f32.mrb[0].mxu0
    %v1141 = vpop.f32.mrb[0].mxu0
    %v1142 = vpop.f32.mrb[0].mxu0
    %1143 = vdwg.mxu0
    %v1144 = vld [vmem:[%s137] sm:$0xf]
    %v1145 = vrot.slane %v1044, 1
    %v1147 = vsel %vm43, %v1145, 0
    %v1150 = vsel %vm47, %v1144, 0
    %1152 = vmatprep.subr.bf16.mxu0 0
    %1153 = vmatpush1.bf16.msra.mxu0 %v1150
    %1154 = vmatprep.subr.bf16.mxu0 0
    %1155 = vmatpush1.bf16.msra.mxu0 0
    %1156 = vmatprep.subr.bf16.mxu0 0
    %1157 = vmatpush1.bf16.msra.mxu0 0
    %1158 = vmatprep.subr.bf16.mxu0 0
    %1159 = vmatpush1.bf16.msra.mxu0 0
    %1160 = vmatprep.subr.bf16.mxu0 0
    %1161 = vmatpush1.bf16.msra.mxu0 0
    %1162 = vmatprep.subr.bf16.mxu0 0
    %1163 = vmatpush1.bf16.msra.mxu0 0
    %1164 = vmatprep.subr.bf16.mxu0 0
    %1165 = vmatpush1.bf16.msra.mxu0 0
    %1166 = vmatprep.subr.bf16.mxu0 0
    %1167 = vmatpush1.bf16.msra.mxu0 0
    %1168 = vmatprep.subr.bf16.mxu0 0
    %1169 = vmatpush1.bf16.msra.mxu0 0
    %1170 = vmatprep.subr.bf16.mxu0 0
    %1171 = vmatpush1.bf16.msra.mxu0 0
    %1172 = vmatprep.subr.bf16.mxu0 0
    %1173 = vmatpush1.bf16.msra.mxu0 0
    %1174 = vmatprep.subr.bf16.mxu0 0
    %1175 = vmatpush1.bf16.msra.mxu0 0
    %1176 = vmatprep.subr.bf16.mxu0 0
    %1177 = vmatpush1.bf16.msra.mxu0 0
    %1178 = vmatprep.subr.bf16.mxu0 0
    %1179 = vmatpush1.bf16.msra.mxu0 0
    %1180 = vmatprep.subr.bf16.mxu0 0
    %1181 = vmatpush1.bf16.msra.mxu0 0
    %1182 = vmatprep.subr.bf16.mxu0 0
    %1183 = vmatpush1.bf16.msra.mxu0 0
    %1184 = vmatprep.mubr.bf16.mxu0 0
    %1185 = vmatmul.mubr.bf16.gmra.mrb[0].mxu0 %v1147
    %v1186 = vpop.f32.mrb[0].mxu0
    %v1187 = vadd.f32 0.0, %v1186
    %v1188 = vpop.f32.mrb[0].mxu0
    %v1189 = vpop.f32.mrb[0].mxu0
    %v1190 = vpop.f32.mrb[0].mxu0
    %1191 = vdwg.mxu0
    %v1192 = vadd.f32 %v1139, %v1187
    %s1193 = sadd.s32 %s1032, 1
    %s1194 = smul.u32 %s1193, 2
    %s1195 = smul.addr %s1194, 4
    %s1196 = scalar_lea.vmem %s0, %s1195
    %v1197 = vld [vmem:[%s1196] sm:$0xf]
    %v1198 = vld [vmem:[%s1196 + $0x4] sm:$0x1]
    %v1199 = vld [vmem:[%s193] sm:$0xf]
    %v1201 = vsel %vm43, %v1197, 0
    %v1204 = vsel %vm47, %v1199, 0
    %1206 = vmatprep.subr.bf16.mxu0 0
    %1207 = vmatpush1.bf16.msra.mxu0 %v1204
    %1208 = vmatprep.subr.bf16.mxu0 0
    %1209 = vmatpush1.bf16.msra.mxu0 0
    %1210 = vmatprep.subr.bf16.mxu0 0
    %1211 = vmatpush1.bf16.msra.mxu0 0
    %1212 = vmatprep.subr.bf16.mxu0 0
    %1213 = vmatpush1.bf16.msra.mxu0 0
    %1214 = vmatprep.subr.bf16.mxu0 0
    %1215 = vmatpush1.bf16.msra.mxu0 0
    %1216 = vmatprep.subr.bf16.mxu0 0
    %1217 = vmatpush1.bf16.msra.mxu0 0
    %1218 = vmatprep.subr.bf16.mxu0 0
    %1219 = vmatpush1.bf16.msra.mxu0 0
    %1220 = vmatprep.subr.bf16.mxu0 0
    %1221 = vmatpush1.bf16.msra.mxu0 0
    %1222 = vmatprep.subr.bf16.mxu0 0
    %1223 = vmatpush1.bf16.msra.mxu0 0
    %1224 = vmatprep.subr.bf16.mxu0 0
    %1225 = vmatpush1.bf16.msra.mxu0 0
    %1226 = vmatprep.subr.bf16.mxu0 0
    %1227 = vmatpush1.bf16.msra.mxu0 0
    %1228 = vmatprep.subr.bf16.mxu0 0
    %1229 = vmatpush1.bf16.msra.mxu0 0
    %1230 = vmatprep.subr.bf16.mxu0 0
    %1231 = vmatpush1.bf16.msra.mxu0 0
    %1232 = vmatprep.subr.bf16.mxu0 0
    %1233 = vmatpush1.bf16.msra.mxu0 0
    %1234 = vmatprep.subr.bf16.mxu0 0
    %1235 = vmatpush1.bf16.msra.mxu0 0
    %1236 = vmatprep.subr.bf16.mxu0 0
    %1237 = vmatpush1.bf16.msra.mxu0 0
    %1238 = vmatprep.mubr.bf16.mxu0 0
    %1239 = vmatmul.mubr.bf16.gmra.mrb[0].mxu0 %v1201
    %v1240 = vpop.f32.mrb[0].mxu0
    %v1241 = vadd.f32 0.0, %v1240
    %v1242 = vpop.f32.mrb[0].mxu0
    %v1243 = vpop.f32.mrb[0].mxu0
    %v1244 = vpop.f32.mrb[0].mxu0
    %1245 = vdwg.mxu0
    %v1246 = vadd.f32 %v1192, %v1241
    %v1247 = vld [vmem:[%s242] sm:$0xf]
    %v1250 = vunpack.c.l.b16 %v1197
    %v1251 = vunpack.c.l.b16 %v1198
    %v1252 = vpack.c.b16 %v1251, %v1250
    %v1254 = vshrl.u32 %v1252, 16
    %v1256 = vshll.u32 %v1252, 16
    %v1258 = vrot.slane %v1256, 1
    %v1259 = vor.u32 %v1254, %v1258
    %v1261 = vsel %vm43, %v1259, 0
    %v1264 = vsel %vm47, %v1247, 0
    %1266 = vmatprep.subr.bf16.mxu0 0
    %1267 = vmatpush1.bf16.msra.mxu0 %v1264
    %1268 = vmatprep.subr.bf16.mxu0 0
    %1269 = vmatpush1.bf16.msra.mxu0 0
    %1270 = vmatprep.subr.bf16.mxu0 0
    %1271 = vmatpush1.bf16.msra.mxu0 0
    %1272 = vmatprep.subr.bf16.mxu0 0
    %1273 = vmatpush1.bf16.msra.mxu0 0
    %1274 = vmatprep.subr.bf16.mxu0 0
    %1275 = vmatpush1.bf16.msra.mxu0 0
    %1276 = vmatprep.subr.bf16.mxu0 0
    %1277 = vmatpush1.bf16.msra.mxu0 0
    %1278 = vmatprep.subr.bf16.mxu0 0
    %1279 = vmatpush1.bf16.msra.mxu0 0
    %1280 = vmatprep.subr.bf16.mxu0 0
    %1281 = vmatpush1.bf16.msra.mxu0 0
    %1282 = vmatprep.subr.bf16.mxu0 0
    %1283 = vmatpush1.bf16.msra.mxu0 0
    %1284 = vmatprep.subr.bf16.mxu0 0
    %1285 = vmatpush1.bf16.msra.mxu0 0
    %1286 = vmatprep.subr.bf16.mxu0 0
    %1287 = vmatpush1.bf16.msra.mxu0 0
    %1288 = vmatprep.subr.bf16.mxu0 0
    %1289 = vmatpush1.bf16.msra.mxu0 0
    %1290 = vmatprep.subr.bf16.mxu0 0
    %1291 = vmatpush1.bf16.msra.mxu0 0
    %1292 = vmatprep.subr.bf16.mxu0 0
    %1293 = vmatpush1.bf16.msra.mxu0 0
    %1294 = vmatprep.subr.bf16.mxu0 0
    %1295 = vmatpush1.bf16.msra.mxu0 0
    %1296 = vmatprep.subr.bf16.mxu0 0
    %1297 = vmatpush1.bf16.msra.mxu0 0
    %1298 = vmatprep.mubr.bf16.mxu0 0
    %1299 = vmatmul.mubr.bf16.gmra.mrb[0].mxu0 %v1261
    %v1300 = vpop.f32.mrb[0].mxu0
    %v1301 = vadd.f32 0.0, %v1300
    %v1302 = vpop.f32.mrb[0].mxu0
    %v1303 = vpop.f32.mrb[0].mxu0
    %v1304 = vpop.f32.mrb[0].mxu0
    %1305 = vdwg.mxu0
    %v1306 = vadd.f32 %v1246, %v1301
    %v1307 = vld [vmem:[%s303] sm:$0xf]
    %v1308 = vrot.slane %v1252, 1
    %v1310 = vsel %vm43, %v1308, 0
    %v1313 = vsel %vm47, %v1307, 0
    %1315 = vmatprep.subr.bf16.mxu0 0
    %1316 = vmatpush1.bf16.msra.mxu0 %v1313
    %1317 = vmatprep.subr.bf16.mxu0 0
    %1318 = vmatpush1.bf16.msra.mxu0 0
    %1319 = vmatprep.subr.bf16.mxu0 0
    %1320 = vmatpush1.bf16.msra.mxu0 0
    %1321 = vmatprep.subr.bf16.mxu0 0
    %1322 = vmatpush1.bf16.msra.mxu0 0
    %1323 = vmatprep.subr.bf16.mxu0 0
    %1324 = vmatpush1.bf16.msra.mxu0 0
    %1325 = vmatprep.subr.bf16.mxu0 0
    %1326 = vmatpush1.bf16.msra.mxu0 0
    %1327 = vmatprep.subr.bf16.mxu0 0
    %1328 = vmatpush1.bf16.msra.mxu0 0
    %1329 = vmatprep.subr.bf16.mxu0 0
    %1330 = vmatpush1.bf16.msra.mxu0 0
    %1331 = vmatprep.subr.bf16.mxu0 0
    %1332 = vmatpush1.bf16.msra.mxu0 0
    %1333 = vmatprep.subr.bf16.mxu0 0
    %1334 = vmatpush1.bf16.msra.mxu0 0
    %1335 = vmatprep.subr.bf16.mxu0 0
    %1336 = vmatpush1.bf16.msra.mxu0 0
    %1337 = vmatprep.subr.bf16.mxu0 0
    %1338 = vmatpush1.bf16.msra.mxu0 0
    %1339 = vmatprep.subr.bf16.mxu0 0
    %1340 = vmatpush1.bf16.msra.mxu0 0
    %1341 = vmatprep.subr.bf16.mxu0 0
    %1342 = vmatpush1.bf16.msra.mxu0 0
    %1343 = vmatprep.subr.bf16.mxu0 0
    %1344 = vmatpush1.bf16.msra.mxu0 0
    %1345 = vmatprep.subr.bf16.mxu0 0
    %1346 = vmatpush1.bf16.msra.mxu0 0
    %1347 = vmatprep.mubr.bf16.mxu0 0
    %1348 = vmatmul.mubr.bf16.gmra.mrb[0].mxu0 %v1310
    %v1349 = vpop.f32.mrb[0].mxu0
    %v1350 = vadd.f32 0.0, %v1349
    %v1351 = vpop.f32.mrb[0].mxu0
    %v1352 = vpop.f32.mrb[0].mxu0
    %v1353 = vpop.f32.mrb[0].mxu0
    %1354 = vdwg.mxu0
    %v1355 = vadd.f32 %v1306, %v1350
    %s1356 = sadd.s32 %s1032, 2
    %s1357 = smul.u32 %s1356, 2
    %s1358 = smul.addr %s1357, 4
    %s1359 = scalar_lea.vmem %s0, %s1358
    %v1360 = vld [vmem:[%s1359] sm:$0xf]
    %v1361 = vld [vmem:[%s1359 + $0x4] sm:$0x1]
    %v1362 = vld [vmem:[%s359] sm:$0xf]
    %v1364 = vsel %vm43, %v1360, 0
    %v1367 = vsel %vm47, %v1362, 0
    %1369 = vmatprep.subr.bf16.mxu0 0
    %1370 = vmatpush1.bf16.msra.mxu0 %v1367
    %1371 = vmatprep.subr.bf16.mxu0 0
    %1372 = vmatpush1.bf16.msra.mxu0 0
    %1373 = vmatprep.subr.bf16.mxu0 0
    %1374 = vmatpush1.bf16.msra.mxu0 0
    %1375 = vmatprep.subr.bf16.mxu0 0
    %1376 = vmatpush1.bf16.msra.mxu0 0
    %1377 = vmatprep.subr.bf16.mxu0 0
    %1378 = vmatpush1.bf16.msra.mxu0 0
    %1379 = vmatprep.subr.bf16.mxu0 0
    %1380 = vmatpush1.bf16.msra.mxu0 0
    %1381 = vmatprep.subr.bf16.mxu0 0
    %1382 = vmatpush1.bf16.msra.mxu0 0
    %1383 = vmatprep.subr.bf16.mxu0 0
    %1384 = vmatpush1.bf16.msra.mxu0 0
    %1385 = vmatprep.subr.bf16.mxu0 0
    %1386 = vmatpush1.bf16.msra.mxu0 0
    %1387 = vmatprep.subr.bf16.mxu0 0
    %1388 = vmatpush1.bf16.msra.mxu0 0
    %1389 = vmatprep.subr.bf16.mxu0 0
    %1390 = vmatpush1.bf16.msra.mxu0 0
    %1391 = vmatprep.subr.bf16.mxu0 0
    %1392 = vmatpush1.bf16.msra.mxu0 0
    %1393 = vmatprep.subr.bf16.mxu0 0
    %1394 = vmatpush1.bf16.msra.mxu0 0
    %1395 = vmatprep.subr.bf16.mxu0 0
    %1396 = vmatpush1.bf16.msra.mxu0 0
    %1397 = vmatprep.subr.bf16.mxu0 0
    %1398 = vmatpush1.bf16.msra.mxu0 0
    %1399 = vmatprep.subr.bf16.mxu0 0
    %1400 = vmatpush1.bf16.msra.mxu0 0
    %1401 = vmatprep.mubr.bf16.mxu0 0
    %1402 = vmatmul.mubr.bf16.gmra.mrb[0].mxu0 %v1364
    %v1403 = vpop.f32.mrb[0].mxu0
    %v1404 = vadd.f32 0.0, %v1403
    %v1405 = vpop.f32.mrb[0].mxu0
    %v1406 = vpop.f32.mrb[0].mxu0
    %v1407 = vpop.f32.mrb[0].mxu0
    %1408 = vdwg.mxu0
    %v1409 = vadd.f32 %v1355, %v1404
    %v1410 = vld [vmem:[%s408] sm:$0xf]
    %v1413 = vunpack.c.l.b16 %v1360
    %v1414 = vunpack.c.l.b16 %v1361
    %v1415 = vpack.c.b16 %v1414, %v1413
    %v1417 = vshrl.u32 %v1415, 16
    %v1419 = vshll.u32 %v1415, 16
    %v1421 = vrot.slane %v1419, 1
    %v1422 = vor.u32 %v1417, %v1421
    %v1424 = vsel %vm43, %v1422, 0
    %v1427 = vsel %vm47, %v1410, 0
    %1429 = vmatprep.subr.bf16.mxu0 0
    %1430 = vmatpush1.bf16.msra.mxu0 %v1427
    %1431 = vmatprep.subr.bf16.mxu0 0
    %1432 = vmatpush1.bf16.msra.mxu0 0
    %1433 = vmatprep.subr.bf16.mxu0 0
    %1434 = vmatpush1.bf16.msra.mxu0 0
    %1435 = vmatprep.subr.bf16.mxu0 0
    %1436 = vmatpush1.bf16.msra.mxu0 0
    %1437 = vmatprep.subr.bf16.mxu0 0
    %1438 = vmatpush1.bf16.msra.mxu0 0
    %1439 = vmatprep.subr.bf16.mxu0 0
    %1440 = vmatpush1.bf16.msra.mxu0 0
    %1441 = vmatprep.subr.bf16.mxu0 0
    %1442 = vmatpush1.bf16.msra.mxu0 0
    %1443 = vmatprep.subr.bf16.mxu0 0
    %1444 = vmatpush1.bf16.msra.mxu0 0
    %1445 = vmatprep.subr.bf16.mxu0 0
    %1446 = vmatpush1.bf16.msra.mxu0 0
    %1447 = vmatprep.subr.bf16.mxu0 0
    %1448 = vmatpush1.bf16.msra.mxu0 0
    %1449 = vmatprep.subr.bf16.mxu0 0
    %1450 = vmatpush1.bf16.msra.mxu0 0
    %1451 = vmatprep.subr.bf16.mxu0 0
    %1452 = vmatpush1.bf16.msra.mxu0 0
    %1453 = vmatprep.subr.bf16.mxu0 0
    %1454 = vmatpush1.bf16.msra.mxu0 0
    %1455 = vmatprep.subr.bf16.mxu0 0
    %1456 = vmatpush1.bf16.msra.mxu0 0
    %1457 = vmatprep.subr.bf16.mxu0 0
    %1458 = vmatpush1.bf16.msra.mxu0 0
    %1459 = vmatprep.subr.bf16.mxu0 0
    %1460 = vmatpush1.bf16.msra.mxu0 0
    %1461 = vmatprep.mubr.bf16.mxu0 0
    %1462 = vmatmul.mubr.bf16.gmra.mrb[0].mxu0 %v1424
    %v1463 = vpop.f32.mrb[0].mxu0
    %v1464 = vadd.f32 0.0, %v1463
    %v1465 = vpop.f32.mrb[0].mxu0
    %v1466 = vpop.f32.mrb[0].mxu0
    %v1467 = vpop.f32.mrb[0].mxu0
    %1468 = vdwg.mxu0
    %v1469 = vadd.f32 %v1409, %v1464
    %v1470 = vld [vmem:[%s469] sm:$0xf]
    %v1471 = vrot.slane %v1415, 1
    %v1473 = vsel %vm43, %v1471, 0
    %v1476 = vsel %vm47, %v1470, 0
    %1478 = vmatprep.subr.bf16.mxu0 0
    %1479 = vmatpush1.bf16.msra.mxu0 %v1476
    %1480 = vmatprep.subr.bf16.mxu0 0
    %1481 = vmatpush1.bf16.msra.mxu0 0
    %1482 = vmatprep.subr.bf16.mxu0 0
    %1483 = vmatpush1.bf16.msra.mxu0 0
    %1484 = vmatprep.subr.bf16.mxu0 0
    %1485 = vmatpush1.bf16.msra.mxu0 0
    %1486 = vmatprep.subr.bf16.mxu0 0
    %1487 = vmatpush1.bf16.msra.mxu0 0
    %1488 = vmatprep.subr.bf16.mxu0 0
    %1489 = vmatpush1.bf16.msra.mxu0 0
    %1490 = vmatprep.subr.bf16.mxu0 0
    %1491 = vmatpush1.bf16.msra.mxu0 0
    %1492 = vmatprep.subr.bf16.mxu0 0
    %1493 = vmatpush1.bf16.msra.mxu0 0
    %1494 = vmatprep.subr.bf16.mxu0 0
    %1495 = vmatpush1.bf16.msra.mxu0 0
    %1496 = vmatprep.subr.bf16.mxu0 0
    %1497 = vmatpush1.bf16.msra.mxu0 0
    %1498 = vmatprep.subr.bf16.mxu0 0
    %1499 = vmatpush1.bf16.msra.mxu0 0
    %1500 = vmatprep.subr.bf16.mxu0 0
    %1501 = vmatpush1.bf16.msra.mxu0 0
    %1502 = vmatprep.subr.bf16.mxu0 0
    %1503 = vmatpush1.bf16.msra.mxu0 0
    %1504 = vmatprep.subr.bf16.mxu0 0
    %1505 = vmatpush1.bf16.msra.mxu0 0
    %1506 = vmatprep.subr.bf16.mxu0 0
    %1507 = vmatpush1.bf16.msra.mxu0 0
    %1508 = vmatprep.subr.bf16.mxu0 0
    %1509 = vmatpush1.bf16.msra.mxu0 0
    %1510 = vmatprep.mubr.bf16.mxu0 0
    %1511 = vmatmul.mubr.bf16.gmra.mrb[0].mxu0 %v1473
    %v1512 = vpop.f32.mrb[0].mxu0
    %v1513 = vadd.f32 0.0, %v1512
    %v1514 = vpop.f32.mrb[0].mxu0
    %v1515 = vpop.f32.mrb[0].mxu0
    %v1516 = vpop.f32.mrb[0].mxu0
    %1517 = vdwg.mxu0
    %v1518 = vadd.f32 %v1469, %v1513
    %v1519 = vadd.f32 %v1518, %v523
    %vm1520 = vcmp.ge.f32.partialorder %v1519, 0.0
    %v1521 = vmul.f32 %v531, %v1519
    %v1522 = vsel %vm1520, %v1519, %v1521
    %s1523 = scalar_lea.vmem [#allocation2], 16
    %1524 = vst.msk [vmem:[%s1523] sm:$0xff] %vm535, %v1522
    %s1525 = sadd.s32 %s19, 3
    %s1526 = smul.u32 %s1525, 2
    %s1527 = smul.u32 %s1526, 2
    %s1528 = smul.addr %s1527, 4
    %s1529 = scalar_lea.vmem %s0, %s1528
    %v1530 = vld [vmem:[%s1529] sm:$0xf]
    %v1531 = vld [vmem:[%s1529 + $0x4] sm:$0x1]
    %v1532 = vld [vmem:[%s1] sm:$0xf]
    %v1533 = vld [vmem:[%s29] sm:$0xf]
    %v1536 = vunpack.c.l.b16 %v1530
    %v1537 = vunpack.c.l.b16 %v1531
    %v1538 = vpack.c.b16 %v1537, %v1536
    %v1540 = vshrl.u32 %v1538, 16
    %v1542 = vshll.u32 %v1538, 16
    %v1544 = vrot.slane %v1542, 1
    %v1545 = vor.u32 %v1540, %v1544
    %v1547 = vsel %vm43, %v1545, 0
    %v1550 = vsel %vm47, %v1533, 0
    %1552 = vmatprep.subr.bf16.mxu0 0
    %1553 = vmatpush1.bf16.msra.mxu0 %v1550
    %1554 = vmatprep.subr.bf16.mxu0 0
    %1555 = vmatpush1.bf16.msra.mxu0 0
    %1556 = vmatprep.subr.bf16.mxu0 0
    %1557 = vmatpush1.bf16.msra.mxu0 0
    %1558 = vmatprep.subr.bf16.mxu0 0
    %1559 = vmatpush1.bf16.msra.mxu0 0
    %1560 = vmatprep.subr.bf16.mxu0 0
    %1561 = vmatpush1.bf16.msra.mxu0 0
    %1562 = vmatprep.subr.bf16.mxu0 0
    %1563 = vmatpush1.bf16.msra.mxu0 0
    %1564 = vmatprep.subr.bf16.mxu0 0
    %1565 = vmatpush1.bf16.msra.mxu0 0
    %1566 = vmatprep.subr.bf16.mxu0 0
    %1567 = vmatpush1.bf16.msra.mxu0 0
    %1568 = vmatprep.subr.bf16.mxu0 0
    %1569 = vmatpush1.bf16.msra.mxu0 0
    %1570 = vmatprep.subr.bf16.mxu0 0
    %1571 = vmatpush1.bf16.msra.mxu0 0
    %1572 = vmatprep.subr.bf16.mxu0 0
    %1573 = vmatpush1.bf16.msra.mxu0 0
    %1574 = vmatprep.subr.bf16.mxu0 0
    %1575 = vmatpush1.bf16.msra.mxu0 0
    %1576 = vmatprep.subr.bf16.mxu0 0
    %1577 = vmatpush1.bf16.msra.mxu0 0
    %1578 = vmatprep.subr.bf16.mxu0 0
    %1579 = vmatpush1.bf16.msra.mxu0 0
    %1580 = vmatprep.subr.bf16.mxu0 0
    %1581 = vmatpush1.bf16.msra.mxu0 0
    %1582 = vmatprep.subr.bf16.mxu0 0
    %1583 = vmatpush1.bf16.msra.mxu0 0
    %1584 = vmatprep.mubr.bf16.mxu0 0
    %1585 = vmatmul.mubr.bf16.gmra.mrb[0].mxu0 %v1547
    %v1586 = vpop.f32.mrb[0].mxu0
    %v1587 = vadd.f32 0.0, %v1586
    %v1588 = vpop.f32.mrb[0].mxu0
    %v1589 = vpop.f32.mrb[0].mxu0
    %v1590 = vpop.f32.mrb[0].mxu0
    %1591 = vdwg.mxu0
    %v1593 = vsel %vm43, %v1530, 0
    %v1596 = vsel %vm47, %v1532, 0
    %1598 = vmatprep.subr.bf16.mxu0 0
    %1599 = vmatpush1.bf16.msra.mxu0 %v1596
    %1600 = vmatprep.subr.bf16.mxu0 0
    %1601 = vmatpush1.bf16.msra.mxu0 0
    %1602 = vmatprep.subr.bf16.mxu0 0
    %1603 = vmatpush1.bf16.msra.mxu0 0
    %1604 = vmatprep.subr.bf16.mxu0 0
    %1605 = vmatpush1.bf16.msra.mxu0 0
    %1606 = vmatprep.subr.bf16.mxu0 0
    %1607 = vmatpush1.bf16.msra.mxu0 0
    %1608 = vmatprep.subr.bf16.mxu0 0
    %1609 = vmatpush1.bf16.msra.mxu0 0
    %1610 = vmatprep.subr.bf16.mxu0 0
    %1611 = vmatpush1.bf16.msra.mxu0 0
    %1612 = vmatprep.subr.bf16.mxu0 0
    %1613 = vmatpush1.bf16.msra.mxu0 0
    %1614 = vmatprep.subr.bf16.mxu0 0
    %1615 = vmatpush1.bf16.msra.mxu0 0
    %1616 = vmatprep.subr.bf16.mxu0 0
    %1617 = vmatpush1.bf16.msra.mxu0 0
    %1618 = vmatprep.subr.bf16.mxu0 0
    %1619 = vmatpush1.bf16.msra.mxu0 0
    %1620 = vmatprep.subr.bf16.mxu0 0
    %1621 = vmatpush1.bf16.msra.mxu0 0
    %1622 = vmatprep.subr.bf16.mxu0 0
    %1623 = vmatpush1.bf16.msra.mxu0 0
    %1624 = vmatprep.subr.bf16.mxu0 0
    %1625 = vmatpush1.bf16.msra.mxu0 0
    %1626 = vmatprep.subr.bf16.mxu0 0
    %1627 = vmatpush1.bf16.msra.mxu0 0
    %1628 = vmatprep.subr.bf16.mxu0 0
    %1629 = vmatpush1.bf16.msra.mxu0 0
    %1630 = vmatprep.mubr.bf16.mxu0 0
    %1631 = vmatmul.mubr.bf16.gmra.mrb[0].mxu0 %v1593
    %v1632 = vpop.f32.mrb[0].mxu0
    %v1633 = vadd.f32 %v1587, %v1632
    %v1634 = vpop.f32.mrb[0].mxu0
    %v1635 = vpop.f32.mrb[0].mxu0
    %v1636 = vpop.f32.mrb[0].mxu0
    %1637 = vdwg.mxu0
    %v1638 = vld [vmem:[%s137] sm:$0xf]
    %v1639 = vrot.slane %v1538, 1
    %v1641 = vsel %vm43, %v1639, 0
    %v1644 = vsel %vm47, %v1638, 0
    %1646 = vmatprep.subr.bf16.mxu0 0
    %1647 = vmatpush1.bf16.msra.mxu0 %v1644
    %1648 = vmatprep.subr.bf16.mxu0 0
    %1649 = vmatpush1.bf16.msra.mxu0 0
    %1650 = vmatprep.subr.bf16.mxu0 0
    %1651 = vmatpush1.bf16.msra.mxu0 0
    %1652 = vmatprep.subr.bf16.mxu0 0
    %1653 = vmatpush1.bf16.msra.mxu0 0
    %1654 = vmatprep.subr.bf16.mxu0 0
    %1655 = vmatpush1.bf16.msra.mxu0 0
    %1656 = vmatprep.subr.bf16.mxu0 0
    %1657 = vmatpush1.bf16.msra.mxu0 0
    %1658 = vmatprep.subr.bf16.mxu0 0
    %1659 = vmatpush1.bf16.msra.mxu0 0
    %1660 = vmatprep.subr.bf16.mxu0 0
    %1661 = vmatpush1.bf16.msra.mxu0 0
    %1662 = vmatprep.subr.bf16.mxu0 0
    %1663 = vmatpush1.bf16.msra.mxu0 0
    %1664 = vmatprep.subr.bf16.mxu0 0
    %1665 = vmatpush1.bf16.msra.mxu0 0
    %1666 = vmatprep.subr.bf16.mxu0 0
    %1667 = vmatpush1.bf16.msra.mxu0 0
    %1668 = vmatprep.subr.bf16.mxu0 0
    %1669 = vmatpush1.bf16.msra.mxu0 0
    %1670 = vmatprep.subr.bf16.mxu0 0
    %1671 = vmatpush1.bf16.msra.mxu0 0
    %1672 = vmatprep.subr.bf16.mxu0 0
    %1673 = vmatpush1.bf16.msra.mxu0 0
    %1674 = vmatprep.subr.bf16.mxu0 0
    %1675 = vmatpush1.bf16.msra.mxu0 0
    %1676 = vmatprep.subr.bf16.mxu0 0
    %1677 = vmatpush1.bf16.msra.mxu0 0
    %1678 = vmatprep.mubr.bf16.mxu0 0
    %1679 = vmatmul.mubr.bf16.gmra.mrb[0].mxu0 %v1641
    %v1680 = vpop.f32.mrb[0].mxu0
    %v1681 = vadd.f32 0.0, %v1680
    %v1682 = vpop.f32.mrb[0].mxu0
    %v1683 = vpop.f32.mrb[0].mxu0
    %v1684 = vpop.f32.mrb[0].mxu0
    %1685 = vdwg.mxu0
    %v1686 = vadd.f32 %v1633, %v1681
    %s1687 = sadd.s32 %s1526, 1
    %s1688 = smul.u32 %s1687, 2
    %s1689 = smul.addr %s1688, 4
    %s1690 = scalar_lea.vmem %s0, %s1689
    %v1691 = vld [vmem:[%s1690] sm:$0xf]
    %v1692 = vld [vmem:[%s1690 + $0x4] sm:$0x1]
    %v1693 = vld [vmem:[%s193] sm:$0xf]
    %v1695 = vsel %vm43, %v1691, 0
    %v1698 = vsel %vm47, %v1693, 0
    %1700 = vmatprep.subr.bf16.mxu0 0
    %1701 = vmatpush1.bf16.msra.mxu0 %v1698
    %1702 = vmatprep.subr.bf16.mxu0 0
    %1703 = vmatpush1.bf16.msra.mxu0 0
    %1704 = vmatprep.subr.bf16.mxu0 0
    %1705 = vmatpush1.bf16.msra.mxu0 0
    %1706 = vmatprep.subr.bf16.mxu0 0
    %1707 = vmatpush1.bf16.msra.mxu0 0
    %1708 = vmatprep.subr.bf16.mxu0 0
    %1709 = vmatpush1.bf16.msra.mxu0 0
    %1710 = vmatprep.subr.bf16.mxu0 0
    %1711 = vmatpush1.bf16.msra.mxu0 0
    %1712 = vmatprep.subr.bf16.mxu0 0
    %1713 = vmatpush1.bf16.msra.mxu0 0
    %1714 = vmatprep.subr.bf16.mxu0 0
    %1715 = vmatpush1.bf16.msra.mxu0 0
    %1716 = vmatprep.subr.bf16.mxu0 0
    %1717 = vmatpush1.bf16.msra.mxu0 0
    %1718 = vmatprep.subr.bf16.mxu0 0
    %1719 = vmatpush1.bf16.msra.mxu0 0
    %1720 = vmatprep.subr.bf16.mxu0 0
    %1721 = vmatpush1.bf16.msra.mxu0 0
    %1722 = vmatprep.subr.bf16.mxu0 0
    %1723 = vmatpush1.bf16.msra.mxu0 0
    %1724 = vmatprep.subr.bf16.mxu0 0
    %1725 = vmatpush1.bf16.msra.mxu0 0
    %1726 = vmatprep.subr.bf16.mxu0 0
    %1727 = vmatpush1.bf16.msra.mxu0 0
    %1728 = vmatprep.subr.bf16.mxu0 0
    %1729 = vmatpush1.bf16.msra.mxu0 0
    %1730 = vmatprep.subr.bf16.mxu0 0
    %1731 = vmatpush1.bf16.msra.mxu0 0
    %1732 = vmatprep.mubr.bf16.mxu0 0
    %1733 = vmatmul.mubr.bf16.gmra.mrb[0].mxu0 %v1695
    %v1734 = vpop.f32.mrb[0].mxu0
    %v1735 = vadd.f32 0.0, %v1734
    %v1736 = vpop.f32.mrb[0].mxu0
    %v1737 = vpop.f32.mrb[0].mxu0
    %v1738 = vpop.f32.mrb[0].mxu0
    %1739 = vdwg.mxu0
    %v1740 = vadd.f32 %v1686, %v1735
    %v1741 = vld [vmem:[%s242] sm:$0xf]
    %v1744 = vunpack.c.l.b16 %v1691
    %v1745 = vunpack.c.l.b16 %v1692
    %v1746 = vpack.c.b16 %v1745, %v1744
    %v1748 = vshrl.u32 %v1746, 16
    %v1750 = vshll.u32 %v1746, 16
    %v1752 = vrot.slane %v1750, 1
    %v1753 = vor.u32 %v1748, %v1752
    %v1755 = vsel %vm43, %v1753, 0
    %v1758 = vsel %vm47, %v1741, 0
    %1760 = vmatprep.subr.bf16.mxu0 0
    %1761 = vmatpush1.bf16.msra.mxu0 %v1758
    %1762 = vmatprep.subr.bf16.mxu0 0
    %1763 = vmatpush1.bf16.msra.mxu0 0
    %1764 = vmatprep.subr.bf16.mxu0 0
    %1765 = vmatpush1.bf16.msra.mxu0 0
    %1766 = vmatprep.subr.bf16.mxu0 0
    %1767 = vmatpush1.bf16.msra.mxu0 0
    %1768 = vmatprep.subr.bf16.mxu0 0
    %1769 = vmatpush1.bf16.msra.mxu0 0
    %1770 = vmatprep.subr.bf16.mxu0 0
    %1771 = vmatpush1.bf16.msra.mxu0 0
    %1772 = vmatprep.subr.bf16.mxu0 0
    %1773 = vmatpush1.bf16.msra.mxu0 0
    %1774 = vmatprep.subr.bf16.mxu0 0
    %1775 = vmatpush1.bf16.msra.mxu0 0
    %1776 = vmatprep.subr.bf16.mxu0 0
    %1777 = vmatpush1.bf16.msra.mxu0 0
    %1778 = vmatprep.subr.bf16.mxu0 0
    %1779 = vmatpush1.bf16.msra.mxu0 0
    %1780 = vmatprep.subr.bf16.mxu0 0
    %1781 = vmatpush1.bf16.msra.mxu0 0
    %1782 = vmatprep.subr.bf16.mxu0 0
    %1783 = vmatpush1.bf16.msra.mxu0 0
    %1784 = vmatprep.subr.bf16.mxu0 0
    %1785 = vmatpush1.bf16.msra.mxu0 0
    %1786 = vmatprep.subr.bf16.mxu0 0
    %1787 = vmatpush1.bf16.msra.mxu0 0
    %1788 = vmatprep.subr.bf16.mxu0 0
    %1789 = vmatpush1.bf16.msra.mxu0 0
    %1790 = vmatprep.subr.bf16.mxu0 0
    %1791 = vmatpush1.bf16.msra.mxu0 0
    %1792 = vmatprep.mubr.bf16.mxu0 0
    %1793 = vmatmul.mubr.bf16.gmra.mrb[0].mxu0 %v1755
    %v1794 = vpop.f32.mrb[0].mxu0
    %v1795 = vadd.f32 0.0, %v1794
    %v1796 = vpop.f32.mrb[0].mxu0
    %v1797 = vpop.f32.mrb[0].mxu0
    %v1798 = vpop.f32.mrb[0].mxu0
    %1799 = vdwg.mxu0
    %v1800 = vadd.f32 %v1740, %v1795
    %v1801 = vld [vmem:[%s303] sm:$0xf]
    %v1802 = vrot.slane %v1746, 1
    %v1804 = vsel %vm43, %v1802, 0
    %v1807 = vsel %vm47, %v1801, 0
    %1809 = vmatprep.subr.bf16.mxu0 0
    %1810 = vmatpush1.bf16.msra.mxu0 %v1807
    %1811 = vmatprep.subr.bf16.mxu0 0
    %1812 = vmatpush1.bf16.msra.mxu0 0
    %1813 = vmatprep.subr.bf16.mxu0 0
    %1814 = vmatpush1.bf16.msra.mxu0 0
    %1815 = vmatprep.subr.bf16.mxu0 0
    %1816 = vmatpush1.bf16.msra.mxu0 0
    %1817 = vmatprep.subr.bf16.mxu0 0
    %1818 = vmatpush1.bf16.msra.mxu0 0
    %1819 = vmatprep.subr.bf16.mxu0 0
    %1820 = vmatpush1.bf16.msra.mxu0 0
    %1821 = vmatprep.subr.bf16.mxu0 0
    %1822 = vmatpush1.bf16.msra.mxu0 0
    %1823 = vmatprep.subr.bf16.mxu0 0
    %1824 = vmatpush1.bf16.msra.mxu0 0
    %1825 = vmatprep.subr.bf16.mxu0 0
    %1826 = vmatpush1.bf16.msra.mxu0 0
    %1827 = vmatprep.subr.bf16.mxu0 0
    %1828 = vmatpush1.bf16.msra.mxu0 0
    %1829 = vmatprep.subr.bf16.mxu0 0
    %1830 = vmatpush1.bf16.msra.mxu0 0
    %1831 = vmatprep.subr.bf16.mxu0 0
    %1832 = vmatpush1.bf16.msra.mxu0 0
    %1833 = vmatprep.subr.bf16.mxu0 0
    %1834 = vmatpush1.bf16.msra.mxu0 0
    %1835 = vmatprep.subr.bf16.mxu0 0
    %1836 = vmatpush1.bf16.msra.mxu0 0
    %1837 = vmatprep.subr.bf16.mxu0 0
    %1838 = vmatpush1.bf16.msra.mxu0 0
    %1839 = vmatprep.subr.bf16.mxu0 0
    %1840 = vmatpush1.bf16.msra.mxu0 0
    %1841 = vmatprep.mubr.bf16.mxu0 0
    %1842 = vmatmul.mubr.bf16.gmra.mrb[0].mxu0 %v1804
    %v1843 = vpop.f32.mrb[0].mxu0
    %v1844 = vadd.f32 0.0, %v1843
    %v1845 = vpop.f32.mrb[0].mxu0
    %v1846 = vpop.f32.mrb[0].mxu0
    %v1847 = vpop.f32.mrb[0].mxu0
    %1848 = vdwg.mxu0
    %v1849 = vadd.f32 %v1800, %v1844
    %s1850 = sadd.s32 %s1526, 2
    %s1851 = smul.u32 %s1850, 2
    %s1852 = smul.addr %s1851, 4
    %s1853 = scalar_lea.vmem %s0, %s1852
    %v1854 = vld [vmem:[%s1853] sm:$0xf]
    %v1855 = vld [vmem:[%s1853 + $0x4] sm:$0x1]
    %v1856 = vld [vmem:[%s359] sm:$0xf]
    %v1858 = vsel %vm43, %v1854, 0
    %v1861 = vsel %vm47, %v1856, 0
    %1863 = vmatprep.subr.bf16.mxu0 0
    %1864 = vmatpush1.bf16.msra.mxu0 %v1861
    %1865 = vmatprep.subr.bf16.mxu0 0
    %1866 = vmatpush1.bf16.msra.mxu0 0
    %1867 = vmatprep.subr.bf16.mxu0 0
    %1868 = vmatpush1.bf16.msra.mxu0 0
    %1869 = vmatprep.subr.bf16.mxu0 0
    %1870 = vmatpush1.bf16.msra.mxu0 0
    %1871 = vmatprep.subr.bf16.mxu0 0
    %1872 = vmatpush1.bf16.msra.mxu0 0
    %1873 = vmatprep.subr.bf16.mxu0 0
    %1874 = vmatpush1.bf16.msra.mxu0 0
    %1875 = vmatprep.subr.bf16.mxu0 0
    %1876 = vmatpush1.bf16.msra.mxu0 0
    %1877 = vmatprep.subr.bf16.mxu0 0
    %1878 = vmatpush1.bf16.msra.mxu0 0
    %1879 = vmatprep.subr.bf16.mxu0 0
    %1880 = vmatpush1.bf16.msra.mxu0 0
    %1881 = vmatprep.subr.bf16.mxu0 0
    %1882 = vmatpush1.bf16.msra.mxu0 0
    %1883 = vmatprep.subr.bf16.mxu0 0
    %1884 = vmatpush1.bf16.msra.mxu0 0
    %1885 = vmatprep.subr.bf16.mxu0 0
    %1886 = vmatpush1.bf16.msra.mxu0 0
    %1887 = vmatprep.subr.bf16.mxu0 0
    %1888 = vmatpush1.bf16.msra.mxu0 0
    %1889 = vmatprep.subr.bf16.mxu0 0
    %1890 = vmatpush1.bf16.msra.mxu0 0
    %1891 = vmatprep.subr.bf16.mxu0 0
    %1892 = vmatpush1.bf16.msra.mxu0 0
    %1893 = vmatprep.subr.bf16.mxu0 0
    %1894 = vmatpush1.bf16.msra.mxu0 0
    %1895 = vmatprep.mubr.bf16.mxu0 0
    %1896 = vmatmul.mubr.bf16.gmra.mrb[0].mxu0 %v1858
    %v1897 = vpop.f32.mrb[0].mxu0
    %v1898 = vadd.f32 0.0, %v1897
    %v1899 = vpop.f32.mrb[0].mxu0
    %v1900 = vpop.f32.mrb[0].mxu0
    %v1901 = vpop.f32.mrb[0].mxu0
    %1902 = vdwg.mxu0
    %v1903 = vadd.f32 %v1849, %v1898
    %v1904 = vld [vmem:[%s408] sm:$0xf]
    %v1907 = vunpack.c.l.b16 %v1854
    %v1908 = vunpack.c.l.b16 %v1855
    %v1909 = vpack.c.b16 %v1908, %v1907
    %v1911 = vshrl.u32 %v1909, 16
    %v1913 = vshll.u32 %v1909, 16
    %v1915 = vrot.slane %v1913, 1
    %v1916 = vor.u32 %v1911, %v1915
    %v1918 = vsel %vm43, %v1916, 0
    %v1921 = vsel %vm47, %v1904, 0
    %1923 = vmatprep.subr.bf16.mxu0 0
    %1924 = vmatpush1.bf16.msra.mxu0 %v1921
    %1925 = vmatprep.subr.bf16.mxu0 0
    %1926 = vmatpush1.bf16.msra.mxu0 0
    %1927 = vmatprep.subr.bf16.mxu0 0
    %1928 = vmatpush1.bf16.msra.mxu0 0
    %1929 = vmatprep.subr.bf16.mxu0 0
    %1930 = vmatpush1.bf16.msra.mxu0 0
    %1931 = vmatprep.subr.bf16.mxu0 0
    %1932 = vmatpush1.bf16.msra.mxu0 0
    %1933 = vmatprep.subr.bf16.mxu0 0
    %1934 = vmatpush1.bf16.msra.mxu0 0
    %1935 = vmatprep.subr.bf16.mxu0 0
    %1936 = vmatpush1.bf16.msra.mxu0 0
    %1937 = vmatprep.subr.bf16.mxu0 0
    %1938 = vmatpush1.bf16.msra.mxu0 0
    %1939 = vmatprep.subr.bf16.mxu0 0
    %1940 = vmatpush1.bf16.msra.mxu0 0
    %1941 = vmatprep.subr.bf16.mxu0 0
    %1942 = vmatpush1.bf16.msra.mxu0 0
    %1943 = vmatprep.subr.bf16.mxu0 0
    %1944 = vmatpush1.bf16.msra.mxu0 0
    %1945 = vmatprep.subr.bf16.mxu0 0
    %1946 = vmatpush1.bf16.msra.mxu0 0
    %1947 = vmatprep.subr.bf16.mxu0 0
    %1948 = vmatpush1.bf16.msra.mxu0 0
    %1949 = vmatprep.subr.bf16.mxu0 0
    %1950 = vmatpush1.bf16.msra.mxu0 0
    %1951 = vmatprep.subr.bf16.mxu0 0
    %1952 = vmatpush1.bf16.msra.mxu0 0
    %1953 = vmatprep.subr.bf16.mxu0 0
    %1954 = vmatpush1.bf16.msra.mxu0 0
    %1955 = vmatprep.mubr.bf16.mxu0 0
    %1956 = vmatmul.mubr.bf16.gmra.mrb[0].mxu0 %v1918
    %v1957 = vpop.f32.mrb[0].mxu0
    %v1958 = vadd.f32 0.0, %v1957
    %v1959 = vpop.f32.mrb[0].mxu0
    %v1960 = vpop.f32.mrb[0].mxu0
    %v1961 = vpop.f32.mrb[0].mxu0
    %1962 = vdwg.mxu0
    %v1963 = vadd.f32 %v1903, %v1958
    %v1964 = vld [vmem:[%s469] sm:$0xf]
    %v1965 = vrot.slane %v1909, 1
    %v1967 = vsel %vm43, %v1965, 0
    %v1970 = vsel %vm47, %v1964, 0
    %1972 = vmatprep.subr.bf16.mxu0 0
    %1973 = vmatpush1.bf16.msra.mxu0 %v1970
    %1974 = vmatprep.subr.bf16.mxu0 0
    %1975 = vmatpush1.bf16.msra.mxu0 0
    %1976 = vmatprep.subr.bf16.mxu0 0
    %1977 = vmatpush1.bf16.msra.mxu0 0
    %1978 = vmatprep.subr.bf16.mxu0 0
    %1979 = vmatpush1.bf16.msra.mxu0 0
    %1980 = vmatprep.subr.bf16.mxu0 0
    %1981 = vmatpush1.bf16.msra.mxu0 0
    %1982 = vmatprep.subr.bf16.mxu0 0
    %1983 = vmatpush1.bf16.msra.mxu0 0
    %1984 = vmatprep.subr.bf16.mxu0 0
    %1985 = vmatpush1.bf16.msra.mxu0 0
    %1986 = vmatprep.subr.bf16.mxu0 0
    %1987 = vmatpush1.bf16.msra.mxu0 0
    %1988 = vmatprep.subr.bf16.mxu0 0
    %1989 = vmatpush1.bf16.msra.mxu0 0
    %1990 = vmatprep.subr.bf16.mxu0 0
    %1991 = vmatpush1.bf16.msra.mxu0 0
    %1992 = vmatprep.subr.bf16.mxu0 0
    %1993 = vmatpush1.bf16.msra.mxu0 0
    %1994 = vmatprep.subr.bf16.mxu0 0
    %1995 = vmatpush1.bf16.msra.mxu0 0
    %1996 = vmatprep.subr.bf16.mxu0 0
    %1997 = vmatpush1.bf16.msra.mxu0 0
    %1998 = vmatprep.subr.bf16.mxu0 0
    %1999 = vmatpush1.bf16.msra.mxu0 0
    %2000 = vmatprep.subr.bf16.mxu0 0
    %2001 = vmatpush1.bf16.msra.mxu0 0
    %2002 = vmatprep.subr.bf16.mxu0 0
    %2003 = vmatpush1.bf16.msra.mxu0 0
    %2004 = vmatprep.mubr.bf16.mxu0 0
    %2005 = vmatmul.mubr.bf16.gmra.mrb[0].mxu0 %v1967
    %v2006 = vpop.f32.mrb[0].mxu0
    %v2007 = vadd.f32 0.0, %v2006
    %v2008 = vpop.f32.mrb[0].mxu0
    %v2009 = vpop.f32.mrb[0].mxu0
    %v2010 = vpop.f32.mrb[0].mxu0
    %2011 = vdwg.mxu0
    %v2012 = vadd.f32 %v1963, %v2007
    %v2013 = vadd.f32 %v2012, %v523
    %vm2014 = vcmp.ge.f32.partialorder %v2013, 0.0
    %v2015 = vmul.f32 %v531, %v2013
    %v2016 = vsel %vm2014, %v2013, %v2015
    %s2017 = scalar_lea.vmem [#allocation2], 24
    %2018 = vst.msk [vmem:[%s2017] sm:$0xff] %vm535, %v2016
    %s2019 = sadd.s32 %s19, 4
    %s2020 = smul.u32 %s2019, 2
    %s2021 = smul.u32 %s2020, 2
    %s2022 = smul.addr %s2021, 4
    %s2023 = scalar_lea.vmem %s0, %s2022
    %v2024 = vld [vmem:[%s2023] sm:$0xf]
    %v2025 = vld [vmem:[%s2023 + $0x4] sm:$0x1]
    %v2026 = vld [vmem:[%s1] sm:$0xf]
    %v2027 = vld [vmem:[%s29] sm:$0xf]
    %v2030 = vunpack.c.l.b16 %v2024
    %v2031 = vunpack.c.l.b16 %v2025
    %v2032 = vpack.c.b16 %v2031, %v2030
    %v2034 = vshrl.u32 %v2032, 16
    %v2036 = vshll.u32 %v2032, 16
    %v2038 = vrot.slane %v2036, 1
    %v2039 = vor.u32 %v2034, %v2038
    %v2041 = vsel %vm43, %v2039, 0
    %v2044 = vsel %vm47, %v2027, 0
    %2046 = vmatprep.subr.bf16.mxu0 0
    %2047 = vmatpush1.bf16.msra.mxu0 %v2044
    %2048 = vmatprep.subr.bf16.mxu0 0
    %2049 = vmatpush1.bf16.msra.mxu0 0
    %2050 = vmatprep.subr.bf16.mxu0 0
    %2051 = vmatpush1.bf16.msra.mxu0 0
    %2052 = vmatprep.subr.bf16.mxu0 0
    %2053 = vmatpush1.bf16.msra.mxu0 0
    %2054 = vmatprep.subr.bf16.mxu0 0
    %2055 = vmatpush1.bf16.msra.mxu0 0
    %2056 = vmatprep.subr.bf16.mxu0 0
    %2057 = vmatpush1.bf16.msra.mxu0 0
    %2058 = vmatprep.subr.bf16.mxu0 0
    %2059 = vmatpush1.bf16.msra.mxu0 0
    %2060 = vmatprep.subr.bf16.mxu0 0
    %2061 = vmatpush1.bf16.msra.mxu0 0
    %2062 = vmatprep.subr.bf16.mxu0 0
    %2063 = vmatpush1.bf16.msra.mxu0 0
    %2064 = vmatprep.subr.bf16.mxu0 0
    %2065 = vmatpush1.bf16.msra.mxu0 0
    %2066 = vmatprep.subr.bf16.mxu0 0
    %2067 = vmatpush1.bf16.msra.mxu0 0
    %2068 = vmatprep.subr.bf16.mxu0 0
    %2069 = vmatpush1.bf16.msra.mxu0 0
    %2070 = vmatprep.subr.bf16.mxu0 0
    %2071 = vmatpush1.bf16.msra.mxu0 0
    %2072 = vmatprep.subr.bf16.mxu0 0
    %2073 = vmatpush1.bf16.msra.mxu0 0
    %2074 = vmatprep.subr.bf16.mxu0 0
    %2075 = vmatpush1.bf16.msra.mxu0 0
    %2076 = vmatprep.subr.bf16.mxu0 0
    %2077 = vmatpush1.bf16.msra.mxu0 0
    %2078 = vmatprep.mubr.bf16.mxu0 0
    %2079 = vmatmul.mubr.bf16.gmra.mrb[0].mxu0 %v2041
    %v2080 = vpop.f32.mrb[0].mxu0
    %v2081 = vadd.f32 0.0, %v2080
    %v2082 = vpop.f32.mrb[0].mxu0
    %v2083 = vpop.f32.mrb[0].mxu0
    %v2084 = vpop.f32.mrb[0].mxu0
    %2085 = vdwg.mxu0
    %v2087 = vsel %vm43, %v2024, 0
    %v2090 = vsel %vm47, %v2026, 0
    %2092 = vmatprep.subr.bf16.mxu0 0
    %2093 = vmatpush1.bf16.msra.mxu0 %v2090
    %2094 = vmatprep.subr.bf16.mxu0 0
    %2095 = vmatpush1.bf16.msra.mxu0 0
    %2096 = vmatprep.subr.bf16.mxu0 0
    %2097 = vmatpush1.bf16.msra.mxu0 0
    %2098 = vmatprep.subr.bf16.mxu0 0
    %2099 = vmatpush1.bf16.msra.mxu0 0
    %2100 = vmatprep.subr.bf16.mxu0 0
    %2101 = vmatpush1.bf16.msra.mxu0 0
    %2102 = vmatprep.subr.bf16.mxu0 0
    %2103 = vmatpush1.bf16.msra.mxu0 0
    %2104 = vmatprep.subr.bf16.mxu0 0
    %2105 = vmatpush1.bf16.msra.mxu0 0
    %2106 = vmatprep.subr.bf16.mxu0 0
    %2107 = vmatpush1.bf16.msra.mxu0 0
    %2108 = vmatprep.subr.bf16.mxu0 0
    %2109 = vmatpush1.bf16.msra.mxu0 0
    %2110 = vmatprep.subr.bf16.mxu0 0
    %2111 = vmatpush1.bf16.msra.mxu0 0
    %2112 = vmatprep.subr.bf16.mxu0 0
    %2113 = vmatpush1.bf16.msra.mxu0 0
    %2114 = vmatprep.subr.bf16.mxu0 0
    %2115 = vmatpush1.bf16.msra.mxu0 0
    %2116 = vmatprep.subr.bf16.mxu0 0
    %2117 = vmatpush1.bf16.msra.mxu0 0
    %2118 = vmatprep.subr.bf16.mxu0 0
    %2119 = vmatpush1.bf16.msra.mxu0 0
    %2120 = vmatprep.subr.bf16.mxu0 0
    %2121 = vmatpush1.bf16.msra.mxu0 0
    %2122 = vmatprep.subr.bf16.mxu0 0
    %2123 = vmatpush1.bf16.msra.mxu0 0
    %2124 = vmatprep.mubr.bf16.mxu0 0
    %2125 = vmatmul.mubr.bf16.gmra.mrb[0].mxu0 %v2087
    %v2126 = vpop.f32.mrb[0].mxu0
    %v2127 = vadd.f32 %v2081, %v2126
    %v2128 = vpop.f32.mrb[0].mxu0
    %v2129 = vpop.f32.mrb[0].mxu0
    %v2130 = vpop.f32.mrb[0].mxu0
    %2131 = vdwg.mxu0
    %v2132 = vld [vmem:[%s137] sm:$0xf]
    %v2133 = vrot.slane %v2032, 1
    %v2135 = vsel %vm43, %v2133, 0
    %v2138 = vsel %vm47, %v2132, 0
    %2140 = vmatprep.subr.bf16.mxu0 0
    %2141 = vmatpush1.bf16.msra.mxu0 %v2138
    %2142 = vmatprep.subr.bf16.mxu0 0
    %2143 = vmatpush1.bf16.msra.mxu0 0
    %2144 = vmatprep.subr.bf16.mxu0 0
    %2145 = vmatpush1.bf16.msra.mxu0 0
    %2146 = vmatprep.subr.bf16.mxu0 0
    %2147 = vmatpush1.bf16.msra.mxu0 0
    %2148 = vmatprep.subr.bf16.mxu0 0
    %2149 = vmatpush1.bf16.msra.mxu0 0
    %2150 = vmatprep.subr.bf16.mxu0 0
    %2151 = vmatpush1.bf16.msra.mxu0 0
    %2152 = vmatprep.subr.bf16.mxu0 0
    %2153 = vmatpush1.bf16.msra.mxu0 0
    %2154 = vmatprep.subr.bf16.mxu0 0
    %2155 = vmatpush1.bf16.msra.mxu0 0
    %2156 = vmatprep.subr.bf16.mxu0 0
    %2157 = vmatpush1.bf16.msra.mxu0 0
    %2158 = vmatprep.subr.bf16.mxu0 0
    %2159 = vmatpush1.bf16.msra.mxu0 0
    %2160 = vmatprep.subr.bf16.mxu0 0
    %2161 = vmatpush1.bf16.msra.mxu0 0
    %2162 = vmatprep.subr.bf16.mxu0 0
    %2163 = vmatpush1.bf16.msra.mxu0 0
    %2164 = vmatprep.subr.bf16.mxu0 0
    %2165 = vmatpush1.bf16.msra.mxu0 0
    %2166 = vmatprep.subr.bf16.mxu0 0
    %2167 = vmatpush1.bf16.msra.mxu0 0
    %2168 = vmatprep.subr.bf16.mxu0 0
    %2169 = vmatpush1.bf16.msra.mxu0 0
    %2170 = vmatprep.subr.bf16.mxu0 0
    %2171 = vmatpush1.bf16.msra.mxu0 0
    %2172 = vmatprep.mubr.bf16.mxu0 0
    %2173 = vmatmul.mubr.bf16.gmra.mrb[0].mxu0 %v2135
    %v2174 = vpop.f32.mrb[0].mxu0
    %v2175 = vadd.f32 0.0, %v2174
    %v2176 = vpop.f32.mrb[0].mxu0
    %v2177 = vpop.f32.mrb[0].mxu0
    %v2178 = vpop.f32.mrb[0].mxu0
    %2179 = vdwg.mxu0
    %v2180 = vadd.f32 %v2127, %v2175
    %s2181 = sadd.s32 %s2020, 1
    %s2182 = smul.u32 %s2181, 2
    %s2183 = smul.addr %s2182, 4
    %s2184 = scalar_lea.vmem %s0, %s2183
    %v2185 = vld [vmem:[%s2184] sm:$0xf]
    %v2186 = vld [vmem:[%s2184 + $0x4] sm:$0x1]
    %v2187 = vld [vmem:[%s193] sm:$0xf]
    %v2189 = vsel %vm43, %v2185, 0
    %v2192 = vsel %vm47, %v2187, 0
    %2194 = vmatprep.subr.bf16.mxu0 0
    %2195 = vmatpush1.bf16.msra.mxu0 %v2192
    %2196 = vmatprep.subr.bf16.mxu0 0
    %2197 = vmatpush1.bf16.msra.mxu0 0
    %2198 = vmatprep.subr.bf16.mxu0 0
    %2199 = vmatpush1.bf16.msra.mxu0 0
    %2200 = vmatprep.subr.bf16.mxu0 0
    %2201 = vmatpush1.bf16.msra.mxu0 0
    %2202 = vmatprep.subr.bf16.mxu0 0
    %2203 = vmatpush1.bf16.msra.mxu0 0
    %2204 = vmatprep.subr.bf16.mxu0 0
    %2205 = vmatpush1.bf16.msra.mxu0 0
    %2206 = vmatprep.subr.bf16.mxu0 0
    %2207 = vmatpush1.bf16.msra.mxu0 0
    %2208 = vmatprep.subr.bf16.mxu0 0
    %2209 = vmatpush1.bf16.msra.mxu0 0
    %2210 = vmatprep.subr.bf16.mxu0 0
    %2211 = vmatpush1.bf16.msra.mxu0 0
    %2212 = vmatprep.subr.bf16.mxu0 0
    %2213 = vmatpush1.bf16.msra.mxu0 0
    %2214 = vmatprep.subr.bf16.mxu0 0
    %2215 = vmatpush1.bf16.msra.mxu0 0
    %2216 = vmatprep.subr.bf16.mxu0 0
    %2217 = vmatpush1.bf16.msra.mxu0 0
    %2218 = vmatprep.subr.bf16.mxu0 0
    %2219 = vmatpush1.bf16.msra.mxu0 0
    %2220 = vmatprep.subr.bf16.mxu0 0
    %2221 = vmatpush1.bf16.msra.mxu0 0
    %2222 = vmatprep.subr.bf16.mxu0 0
    %2223 = vmatpush1.bf16.msra.mxu0 0
    %2224 = vmatprep.subr.bf16.mxu0 0
    %2225 = vmatpush1.bf16.msra.mxu0 0
    %2226 = vmatprep.mubr.bf16.mxu0 0
    %2227 = vmatmul.mubr.bf16.gmra.mrb[0].mxu0 %v2189
    %v2228 = vpop.f32.mrb[0].mxu0
    %v2229 = vadd.f32 0.0, %v2228
    %v2230 = vpop.f32.mrb[0].mxu0
    %v2231 = vpop.f32.mrb[0].mxu0
    %v2232 = vpop.f32.mrb[0].mxu0
    %2233 = vdwg.mxu0
    %v2234 = vadd.f32 %v2180, %v2229
    %v2235 = vld [vmem:[%s242] sm:$0xf]
    %v2238 = vunpack.c.l.b16 %v2185
    %v2239 = vunpack.c.l.b16 %v2186
    %v2240 = vpack.c.b16 %v2239, %v2238
    %v2242 = vshrl.u32 %v2240, 16
    %v2244 = vshll.u32 %v2240, 16
    %v2246 = vrot.slane %v2244, 1
    %v2247 = vor.u32 %v2242, %v2246
    %v2249 = vsel %vm43, %v2247, 0
    %v2252 = vsel %vm47, %v2235, 0
    %2254 = vmatprep.subr.bf16.mxu0 0
    %2255 = vmatpush1.bf16.msra.mxu0 %v2252
    %2256 = vmatprep.subr.bf16.mxu0 0
    %2257 = vmatpush1.bf16.msra.mxu0 0
    %2258 = vmatprep.subr.bf16.mxu0 0
    %2259 = vmatpush1.bf16.msra.mxu0 0
    %2260 = vmatprep.subr.bf16.mxu0 0
    %2261 = vmatpush1.bf16.msra.mxu0 0
    %2262 = vmatprep.subr.bf16.mxu0 0
    %2263 = vmatpush1.bf16.msra.mxu0 0
    %2264 = vmatprep.subr.bf16.mxu0 0
    %2265 = vmatpush1.bf16.msra.mxu0 0
    %2266 = vmatprep.subr.bf16.mxu0 0
    %2267 = vmatpush1.bf16.msra.mxu0 0
    %2268 = vmatprep.subr.bf16.mxu0 0
    %2269 = vmatpush1.bf16.msra.mxu0 0
    %2270 = vmatprep.subr.bf16.mxu0 0
    %2271 = vmatpush1.bf16.msra.mxu0 0
    %2272 = vmatprep.subr.bf16.mxu0 0
    %2273 = vmatpush1.bf16.msra.mxu0 0
    %2274 = vmatprep.subr.bf16.mxu0 0
    %2275 = vmatpush1.bf16.msra.mxu0 0
    %2276 = vmatprep.subr.bf16.mxu0 0
    %2277 = vmatpush1.bf16.msra.mxu0 0
    %2278 = vmatprep.subr.bf16.mxu0 0
    %2279 = vmatpush1.bf16.msra.mxu0 0
    %2280 = vmatprep.subr.bf16.mxu0 0
    %2281 = vmatpush1.bf16.msra.mxu0 0
    %2282 = vmatprep.subr.bf16.mxu0 0
    %2283 = vmatpush1.bf16.msra.mxu0 0
    %2284 = vmatprep.subr.bf16.mxu0 0
    %2285 = vmatpush1.bf16.msra.mxu0 0
    %2286 = vmatprep.mubr.bf16.mxu0 0
    %2287 = vmatmul.mubr.bf16.gmra.mrb[0].mxu0 %v2249
    %v2288 = vpop.f32.mrb[0].mxu0
    %v2289 = vadd.f32 0.0, %v2288
    %v2290 = vpop.f32.mrb[0].mxu0
    %v2291 = vpop.f32.mrb[0].mxu0
    %v2292 = vpop.f32.mrb[0].mxu0
    %2293 = vdwg.mxu0
    %v2294 = vadd.f32 %v2234, %v2289
    %v2295 = vld [vmem:[%s303] sm:$0xf]
    %v2296 = vrot.slane %v2240, 1
    %v2298 = vsel %vm43, %v2296, 0
    %v2301 = vsel %vm47, %v2295, 0
    %2303 = vmatprep.subr.bf16.mxu0 0
    %2304 = vmatpush1.bf16.msra.mxu0 %v2301
    %2305 = vmatprep.subr.bf16.mxu0 0
    %2306 = vmatpush1.bf16.msra.mxu0 0
    %2307 = vmatprep.subr.bf16.mxu0 0
    %2308 = vmatpush1.bf16.msra.mxu0 0
    %2309 = vmatprep.subr.bf16.mxu0 0
    %2310 = vmatpush1.bf16.msra.mxu0 0
    %2311 = vmatprep.subr.bf16.mxu0 0
    %2312 = vmatpush1.bf16.msra.mxu0 0
    %2313 = vmatprep.subr.bf16.mxu0 0
    %2314 = vmatpush1.bf16.msra.mxu0 0
    %2315 = vmatprep.subr.bf16.mxu0 0
    %2316 = vmatpush1.bf16.msra.mxu0 0
    %2317 = vmatprep.subr.bf16.mxu0 0
    %2318 = vmatpush1.bf16.msra.mxu0 0
    %2319 = vmatprep.subr.bf16.mxu0 0
    %2320 = vmatpush1.bf16.msra.mxu0 0
    %2321 = vmatprep.subr.bf16.mxu0 0
    %2322 = vmatpush1.bf16.msra.mxu0 0
    %2323 = vmatprep.subr.bf16.mxu0 0
    %2324 = vmatpush1.bf16.msra.mxu0 0
    %2325 = vmatprep.subr.bf16.mxu0 0
    %2326 = vmatpush1.bf16.msra.mxu0 0
    %2327 = vmatprep.subr.bf16.mxu0 0
    %2328 = vmatpush1.bf16.msra.mxu0 0
    %2329 = vmatprep.subr.bf16.mxu0 0
    %2330 = vmatpush1.bf16.msra.mxu0 0
    %2331 = vmatprep.subr.bf16.mxu0 0
    %2332 = vmatpush1.bf16.msra.mxu0 0
    %2333 = vmatprep.subr.bf16.mxu0 0
    %2334 = vmatpush1.bf16.msra.mxu0 0
    %2335 = vmatprep.mubr.bf16.mxu0 0
    %2336 = vmatmul.mubr.bf16.gmra.mrb[0].mxu0 %v2298
    %v2337 = vpop.f32.mrb[0].mxu0
    %v2338 = vadd.f32 0.0, %v2337
    %v2339 = vpop.f32.mrb[0].mxu0
    %v2340 = vpop.f32.mrb[0].mxu0
    %v2341 = vpop.f32.mrb[0].mxu0
    %2342 = vdwg.mxu0
    %v2343 = vadd.f32 %v2294, %v2338
    %s2344 = sadd.s32 %s2020, 2
    %s2345 = smul.u32 %s2344, 2
    %s2346 = smul.addr %s2345, 4
    %s2347 = scalar_lea.vmem %s0, %s2346
    %v2348 = vld [vmem:[%s2347] sm:$0xf]
    %v2349 = vld [vmem:[%s2347 + $0x4] sm:$0x1]
    %v2350 = vld [vmem:[%s359] sm:$0xf]
    %v2352 = vsel %vm43, %v2348, 0
    %v2355 = vsel %vm47, %v2350, 0
    %2357 = vmatprep.subr.bf16.mxu0 0
    %2358 = vmatpush1.bf16.msra.mxu0 %v2355
    %2359 = vmatprep.subr.bf16.mxu0 0
    %2360 = vmatpush1.bf16.msra.mxu0 0
    %2361 = vmatprep.subr.bf16.mxu0 0
    %2362 = vmatpush1.bf16.msra.mxu0 0
    %2363 = vmatprep.subr.bf16.mxu0 0
    %2364 = vmatpush1.bf16.msra.mxu0 0
    %2365 = vmatprep.subr.bf16.mxu0 0
    %2366 = vmatpush1.bf16.msra.mxu0 0
    %2367 = vmatprep.subr.bf16.mxu0 0
    %2368 = vmatpush1.bf16.msra.mxu0 0
    %2369 = vmatprep.subr.bf16.mxu0 0
    %2370 = vmatpush1.bf16.msra.mxu0 0
    %2371 = vmatprep.subr.bf16.mxu0 0
    %2372 = vmatpush1.bf16.msra.mxu0 0
    %2373 = vmatprep.subr.bf16.mxu0 0
    %2374 = vmatpush1.bf16.msra.mxu0 0
    %2375 = vmatprep.subr.bf16.mxu0 0
    %2376 = vmatpush1.bf16.msra.mxu0 0
    %2377 = vmatprep.subr.bf16.mxu0 0
    %2378 = vmatpush1.bf16.msra.mxu0 0
    %2379 = vmatprep.subr.bf16.mxu0 0
    %2380 = vmatpush1.bf16.msra.mxu0 0
    %2381 = vmatprep.subr.bf16.mxu0 0
    %2382 = vmatpush1.bf16.msra.mxu0 0
    %2383 = vmatprep.subr.bf16.mxu0 0
    %2384 = vmatpush1.bf16.msra.mxu0 0
    %2385 = vmatprep.subr.bf16.mxu0 0
    %2386 = vmatpush1.bf16.msra.mxu0 0
    %2387 = vmatprep.subr.bf16.mxu0 0
    %2388 = vmatpush1.bf16.msra.mxu0 0
    %2389 = vmatprep.mubr.bf16.mxu0 0
    %2390 = vmatmul.mubr.bf16.gmra.mrb[0].mxu0 %v2352
    %v2391 = vpop.f32.mrb[0].mxu0
    %v2392 = vadd.f32 0.0, %v2391
    %v2393 = vpop.f32.mrb[0].mxu0
    %v2394 = vpop.f32.mrb[0].mxu0
    %v2395 = vpop.f32.mrb[0].mxu0
    %2396 = vdwg.mxu0
    %v2397 = vadd.f32 %v2343, %v2392
    %v2398 = vld [vmem:[%s408] sm:$0xf]
    %v2401 = vunpack.c.l.b16 %v2348
    %v2402 = vunpack.c.l.b16 %v2349
    %v2403 = vpack.c.b16 %v2402, %v2401
    %v2405 = vshrl.u32 %v2403, 16
    %v2407 = vshll.u32 %v2403, 16
    %v2409 = vrot.slane %v2407, 1
    %v2410 = vor.u32 %v2405, %v2409
    %v2412 = vsel %vm43, %v2410, 0
    %v2415 = vsel %vm47, %v2398, 0
    %2417 = vmatprep.subr.bf16.mxu0 0
    %2418 = vmatpush1.bf16.msra.mxu0 %v2415
    %2419 = vmatprep.subr.bf16.mxu0 0
    %2420 = vmatpush1.bf16.msra.mxu0 0
    %2421 = vmatprep.subr.bf16.mxu0 0
    %2422 = vmatpush1.bf16.msra.mxu0 0
    %2423 = vmatprep.subr.bf16.mxu0 0
    %2424 = vmatpush1.bf16.msra.mxu0 0
    %2425 = vmatprep.subr.bf16.mxu0 0
    %2426 = vmatpush1.bf16.msra.mxu0 0
    %2427 = vmatprep.subr.bf16.mxu0 0
    %2428 = vmatpush1.bf16.msra.mxu0 0
    %2429 = vmatprep.subr.bf16.mxu0 0
    %2430 = vmatpush1.bf16.msra.mxu0 0
    %2431 = vmatprep.subr.bf16.mxu0 0
    %2432 = vmatpush1.bf16.msra.mxu0 0
    %2433 = vmatprep.subr.bf16.mxu0 0
    %2434 = vmatpush1.bf16.msra.mxu0 0
    %2435 = vmatprep.subr.bf16.mxu0 0
    %2436 = vmatpush1.bf16.msra.mxu0 0
    %2437 = vmatprep.subr.bf16.mxu0 0
    %2438 = vmatpush1.bf16.msra.mxu0 0
    %2439 = vmatprep.subr.bf16.mxu0 0
    %2440 = vmatpush1.bf16.msra.mxu0 0
    %2441 = vmatprep.subr.bf16.mxu0 0
    %2442 = vmatpush1.bf16.msra.mxu0 0
    %2443 = vmatprep.subr.bf16.mxu0 0
    %2444 = vmatpush1.bf16.msra.mxu0 0
    %2445 = vmatprep.subr.bf16.mxu0 0
    %2446 = vmatpush1.bf16.msra.mxu0 0
    %2447 = vmatprep.subr.bf16.mxu0 0
    %2448 = vmatpush1.bf16.msra.mxu0 0
    %2449 = vmatprep.mubr.bf16.mxu0 0
    %2450 = vmatmul.mubr.bf16.gmra.mrb[0].mxu0 %v2412
    %v2451 = vpop.f32.mrb[0].mxu0
    %v2452 = vadd.f32 0.0, %v2451
    %v2453 = vpop.f32.mrb[0].mxu0
    %v2454 = vpop.f32.mrb[0].mxu0
    %v2455 = vpop.f32.mrb[0].mxu0
    %2456 = vdwg.mxu0
    %v2457 = vadd.f32 %v2397, %v2452
    %v2458 = vld [vmem:[%s469] sm:$0xf]
    %v2459 = vrot.slane %v2403, 1
    %v2461 = vsel %vm43, %v2459, 0
    %v2464 = vsel %vm47, %v2458, 0
    %2466 = vmatprep.subr.bf16.mxu0 0
    %2467 = vmatpush1.bf16.msra.mxu0 %v2464
    %2468 = vmatprep.subr.bf16.mxu0 0
    %2469 = vmatpush1.bf16.msra.mxu0 0
    %2470 = vmatprep.subr.bf16.mxu0 0
    %2471 = vmatpush1.bf16.msra.mxu0 0
    %2472 = vmatprep.subr.bf16.mxu0 0
    %2473 = vmatpush1.bf16.msra.mxu0 0
    %2474 = vmatprep.subr.bf16.mxu0 0
    %2475 = vmatpush1.bf16.msra.mxu0 0
    %2476 = vmatprep.subr.bf16.mxu0 0
    %2477 = vmatpush1.bf16.msra.mxu0 0
    %2478 = vmatprep.subr.bf16.mxu0 0
    %2479 = vmatpush1.bf16.msra.mxu0 0
    %2480 = vmatprep.subr.bf16.mxu0 0
    %2481 = vmatpush1.bf16.msra.mxu0 0
    %2482 = vmatprep.subr.bf16.mxu0 0
    %2483 = vmatpush1.bf16.msra.mxu0 0
    %2484 = vmatprep.subr.bf16.mxu0 0
    %2485 = vmatpush1.bf16.msra.mxu0 0
    %2486 = vmatprep.subr.bf16.mxu0 0
    %2487 = vmatpush1.bf16.msra.mxu0 0
    %2488 = vmatprep.subr.bf16.mxu0 0
    %2489 = vmatpush1.bf16.msra.mxu0 0
    %2490 = vmatprep.subr.bf16.mxu0 0
    %2491 = vmatpush1.bf16.msra.mxu0 0
    %2492 = vmatprep.subr.bf16.mxu0 0
    %2493 = vmatpush1.bf16.msra.mxu0 0
    %2494 = vmatprep.subr.bf16.mxu0 0
    %2495 = vmatpush1.bf16.msra.mxu0 0
    %2496 = vmatprep.subr.bf16.mxu0 0
    %2497 = vmatpush1.bf16.msra.mxu0 0
    %2498 = vmatprep.mubr.bf16.mxu0 0
    %2499 = vmatmul.mubr.bf16.gmra.mrb[0].mxu0 %v2461
    %v2500 = vpop.f32.mrb[0].mxu0
    %v2501 = vadd.f32 0.0, %v2500
    %v2502 = vpop.f32.mrb[0].mxu0
    %v2503 = vpop.f32.mrb[0].mxu0
    %v2504 = vpop.f32.mrb[0].mxu0
    %2505 = vdwg.mxu0
    %v2506 = vadd.f32 %v2457, %v2501
    %v2507 = vadd.f32 %v2506, %v523
    %vm2508 = vcmp.ge.f32.partialorder %v2507, 0.0
    %v2509 = vmul.f32 %v531, %v2507
    %v2510 = vsel %vm2508, %v2507, %v2509
    %s2511 = scalar_lea.vmem [#allocation2], 32
    %2512 = vst.msk [vmem:[%s2511] sm:$0xff] %vm535, %v2510
    %s2513 = sadd.s32 %s19, 5
    %s2514 = smul.u32 %s2513, 2
    %s2515 = smul.u32 %s2514, 2
    %s2516 = smul.addr %s2515, 4
    %s2517 = scalar_lea.vmem %s0, %s2516
    %v2518 = vld [vmem:[%s2517] sm:$0xf]
    %v2519 = vld [vmem:[%s2517 + $0x4] sm:$0x1]
    %v2520 = vld [vmem:[%s1] sm:$0xf]
    %v2521 = vld [vmem:[%s29] sm:$0xf]
    %v2524 = vunpack.c.l.b16 %v2518
    %v2525 = vunpack.c.l.b16 %v2519
    %v2526 = vpack.c.b16 %v2525, %v2524
    %v2528 = vshrl.u32 %v2526, 16
    %v2530 = vshll.u32 %v2526, 16
    %v2532 = vrot.slane %v2530, 1
    %v2533 = vor.u32 %v2528, %v2532
    %v2535 = vsel %vm43, %v2533, 0
    %v2538 = vsel %vm47, %v2521, 0
    %2540 = vmatprep.subr.bf16.mxu0 0
    %2541 = vmatpush1.bf16.msra.mxu0 %v2538
    %2542 = vmatprep.subr.bf16.mxu0 0
    %2543 = vmatpush1.bf16.msra.mxu0 0
    %2544 = vmatprep.subr.bf16.mxu0 0
    %2545 = vmatpush1.bf16.msra.mxu0 0
    %2546 = vmatprep.subr.bf16.mxu0 0
    %2547 = vmatpush1.bf16.msra.mxu0 0
    %2548 = vmatprep.subr.bf16.mxu0 0
    %2549 = vmatpush1.bf16.msra.mxu0 0
    %2550 = vmatprep.subr.bf16.mxu0 0
    %2551 = vmatpush1.bf16.msra.mxu0 0
    %2552 = vmatprep.subr.bf16.mxu0 0
    %2553 = vmatpush1.bf16.msra.mxu0 0
    %2554 = vmatprep.subr.bf16.mxu0 0
    %2555 = vmatpush1.bf16.msra.mxu0 0
    %2556 = vmatprep.subr.bf16.mxu0 0
    %2557 = vmatpush1.bf16.msra.mxu0 0
    %2558 = vmatprep.subr.bf16.mxu0 0
    %2559 = vmatpush1.bf16.msra.mxu0 0
    %2560 = vmatprep.subr.bf16.mxu0 0
    %2561 = vmatpush1.bf16.msra.mxu0 0
    %2562 = vmatprep.subr.bf16.mxu0 0
    %2563 = vmatpush1.bf16.msra.mxu0 0
    %2564 = vmatprep.subr.bf16.mxu0 0
    %2565 = vmatpush1.bf16.msra.mxu0 0
    %2566 = vmatprep.subr.bf16.mxu0 0
    %2567 = vmatpush1.bf16.msra.mxu0 0
    %2568 = vmatprep.subr.bf16.mxu0 0
    %2569 = vmatpush1.bf16.msra.mxu0 0
    %2570 = vmatprep.subr.bf16.mxu0 0
    %2571 = vmatpush1.bf16.msra.mxu0 0
    %2572 = vmatprep.mubr.bf16.mxu0 0
    %2573 = vmatmul.mubr.bf16.gmra.mrb[0].mxu0 %v2535
    %v2574 = vpop.f32.mrb[0].mxu0
    %v2575 = vadd.f32 0.0, %v2574
    %v2576 = vpop.f32.mrb[0].mxu0
    %v2577 = vpop.f32.mrb[0].mxu0
    %v2578 = vpop.f32.mrb[0].mxu0
    %2579 = vdwg.mxu0
    %v2581 = vsel %vm43, %v2518, 0
    %v2584 = vsel %vm47, %v2520, 0
    %2586 = vmatprep.subr.bf16.mxu0 0
    %2587 = vmatpush1.bf16.msra.mxu0 %v2584
    %2588 = vmatprep.subr.bf16.mxu0 0
    %2589 = vmatpush1.bf16.msra.mxu0 0
    %2590 = vmatprep.subr.bf16.mxu0 0
    %2591 = vmatpush1.bf16.msra.mxu0 0
    %2592 = vmatprep.subr.bf16.mxu0 0
    %2593 = vmatpush1.bf16.msra.mxu0 0
    %2594 = vmatprep.subr.bf16.mxu0 0
    %2595 = vmatpush1.bf16.msra.mxu0 0
    %2596 = vmatprep.subr.bf16.mxu0 0
    %2597 = vmatpush1.bf16.msra.mxu0 0
    %2598 = vmatprep.subr.bf16.mxu0 0
    %2599 = vmatpush1.bf16.msra.mxu0 0
    %2600 = vmatprep.subr.bf16.mxu0 0
    %2601 = vmatpush1.bf16.msra.mxu0 0
    %2602 = vmatprep.subr.bf16.mxu0 0
    %2603 = vmatpush1.bf16.msra.mxu0 0
    %2604 = vmatprep.subr.bf16.mxu0 0
    %2605 = vmatpush1.bf16.msra.mxu0 0
    %2606 = vmatprep.subr.bf16.mxu0 0
    %2607 = vmatpush1.bf16.msra.mxu0 0
    %2608 = vmatprep.subr.bf16.mxu0 0
    %2609 = vmatpush1.bf16.msra.mxu0 0
    %2610 = vmatprep.subr.bf16.mxu0 0
    %2611 = vmatpush1.bf16.msra.mxu0 0
    %2612 = vmatprep.subr.bf16.mxu0 0
    %2613 = vmatpush1.bf16.msra.mxu0 0
    %2614 = vmatprep.subr.bf16.mxu0 0
    %2615 = vmatpush1.bf16.msra.mxu0 0
    %2616 = vmatprep.subr.bf16.mxu0 0
    %2617 = vmatpush1.bf16.msra.mxu0 0
    %2618 = vmatprep.mubr.bf16.mxu0 0
    %2619 = vmatmul.mubr.bf16.gmra.mrb[0].mxu0 %v2581
    %v2620 = vpop.f32.mrb[0].mxu0
    %v2621 = vadd.f32 %v2575, %v2620
    %v2622 = vpop.f32.mrb[0].mxu0
    %v2623 = vpop.f32.mrb[0].mxu0
    %v2624 = vpop.f32.mrb[0].mxu0
    %2625 = vdwg.mxu0
    %v2626 = vld [vmem:[%s137] sm:$0xf]
    %v2627 = vrot.slane %v2526, 1
    %v2629 = vsel %vm43, %v2627, 0
    %v2632 = vsel %vm47, %v2626, 0
    %2634 = vmatprep.subr.bf16.mxu0 0
    %2635 = vmatpush1.bf16.msra.mxu0 %v2632
    %2636 = vmatprep.subr.bf16.mxu0 0
    %2637 = vmatpush1.bf16.msra.mxu0 0
    %2638 = vmatprep.subr.bf16.mxu0 0
    %2639 = vmatpush1.bf16.msra.mxu0 0
    %2640 = vmatprep.subr.bf16.mxu0 0
    %2641 = vmatpush1.bf16.msra.mxu0 0
    %2642 = vmatprep.subr.bf16.mxu0 0
    %2643 = vmatpush1.bf16.msra.mxu0 0
    %2644 = vmatprep.subr.bf16.mxu0 0
    %2645 = vmatpush1.bf16.msra.mxu0 0
    %2646 = vmatprep.subr.bf16.mxu0 0
    %2647 = vmatpush1.bf16.msra.mxu0 0
    %2648 = vmatprep.subr.bf16.mxu0 0
    %2649 = vmatpush1.bf16.msra.mxu0 0
    %2650 = vmatprep.subr.bf16.mxu0 0
    %2651 = vmatpush1.bf16.msra.mxu0 0
    %2652 = vmatprep.subr.bf16.mxu0 0
    %2653 = vmatpush1.bf16.msra.mxu0 0
    %2654 = vmatprep.subr.bf16.mxu0 0
    %2655 = vmatpush1.bf16.msra.mxu0 0
    %2656 = vmatprep.subr.bf16.mxu0 0
    %2657 = vmatpush1.bf16.msra.mxu0 0
    %2658 = vmatprep.subr.bf16.mxu0 0
    %2659 = vmatpush1.bf16.msra.mxu0 0
    %2660 = vmatprep.subr.bf16.mxu0 0
    %2661 = vmatpush1.bf16.msra.mxu0 0
    %2662 = vmatprep.subr.bf16.mxu0 0
    %2663 = vmatpush1.bf16.msra.mxu0 0
    %2664 = vmatprep.subr.bf16.mxu0 0
    %2665 = vmatpush1.bf16.msra.mxu0 0
    %2666 = vmatprep.mubr.bf16.mxu0 0
    %2667 = vmatmul.mubr.bf16.gmra.mrb[0].mxu0 %v2629
    %v2668 = vpop.f32.mrb[0].mxu0
    %v2669 = vadd.f32 0.0, %v2668
    %v2670 = vpop.f32.mrb[0].mxu0
    %v2671 = vpop.f32.mrb[0].mxu0
    %v2672 = vpop.f32.mrb[0].mxu0
    %2673 = vdwg.mxu0
    %v2674 = vadd.f32 %v2621, %v2669
    %s2675 = sadd.s32 %s2514, 1
    %s2676 = smul.u32 %s2675, 2
    %s2677 = smul.addr %s2676, 4
    %s2678 = scalar_lea.vmem %s0, %s2677
    %v2679 = vld [vmem:[%s2678] sm:$0xf]
    %v2680 = vld [vmem:[%s2678 + $0x4] sm:$0x1]
    %v2681 = vld [vmem:[%s193] sm:$0xf]
    %v2683 = vsel %vm43, %v2679, 0
    %v2686 = vsel %vm47, %v2681, 0
    %2688 = vmatprep.subr.bf16.mxu0 0
    %2689 = vmatpush1.bf16.msra.mxu0 %v2686
    %2690 = vmatprep.subr.bf16.mxu0 0
    %2691 = vmatpush1.bf16.msra.mxu0 0
    %2692 = vmatprep.subr.bf16.mxu0 0
    %2693 = vmatpush1.bf16.msra.mxu0 0
    %2694 = vmatprep.subr.bf16.mxu0 0
    %2695 = vmatpush1.bf16.msra.mxu0 0
    %2696 = vmatprep.subr.bf16.mxu0 0
    %2697 = vmatpush1.bf16.msra.mxu0 0
    %2698 = vmatprep.subr.bf16.mxu0 0
    %2699 = vmatpush1.bf16.msra.mxu0 0
    %2700 = vmatprep.subr.bf16.mxu0 0
    %2701 = vmatpush1.bf16.msra.mxu0 0
    %2702 = vmatprep.subr.bf16.mxu0 0
    %2703 = vmatpush1.bf16.msra.mxu0 0
    %2704 = vmatprep.subr.bf16.mxu0 0
    %2705 = vmatpush1.bf16.msra.mxu0 0
    %2706 = vmatprep.subr.bf16.mxu0 0
    %2707 = vmatpush1.bf16.msra.mxu0 0
    %2708 = vmatprep.subr.bf16.mxu0 0
    %2709 = vmatpush1.bf16.msra.mxu0 0
    %2710 = vmatprep.subr.bf16.mxu0 0
    %2711 = vmatpush1.bf16.msra.mxu0 0
    %2712 = vmatprep.subr.bf16.mxu0 0
    %2713 = vmatpush1.bf16.msra.mxu0 0
    %2714 = vmatprep.subr.bf16.mxu0 0
    %2715 = vmatpush1.bf16.msra.mxu0 0
    %2716 = vmatprep.subr.bf16.mxu0 0
    %2717 = vmatpush1.bf16.msra.mxu0 0
    %2718 = vmatprep.subr.bf16.mxu0 0
    %2719 = vmatpush1.bf16.msra.mxu0 0
    %2720 = vmatprep.mubr.bf16.mxu0 0
    %2721 = vmatmul.mubr.bf16.gmra.mrb[0].mxu0 %v2683
    %v2722 = vpop.f32.mrb[0].mxu0
    %v2723 = vadd.f32 0.0, %v2722
    %v2724 = vpop.f32.mrb[0].mxu0
    %v2725 = vpop.f32.mrb[0].mxu0
    %v2726 = vpop.f32.mrb[0].mxu0
    %2727 = vdwg.mxu0
    %v2728 = vadd.f32 %v2674, %v2723
    %v2729 = vld [vmem:[%s242] sm:$0xf]
    %v2732 = vunpack.c.l.b16 %v2679
    %v2733 = vunpack.c.l.b16 %v2680
    %v2734 = vpack.c.b16 %v2733, %v2732
    %v2736 = vshrl.u32 %v2734, 16
    %v2738 = vshll.u32 %v2734, 16
    %v2740 = vrot.slane %v2738, 1
    %v2741 = vor.u32 %v2736, %v2740
    %v2743 = vsel %vm43, %v2741, 0
    %v2746 = vsel %vm47, %v2729, 0
    %2748 = vmatprep.subr.bf16.mxu0 0
    %2749 = vmatpush1.bf16.msra.mxu0 %v2746
    %2750 = vmatprep.subr.bf16.mxu0 0
    %2751 = vmatpush1.bf16.msra.mxu0 0
    %2752 = vmatprep.subr.bf16.mxu0 0
    %2753 = vmatpush1.bf16.msra.mxu0 0
    %2754 = vmatprep.subr.bf16.mxu0 0
    %2755 = vmatpush1.bf16.msra.mxu0 0
    %2756 = vmatprep.subr.bf16.mxu0 0
    %2757 = vmatpush1.bf16.msra.mxu0 0
    %2758 = vmatprep.subr.bf16.mxu0 0
    %2759 = vmatpush1.bf16.msra.mxu0 0
    %2760 = vmatprep.subr.bf16.mxu0 0
    %2761 = vmatpush1.bf16.msra.mxu0 0
    %2762 = vmatprep.subr.bf16.mxu0 0
    %2763 = vmatpush1.bf16.msra.mxu0 0
    %2764 = vmatprep.subr.bf16.mxu0 0
    %2765 = vmatpush1.bf16.msra.mxu0 0
    %2766 = vmatprep.subr.bf16.mxu0 0
    %2767 = vmatpush1.bf16.msra.mxu0 0
    %2768 = vmatprep.subr.bf16.mxu0 0
    %2769 = vmatpush1.bf16.msra.mxu0 0
    %2770 = vmatprep.subr.bf16.mxu0 0
    %2771 = vmatpush1.bf16.msra.mxu0 0
    %2772 = vmatprep.subr.bf16.mxu0 0
    %2773 = vmatpush1.bf16.msra.mxu0 0
    %2774 = vmatprep.subr.bf16.mxu0 0
    %2775 = vmatpush1.bf16.msra.mxu0 0
    %2776 = vmatprep.subr.bf16.mxu0 0
    %2777 = vmatpush1.bf16.msra.mxu0 0
    %2778 = vmatprep.subr.bf16.mxu0 0
    %2779 = vmatpush1.bf16.msra.mxu0 0
    %2780 = vmatprep.mubr.bf16.mxu0 0
    %2781 = vmatmul.mubr.bf16.gmra.mrb[0].mxu0 %v2743
    %v2782 = vpop.f32.mrb[0].mxu0
    %v2783 = vadd.f32 0.0, %v2782
    %v2784 = vpop.f32.mrb[0].mxu0
    %v2785 = vpop.f32.mrb[0].mxu0
    %v2786 = vpop.f32.mrb[0].mxu0
    %2787 = vdwg.mxu0
    %v2788 = vadd.f32 %v2728, %v2783
    %v2789 = vld [vmem:[%s303] sm:$0xf]
    %v2790 = vrot.slane %v2734, 1
    %v2792 = vsel %vm43, %v2790, 0
    %v2795 = vsel %vm47, %v2789, 0
    %2797 = vmatprep.subr.bf16.mxu0 0
    %2798 = vmatpush1.bf16.msra.mxu0 %v2795
    %2799 = vmatprep.subr.bf16.mxu0 0
    %2800 = vmatpush1.bf16.msra.mxu0 0
    %2801 = vmatprep.subr.bf16.mxu0 0
    %2802 = vmatpush1.bf16.msra.mxu0 0
    %2803 = vmatprep.subr.bf16.mxu0 0
    %2804 = vmatpush1.bf16.msra.mxu0 0
    %2805 = vmatprep.subr.bf16.mxu0 0
    %2806 = vmatpush1.bf16.msra.mxu0 0
    %2807 = vmatprep.subr.bf16.mxu0 0
    %2808 = vmatpush1.bf16.msra.mxu0 0
    %2809 = vmatprep.subr.bf16.mxu0 0
    %2810 = vmatpush1.bf16.msra.mxu0 0
    %2811 = vmatprep.subr.bf16.mxu0 0
    %2812 = vmatpush1.bf16.msra.mxu0 0
    %2813 = vmatprep.subr.bf16.mxu0 0
    %2814 = vmatpush1.bf16.msra.mxu0 0
    %2815 = vmatprep.subr.bf16.mxu0 0
    %2816 = vmatpush1.bf16.msra.mxu0 0
    %2817 = vmatprep.subr.bf16.mxu0 0
    %2818 = vmatpush1.bf16.msra.mxu0 0
    %2819 = vmatprep.subr.bf16.mxu0 0
    %2820 = vmatpush1.bf16.msra.mxu0 0
    %2821 = vmatprep.subr.bf16.mxu0 0
    %2822 = vmatpush1.bf16.msra.mxu0 0
    %2823 = vmatprep.subr.bf16.mxu0 0
    %2824 = vmatpush1.bf16.msra.mxu0 0
    %2825 = vmatprep.subr.bf16.mxu0 0
    %2826 = vmatpush1.bf16.msra.mxu0 0
    %2827 = vmatprep.subr.bf16.mxu0 0
    %2828 = vmatpush1.bf16.msra.mxu0 0
    %2829 = vmatprep.mubr.bf16.mxu0 0
    %2830 = vmatmul.mubr.bf16.gmra.mrb[0].mxu0 %v2792
    %v2831 = vpop.f32.mrb[0].mxu0
    %v2832 = vadd.f32 0.0, %v2831
    %v2833 = vpop.f32.mrb[0].mxu0
    %v2834 = vpop.f32.mrb[0].mxu0
    %v2835 = vpop.f32.mrb[0].mxu0
    %2836 = vdwg.mxu0
    %v2837 = vadd.f32 %v2788, %v2832
    %s2838 = sadd.s32 %s2514, 2
    %s2839 = smul.u32 %s2838, 2
    %s2840 = smul.addr %s2839, 4
    %s2841 = scalar_lea.vmem %s0, %s2840
    %v2842 = vld [vmem:[%s2841] sm:$0xf]
    %v2843 = vld [vmem:[%s2841 + $0x4] sm:$0x1]
    %v2844 = vld [vmem:[%s359] sm:$0xf]
    %v2846 = vsel %vm43, %v2842, 0
    %v2849 = vsel %vm47, %v2844, 0
    %2851 = vmatprep.subr.bf16.mxu0 0
    %2852 = vmatpush1.bf16.msra.mxu0 %v2849
    %2853 = vmatprep.subr.bf16.mxu0 0
    %2854 = vmatpush1.bf16.msra.mxu0 0
    %2855 = vmatprep.subr.bf16.mxu0 0
    %2856 = vmatpush1.bf16.msra.mxu0 0
    %2857 = vmatprep.subr.bf16.mxu0 0
    %2858 = vmatpush1.bf16.msra.mxu0 0
    %2859 = vmatprep.subr.bf16.mxu0 0
    %2860 = vmatpush1.bf16.msra.mxu0 0
    %2861 = vmatprep.subr.bf16.mxu0 0
    %2862 = vmatpush1.bf16.msra.mxu0 0
    %2863 = vmatprep.subr.bf16.mxu0 0
    %2864 = vmatpush1.bf16.msra.mxu0 0
    %2865 = vmatprep.subr.bf16.mxu0 0
    %2866 = vmatpush1.bf16.msra.mxu0 0
    %2867 = vmatprep.subr.bf16.mxu0 0
    %2868 = vmatpush1.bf16.msra.mxu0 0
    %2869 = vmatprep.subr.bf16.mxu0 0
    %2870 = vmatpush1.bf16.msra.mxu0 0
    %2871 = vmatprep.subr.bf16.mxu0 0
    %2872 = vmatpush1.bf16.msra.mxu0 0
    %2873 = vmatprep.subr.bf16.mxu0 0
    %2874 = vmatpush1.bf16.msra.mxu0 0
    %2875 = vmatprep.subr.bf16.mxu0 0
    %2876 = vmatpush1.bf16.msra.mxu0 0
    %2877 = vmatprep.subr.bf16.mxu0 0
    %2878 = vmatpush1.bf16.msra.mxu0 0
    %2879 = vmatprep.subr.bf16.mxu0 0
    %2880 = vmatpush1.bf16.msra.mxu0 0
    %2881 = vmatprep.subr.bf16.mxu0 0
    %2882 = vmatpush1.bf16.msra.mxu0 0
    %2883 = vmatprep.mubr.bf16.mxu0 0
    %2884 = vmatmul.mubr.bf16.gmra.mrb[0].mxu0 %v2846
    %v2885 = vpop.f32.mrb[0].mxu0
    %v2886 = vadd.f32 0.0, %v2885
    %v2887 = vpop.f32.mrb[0].mxu0
    %v2888 = vpop.f32.mrb[0].mxu0
    %v2889 = vpop.f32.mrb[0].mxu0
    %2890 = vdwg.mxu0
    %v2891 = vadd.f32 %v2837, %v2886
    %v2892 = vld [vmem:[%s408] sm:$0xf]
    %v2895 = vunpack.c.l.b16 %v2842
    %v2896 = vunpack.c.l.b16 %v2843
    %v2897 = vpack.c.b16 %v2896, %v2895
    %v2899 = vshrl.u32 %v2897, 16
    %v2901 = vshll.u32 %v2897, 16
    %v2903 = vrot.slane %v2901, 1
    %v2904 = vor.u32 %v2899, %v2903
    %v2906 = vsel %vm43, %v2904, 0
    %v2909 = vsel %vm47, %v2892, 0
    %2911 = vmatprep.subr.bf16.mxu0 0
    %2912 = vmatpush1.bf16.msra.mxu0 %v2909
    %2913 = vmatprep.subr.bf16.mxu0 0
    %2914 = vmatpush1.bf16.msra.mxu0 0
    %2915 = vmatprep.subr.bf16.mxu0 0
    %2916 = vmatpush1.bf16.msra.mxu0 0
    %2917 = vmatprep.subr.bf16.mxu0 0
    %2918 = vmatpush1.bf16.msra.mxu0 0
    %2919 = vmatprep.subr.bf16.mxu0 0
    %2920 = vmatpush1.bf16.msra.mxu0 0
    %2921 = vmatprep.subr.bf16.mxu0 0
    %2922 = vmatpush1.bf16.msra.mxu0 0
    %2923 = vmatprep.subr.bf16.mxu0 0
    %2924 = vmatpush1.bf16.msra.mxu0 0
    %2925 = vmatprep.subr.bf16.mxu0 0
    %2926 = vmatpush1.bf16.msra.mxu0 0
    %2927 = vmatprep.subr.bf16.mxu0 0
    %2928 = vmatpush1.bf16.msra.mxu0 0
    %2929 = vmatprep.subr.bf16.mxu0 0
    %2930 = vmatpush1.bf16.msra.mxu0 0
    %2931 = vmatprep.subr.bf16.mxu0 0
    %2932 = vmatpush1.bf16.msra.mxu0 0
    %2933 = vmatprep.subr.bf16.mxu0 0
    %2934 = vmatpush1.bf16.msra.mxu0 0
    %2935 = vmatprep.subr.bf16.mxu0 0
    %2936 = vmatpush1.bf16.msra.mxu0 0
    %2937 = vmatprep.subr.bf16.mxu0 0
    %2938 = vmatpush1.bf16.msra.mxu0 0
    %2939 = vmatprep.subr.bf16.mxu0 0
    %2940 = vmatpush1.bf16.msra.mxu0 0
    %2941 = vmatprep.subr.bf16.mxu0 0
    %2942 = vmatpush1.bf16.msra.mxu0 0
    %2943 = vmatprep.mubr.bf16.mxu0 0
    %2944 = vmatmul.mubr.bf16.gmra.mrb[0].mxu0 %v2906
    %v2945 = vpop.f32.mrb[0].mxu0
    %v2946 = vadd.f32 0.0, %v2945
    %v2947 = vpop.f32.mrb[0].mxu0
    %v2948 = vpop.f32.mrb[0].mxu0
    %v2949 = vpop.f32.mrb[0].mxu0
    %2950 = vdwg.mxu0
    %v2951 = vadd.f32 %v2891, %v2946
    %v2952 = vld [vmem:[%s469] sm:$0xf]
    %v2953 = vrot.slane %v2897, 1
    %v2955 = vsel %vm43, %v2953, 0
    %v2958 = vsel %vm47, %v2952, 0
    %2960 = vmatprep.subr.bf16.mxu0 0
    %2961 = vmatpush1.bf16.msra.mxu0 %v2958
    %2962 = vmatprep.subr.bf16.mxu0 0
    %2963 = vmatpush1.bf16.msra.mxu0 0
    %2964 = vmatprep.subr.bf16.mxu0 0
    %2965 = vmatpush1.bf16.msra.mxu0 0
    %2966 = vmatprep.subr.bf16.mxu0 0
    %2967 = vmatpush1.bf16.msra.mxu0 0
    %2968 = vmatprep.subr.bf16.mxu0 0
    %2969 = vmatpush1.bf16.msra.mxu0 0
    %2970 = vmatprep.subr.bf16.mxu0 0
    %2971 = vmatpush1.bf16.msra.mxu0 0
    %2972 = vmatprep.subr.bf16.mxu0 0
    %2973 = vmatpush1.bf16.msra.mxu0 0
    %2974 = vmatprep.subr.bf16.mxu0 0
    %2975 = vmatpush1.bf16.msra.mxu0 0
    %2976 = vmatprep.subr.bf16.mxu0 0
    %2977 = vmatpush1.bf16.msra.mxu0 0
    %2978 = vmatprep.subr.bf16.mxu0 0
    %2979 = vmatpush1.bf16.msra.mxu0 0
    %2980 = vmatprep.subr.bf16.mxu0 0
    %2981 = vmatpush1.bf16.msra.mxu0 0
    %2982 = vmatprep.subr.bf16.mxu0 0
    %2983 = vmatpush1.bf16.msra.mxu0 0
    %2984 = vmatprep.subr.bf16.mxu0 0
    %2985 = vmatpush1.bf16.msra.mxu0 0
    %2986 = vmatprep.subr.bf16.mxu0 0
    %2987 = vmatpush1.bf16.msra.mxu0 0
    %2988 = vmatprep.subr.bf16.mxu0 0
    %2989 = vmatpush1.bf16.msra.mxu0 0
    %2990 = vmatprep.subr.bf16.mxu0 0
    %2991 = vmatpush1.bf16.msra.mxu0 0
    %2992 = vmatprep.mubr.bf16.mxu0 0
    %2993 = vmatmul.mubr.bf16.gmra.mrb[0].mxu0 %v2955
    %v2994 = vpop.f32.mrb[0].mxu0
    %v2995 = vadd.f32 0.0, %v2994
    %v2996 = vpop.f32.mrb[0].mxu0
    %v2997 = vpop.f32.mrb[0].mxu0
    %v2998 = vpop.f32.mrb[0].mxu0
    %2999 = vdwg.mxu0
    %v3000 = vadd.f32 %v2951, %v2995
    %v3001 = vadd.f32 %v3000, %v523
    %vm3002 = vcmp.ge.f32.partialorder %v3001, 0.0
    %v3003 = vmul.f32 %v531, %v3001
    %v3004 = vsel %vm3002, %v3001, %v3003
    %s3005 = scalar_lea.vmem [#allocation2], 40
    %3006 = vst.msk [vmem:[%s3005] sm:$0xff] %vm535, %v3004
    // Predicated region
    $region18: #{tpu_custom_call.1} parent=1 // pred_check
      _
    $region19: #{tpu_custom_call.1} parent=1 // pred_check_branch
      %3008 = sbr.rel (0) target = $region21
    $region20: #{tpu_custom_call.1} parent=1 // pred_region
      %s3010 = ssub.s32 768, 768
      %3011 = vsyncadd [#allocation3], %s3010
      %s3012 = sshll.u32 [#allocation2], 4
      %s3013 = int_to_ptr.vmem [resolvable:$true] %s3012
      %3018 = dma.vmem_to_hbm [thread:$0]  %s3013, 768, %s4, [#allocation3], 128, 128, 8
    $region21: #{tpu_custom_call.1} parent=1 // pred_fallthru
      _
    // Predicated region
    $region22: #{tpu_custom_call.1} parent=1 // pred_check
      _
    $region23: #{tpu_custom_call.1} parent=1 // pred_check_branch
      %3020 = sbr.rel (0) target = $region25
    $region24: #{tpu_custom_call.1} parent=1 // pred_region
      %3021 = dma.done [#allocation3], 768
    $region25: #{tpu_custom_call.1} parent=1 // pred_fallthru
      _
    %3022 = vsyncpa [#allocation3], 1

</llo_original>
